<compile_context>
chip_gen: v5e
topology: v5e:2x2
jax: 0.10.0
libtpu: 0.0.40
codegen_flags: <defaults>
</compile_context>

<pallas_src>
import functools

import jax
import jax.numpy as jnp
from jax.experimental import pallas as pl
from jax.experimental.pallas import tpu as pltpu

BN_EPS = 1e-5
_TILE_BUDGET = 20 * 2**20        # target per-call VMEM tile footprint
_VMEM_CAP = 48 * 2**20           # satisfiable on v7x (64 MiB / TensorCore)


def _round_up(x, m):
    return (x + m - 1) // m * m


# ---------------------------------------------------------------------------
# Pallas kernel: one (TM, N) row-tile of  act((A @ B) + bias [+ residual])
# A, B, residual are bf16; the dot accumulates in f32; the epilogue is f32;
# the store dtype follows o_ref (bf16 for intermediate convs, f32 for the last).
# ---------------------------------------------------------------------------
def _mm_kernel(*refs, relu, has_res):
    if has_res:
        a_ref, b_ref, bias_ref, res_ref, o_ref = refs
    else:
        a_ref, b_ref, bias_ref, o_ref = refs
        res_ref = None
    y = jnp.dot(a_ref[...], b_ref[...], preferred_element_type=jnp.float32)
    y = y + bias_ref[...]
    if has_res:
        y = y + res_ref[...].astype(jnp.float32)
    if relu:
        y = jnp.maximum(y, 0.0)
    o_ref[...] = y.astype(o_ref.dtype)


def _pick_tm(M, K, N, has_res, out_bytes):
    """Row-tile size: as large as useful, shrunk so the lane-padded, double-buffered
    footprint stays inside the per-call VMEM budget (tight on v7x: 64 MiB/TC)."""
    Kl = _round_up(K, 128)        # A tile lane padding
    Ks = _round_up(K, 8)          # B tile sublane padding
    Nl = _round_up(N, 128)        # lane padding of B / bias / residual / output

    def tile_bytes(tm):
        return (2 * tm * Kl * 2                        # A tile, bf16, double-buffered
                + 2 * Ks * Nl * 2                      # B (resident), bf16
                + 2 * 8 * Nl * 4                       # bias, f32, (8,128)-padded
                + (2 * tm * Nl * 2 if has_res else 0)  # residual tile, bf16
                + 2 * tm * Nl * out_bytes)             # output tile

    tm = 512
    while tm > 128 and tile_bytes(tm) > _TILE_BUDGET:
        tm //= 2
    tm = min(tm, _round_up(M, 8))                      # stays a multiple of 8
    return tm, tile_bytes(tm)


def matmul_bias_act(a, b, bias, *, relu, residual=None, out_dtype=jnp.float32):
    """(M, K) @ (K, N) with fused bias add, optional residual add and ReLU.

    a / b / residual are consumed as bf16 (MXU inputs, halved HBM traffic); the
    matmul accumulates in f32 and the whole epilogue is f32.  The output is written
    at the true column count N (no 128-padding, no post-kernel slice)."""
    M, K = a.shape
    _, N = b.shape
    has_res = residual is not None
    out_bytes = jnp.dtype(out_dtype).itemsize
    TM, tile_b = _pick_tm(M, K, N, has_res, out_bytes)

    a_bf = a if a.dtype == jnp.bfloat16 else a.astype(jnp.bfloat16)
    b_bf = b.astype(jnp.bfloat16)
    bias_f = bias.reshape(1, N).astype(jnp.float32)

    args = [a_bf, b_bf, bias_f]
    in_specs = [
        pl.BlockSpec((TM, K), lambda i: (i, 0)),   # A: tiled rows, full K
        pl.BlockSpec((K, N), lambda i: (0, 0)),    # B: resident, fetched once
        pl.BlockSpec((1, N), lambda i: (0, 0)),    # folded conv+BN bias: resident
    ]
    if has_res:
        r = residual if residual.dtype == jnp.bfloat16 else residual.astype(jnp.bfloat16)
        args.append(r)
        in_specs.append(pl.BlockSpec((TM, N), lambda i: (i, 0)))

    grid = (pl.cdiv(M, TM),)
    vmem_limit = int(min(_VMEM_CAP, max(32 * 2**20, 2 * tile_b)))

    return pl.pallas_call(
        functools.partial(_mm_kernel, relu=relu, has_res=has_res),
        out_shape=jax.ShapeDtypeStruct((M, N), out_dtype),
        grid=grid,
        in_specs=in_specs,
        out_specs=pl.BlockSpec((TM, N), lambda i: (i, 0)),
        compiler_params=pltpu.CompilerParams(
            dimension_semantics=("parallel",),
            vmem_limit_bytes=vmem_limit,
        ),
    )(*args)


# ---------------------------------------------------------------------------
# Conv + folded BN (+ residual) (+ ReLU) via im2col + fused Pallas matmul
# ---------------------------------------------------------------------------
def im2col(x, kh, kw, stride, pad):
    """NHWC -> (N*OH*OW, kh*kw*C) patches (pure layout glue in JAX)."""
    N, H, W, C = x.shape
    OH = (H + 2 * pad - kh) // stride + 1
    OW = (W + 2 * pad - kw) // stride + 1
    if pad:
        x = jnp.pad(x, ((0, 0), (pad, pad), (pad, pad), (0, 0)))
    if kh == 1 and kw == 1:
        patches = x[:, ::stride, ::stride, :]
        return patches.reshape(N * OH * OW, C), (N, OH, OW)
    cols = []
    for i in range(kh):
        for j in range(kw):
            cols.append(x[:, i:i + stride * OH:stride, j:j + stride * OW:stride, :])
    patches = jnp.stack(cols, axis=3)                 # (N, OH, OW, kh*kw, C)
    return patches.reshape(N * OH * OW, kh * kw * C), (N, OH, OW)


def conv_bn(x, p, *, stride, pad, relu, residual=None, out_dtype=jnp.float32):
    """Conv2d(+bias) + BatchNorm2d (inference, folded into weights/bias)
    [+ residual] [+ ReLU] as one fused Pallas matmul over im2col patches."""
    kh, kw, cin, cout = p["w"].shape
    # fold BN into the conv weights / bias in f32, THEN cast to bf16 in the matmul
    scale = p["gamma"] / jnp.sqrt(p["var"] + BN_EPS)
    w_folded = p["w"] * scale                                   # (kh,kw,cin,cout)
    bias = (p["b"] - p["mean"]) * scale + p["beta"]
    wmat = w_folded.reshape(kh * kw * cin, cout)
    # cast to bf16 BEFORE im2col so the duplicated patch tensor is half-width in HBM
    patches, (N, OH, OW) = im2col(x.astype(jnp.bfloat16), kh, kw, stride, pad)
    res = residual.reshape(-1, cout) if residual is not None else None
    y = matmul_bias_act(patches, wmat, bias, relu=relu, residual=res,
                        out_dtype=out_dtype)
    return y.reshape(N, OH, OW, cout)


# ---------------------------------------------------------------------------
# ResidualBlock forward (matches the PyTorch module)
# ---------------------------------------------------------------------------
def residual_block_forward(params, x_nchw):
    x = jnp.transpose(x_nchw, (0, 2, 3, 1))               # NCHW -> NHWC
    stride = params["stride"]
    if params["down"] is not None:
        # 1x1 conv + BN residual branch; stored bf16 (re-read by the final kernel)
        residual = conv_bn(x, params["down"], stride=stride, pad=0, relu=False,
                           out_dtype=jnp.bfloat16)
    else:
        residual = x.astype(jnp.bfloat16)
    # conv1: intermediate activation stored bf16 straight from the kernel
    out = conv_bn(x, params["c1"], stride=stride, pad=1, relu=True,
                  out_dtype=jnp.bfloat16)
    # conv2 + BN fused with the residual add and the final ReLU; final store is f32
    out = conv_bn(out, params["c2"], stride=1, pad=1, relu=True,
                  residual=residual, out_dtype=jnp.float32)
    return jnp.transpose(out, (0, 3, 1, 2))               # NHWC -> NCHW


# ---------------------------------------------------------------------------
# Pure-JAX f32 reference (loose-tolerance correctness check)
# ---------------------------------------------------------------------------
def _conv_bn_ref(x, p, *, stride, pad, relu, residual=None):
    y = jax.lax.conv_general_dilated(
        x, p["w"], window_strides=(stride, stride),
        padding=[(pad, pad), (pad, pad)],
        dimension_numbers=("NHWC", "HWIO", "NHWC"))
    scale = p["gamma"] / jnp.sqrt(p["var"] + BN_EPS)
    bias = (p["b"] - p["mean"]) * scale + p["beta"]
    y = y * scale + bias
    if residual is not None:
        y = y + residual
    if relu:
        y = jnp.maximum(y, 0.0)
    return y


def residual_block_reference(params, x_nchw):
    x = jnp.transpose(x_nchw, (0, 2, 3, 1))
    stride = params["stride"]
    if params["down"] is not None:
        residual = _conv_bn_ref(x, params["down"], stride=stride, pad=0, relu=False)
    else:
        residual = x
    out = _conv_bn_ref(x, params["c1"], stride=stride, pad=1, relu=True)
    out = _conv_bn_ref(out, params["c2"], stride=1, pad=1, relu=True, residual=residual)
    return jnp.transpose(out, (0, 3, 1, 2))


# ---------------------------------------------------------------------------
# Deterministic parameter initialization (shapes follow the PyTorch __init__)
# ---------------------------------------------------------------------------
def init_conv_bn(key, kh, kw, cin, cout):
    ks = jax.random.split(key, 6)
    fan_in = kh * kw * cin
    return {
        "w": jax.random.normal(ks[0], (kh, kw, cin, cout), jnp.float32)
        * (2.0 / fan_in) ** 0.5,
        "b": jax.random.normal(ks[1], (cout,), jnp.float32) * 0.01,
        "gamma": jax.random.uniform(ks[2], (cout,), jnp.float32, minval=0.8, maxval=1.2),
        "beta": jax.random.normal(ks[3], (cout,), jnp.float32) * 0.05,
        "mean": jax.random.normal(ks[4], (cout,), jnp.float32) * 0.05,
        "var": jax.random.uniform(ks[5], (cout,), jnp.float32, minval=0.8, maxval=1.2),
    }


def init_residual_block_params(key, in_ch, out_ch, stride):
    k1, k2, k3 = jax.random.split(key, 3)
    needs_down = (stride != 1) or (in_ch != out_ch)
    return {
        "c1": init_conv_bn(k1, 3, 3, in_ch, out_ch),
        "c2": init_conv_bn(k2, 3, 3, out_ch, out_ch),
        "down": init_conv_bn(k3, 1, 1, in_ch, out_ch) if needs_down else None,
        "stride": stride,
    }


def _check(params, x, expect_shape):
    fwd = jax.jit(functools.partial(residual_block_forward, params))
    out = jax.block_until_ready(fwd(x))
    assert out.shape == expect_shape and out.dtype == jnp.float32
    ref = jax.block_until_ready(residual_block_reference(params, x))
    max_err = float(jnp.max(jnp.abs(out - ref)))
    # bf16 MXU inputs / bf16 intermediate stores with f32 accumulation -> compare
    # against the f32 reference with a loose tolerance.
    assert jnp.allclose(out, ref, rtol=0.05, atol=0.1), f"max abs err {max_err}"


if __name__ == "__main__":
    key = jax.random.PRNGKey(0)
    pkey, xkey, pkey2, xkey2 = jax.random.split(key, 4)

    # downsample path exercised (stride 2, channel change)
    in_ch, out_ch, stride = 16, 32, 2
    params = init_residual_block_params(pkey, in_ch, out_ch, stride=stride)
    x = jax.random.normal(xkey, (2, in_ch, 32, 32), jnp.float32)   # NCHW like PyTorch
    _check(params, x, (2, out_ch, 16, 16))

    # identity-residual path exercised (stride 1, same channels)
    params_id = init_residual_block_params(pkey2, 32, 32, stride=1)
    x_id = jax.random.normal(xkey2, (2, 32, 16, 16), jnp.float32)
    _check(params_id, x_id, (2, 32, 16, 16))

    print("KERNEL_OK")
</pallas_src>

<mosaic_0001>
module attributes {stable_mosaic.version = 11 : i64} {
  func.func @_mm_kernel(%arg0: i32, %arg1: memref<512x16xbf16, #tpu.memory_space<vmem>>, %arg2: memref<16x32xbf16, #tpu.memory_space<vmem>>, %arg3: memref<1x32xf32, #tpu.memory_space<vmem>>, %arg4: memref<512x32xbf16, #tpu.memory_space<vmem>>) attributes {dimension_semantics = [#tpu.dimension_semantics<parallel>], iteration_bounds = array<i64: 1>, scalar_prefetch = 0 : i64, scratch_operands = 0 : i64, tpu.core_type = #tpu.core_type<tc>, window_params = [{transform_indices = @transform_0, window_bounds = array<i64: 512, 16>}, {pipeline_mode = #tpu.pipeline_mode<synchronous>, transform_indices = @transform_1, window_bounds = array<i64: 16, 32>}, {pipeline_mode = #tpu.pipeline_mode<synchronous>, transform_indices = @transform_2, window_bounds = array<i64: 1, 32>}, {transform_indices = @transform_3, window_bounds = array<i64: 512, 32>}]} {
    %c0 = arith.constant 0 : index
    %c0_0 = arith.constant 0 : index
    %0 = vector.load %arg1[%c0, %c0_0] : memref<512x16xbf16, #tpu.memory_space<vmem>>, vector<512x16xbf16>
    %c0_1 = arith.constant 0 : index
    %c0_2 = arith.constant 0 : index
    %1 = vector.load %arg2[%c0_1, %c0_2] : memref<16x32xbf16, #tpu.memory_space<vmem>>, vector<16x32xbf16>
    %cst = arith.constant dense<0.000000e+00> : vector<512x32xf32>
    %2 = tpu.matmul %0, %1, %cst {dimension_numbers = #tpu.dot_dimension_numbers<[1], [0], [0], [1], [0, 0, 1, 1], [], []>} : vector<512x16xbf16>, vector<16x32xbf16>, vector<512x32xf32> -> vector<512x32xf32>
    %c0_3 = arith.constant 0 : index
    %c0_4 = arith.constant 0 : index
    %3 = vector.load %arg3[%c0_3, %c0_4] : memref<1x32xf32, #tpu.memory_space<vmem>>, vector<1x32xf32>
    %4 = vector.broadcast %3 : vector<1x32xf32> to vector<512x32xf32>
    %5 = arith.addf %2, %4 : vector<512x32xf32>
    %6 = arith.truncf %5 : vector<512x32xf32> to vector<512x32xbf16>
    %c0_5 = arith.constant 0 : index
    %c0_6 = arith.constant 0 : index
    %7 = vector.load %arg4[%c0_5, %c0_6] : memref<512x32xbf16, #tpu.memory_space<vmem>>, vector<512x32xbf16>
    tpu.vector_store %arg4[%c0_5, %c0_6], %6 {strides = array<i32>} : memref<512x32xbf16, #tpu.memory_space<vmem>>, vector<512x32xbf16>,
    return
  }
  func.func @transform_0(%arg0: i32) -> (i32, i32) {
    %c0_i32 = arith.constant 0 : i32
    %c0_i32_0 = arith.constant 0 : i32
    return %arg0, %c0_i32 : i32, i32
  }
  func.func @transform_1(%arg0: i32) -> (i32, i32) {
    %c0_i32 = arith.constant 0 : i32
    %c0_i32_0 = arith.constant 0 : i32
    %c0_i32_1 = arith.constant 0 : i32
    return %c0_i32, %c0_i32_0 : i32, i32
  }
  func.func @transform_2(%arg0: i32) -> (i32, i32) {
    %c0_i32 = arith.constant 0 : i32
    %c0_i32_0 = arith.constant 0 : i32
    %c0_i32_1 = arith.constant 0 : i32
    return %c0_i32, %c0_i32_0 : i32, i32
  }
  func.func @transform_3(%arg0: i32) -> (i32, i32) {
    %c0_i32 = arith.constant 0 : i32
    %c0_i32_0 = arith.constant 0 : i32
    return %arg0, %c0_i32 : i32, i32
  }
}

module attributes {stable_mosaic.version = 11 : i64} {
  func.func @_mm_kernel(%arg0: i32, %arg1: memref<512x144xbf16, #tpu.memory_space<vmem>>, %arg2: memref<144x32xbf16, #tpu.memory_space<vmem>>, %arg3: memref<1x32xf32, #tpu.memory_space<vmem>>, %arg4: memref<512x32xbf16, #tpu.memory_space<vmem>>) attributes {dimension_semantics = [#tpu.dimension_semantics<parallel>], iteration_bounds = array<i64: 1>, scalar_prefetch = 0 : i64, scratch_operands = 0 : i64, tpu.core_type = #tpu.core_type<tc>, window_params = [{transform_indices = @transform_0, window_bounds = array<i64: 512, 144>}, {pipeline_mode = #tpu.pipeline_mode<synchronous>, transform_indices = @transform_1, window_bounds = array<i64: 144, 32>}, {pipeline_mode = #tpu.pipeline_mode<synchronous>, transform_indices = @transform_2, window_bounds = array<i64: 1, 32>}, {transform_indices = @transform_3, window_bounds = array<i64: 512, 32>}]} {
    %c0 = arith.constant 0 : index
    %c0_0 = arith.constant 0 : index
    %0 = vector.load %arg1[%c0, %c0_0] : memref<512x144xbf16, #tpu.memory_space<vmem>>, vector<512x144xbf16>
    %c0_1 = arith.constant 0 : index
    %c0_2 = arith.constant 0 : index
    %1 = vector.load %arg2[%c0_1, %c0_2] : memref<144x32xbf16, #tpu.memory_space<vmem>>, vector<144x32xbf16>
    %cst = arith.constant dense<0.000000e+00> : vector<512x32xf32>
    %2 = tpu.matmul %0, %1, %cst {dimension_numbers = #tpu.dot_dimension_numbers<[1], [0], [0], [1], [0, 0, 1, 1], [], []>} : vector<512x144xbf16>, vector<144x32xbf16>, vector<512x32xf32> -> vector<512x32xf32>
    %c0_3 = arith.constant 0 : index
    %c0_4 = arith.constant 0 : index
    %3 = vector.load %arg3[%c0_3, %c0_4] : memref<1x32xf32, #tpu.memory_space<vmem>>, vector<1x32xf32>
    %4 = vector.broadcast %3 : vector<1x32xf32> to vector<512x32xf32>
    %5 = arith.addf %2, %4 : vector<512x32xf32>
    %cst_5 = arith.constant 0.000000e+00 : f32
    %6 = vector.broadcast %cst_5 : f32 to vector<512x32xf32>
    %7 = arith.maximumf %5, %6 : vector<512x32xf32>
    %8 = arith.truncf %7 : vector<512x32xf32> to vector<512x32xbf16>
    %c0_6 = arith.constant 0 : index
    %c0_7 = arith.constant 0 : index
    %9 = vector.load %arg4[%c0_6, %c0_7] : memref<512x32xbf16, #tpu.memory_space<vmem>>, vector<512x32xbf16>
    tpu.vector_store %arg4[%c0_6, %c0_7], %8 {strides = array<i32>} : memref<512x32xbf16, #tpu.memory_space<vmem>>, vector<512x32xbf16>,
    return
  }
  func.func @transform_0(%arg0: i32) -> (i32, i32) {
    %c0_i32 = arith.constant 0 : i32
    %c0_i32_0 = arith.constant 0 : i32
    return %arg0, %c0_i32 : i32, i32
  }
  func.func @transform_1(%arg0: i32) -> (i32, i32) {
    %c0_i32 = arith.constant 0 : i32
    %c0_i32_0 = arith.constant 0 : i32
    %c0_i32_1 = arith.constant 0 : i32
    return %c0_i32, %c0_i32_0 : i32, i32
  }
  func.func @transform_2(%arg0: i32) -> (i32, i32) {
    %c0_i32 = arith.constant 0 : i32
    %c0_i32_0 = arith.constant 0 : i32
    %c0_i32_1 = arith.constant 0 : i32
    return %c0_i32, %c0_i32_0 : i32, i32
  }
  func.func @transform_3(%arg0: i32) -> (i32, i32) {
    %c0_i32 = arith.constant 0 : i32
    %c0_i32_0 = arith.constant 0 : i32
    return %arg0, %c0_i32 : i32, i32
  }
}

module attributes {stable_mosaic.version = 11 : i64} {
  func.func @_mm_kernel(%arg0: i32, %arg1: memref<512x288xbf16, #tpu.memory_space<vmem>>, %arg2: memref<288x32xbf16, #tpu.memory_space<vmem>>, %arg3: memref<1x32xf32, #tpu.memory_space<vmem>>, %arg4: memref<512x32xbf16, #tpu.memory_space<vmem>>, %arg5: memref<512x32xf32, #tpu.memory_space<vmem>>) attributes {dimension_semantics = [#tpu.dimension_semantics<parallel>], iteration_bounds = array<i64: 1>, scalar_prefetch = 0 : i64, scratch_operands = 0 : i64, tpu.core_type = #tpu.core_type<tc>, window_params = [{transform_indices = @transform_0, window_bounds = array<i64: 512, 288>}, {pipeline_mode = #tpu.pipeline_mode<synchronous>, transform_indices = @transform_1, window_bounds = array<i64: 288, 32>}, {pipeline_mode = #tpu.pipeline_mode<synchronous>, transform_indices = @transform_2, window_bounds = array<i64: 1, 32>}, {transform_indices = @transform_3, window_bounds = array<i64: 512, 32>}, {transform_indices = @transform_4, window_bounds = array<i64: 512, 32>}]} {
    %c0 = arith.constant 0 : index
    %c0_0 = arith.constant 0 : index
    %0 = vector.load %arg1[%c0, %c0_0] : memref<512x288xbf16, #tpu.memory_space<vmem>>, vector<512x288xbf16>
    %c0_1 = arith.constant 0 : index
    %c0_2 = arith.constant 0 : index
    %1 = vector.load %arg2[%c0_1, %c0_2] : memref<288x32xbf16, #tpu.memory_space<vmem>>, vector<288x32xbf16>
    %cst = arith.constant dense<0.000000e+00> : vector<512x32xf32>
    %2 = tpu.matmul %0, %1, %cst {dimension_numbers = #tpu.dot_dimension_numbers<[1], [0], [0], [1], [0, 0, 1, 1], [], []>} : vector<512x288xbf16>, vector<288x32xbf16>, vector<512x32xf32> -> vector<512x32xf32>
    %c0_3 = arith.constant 0 : index
    %c0_4 = arith.constant 0 : index
    %3 = vector.load %arg3[%c0_3, %c0_4] : memref<1x32xf32, #tpu.memory_space<vmem>>, vector<1x32xf32>
    %4 = vector.broadcast %3 : vector<1x32xf32> to vector<512x32xf32>
    %5 = arith.addf %2, %4 : vector<512x32xf32>
    %c0_5 = arith.constant 0 : index
    %c0_6 = arith.constant 0 : index
    %6 = vector.load %arg4[%c0_5, %c0_6] : memref<512x32xbf16, #tpu.memory_space<vmem>>, vector<512x32xbf16>
    %7 = arith.extf %6 : vector<512x32xbf16> to vector<512x32xf32>
    %8 = arith.addf %5, %7 : vector<512x32xf32>
    %cst_7 = arith.constant 0.000000e+00 : f32
    %9 = vector.broadcast %cst_7 : f32 to vector<512x32xf32>
    %10 = arith.maximumf %8, %9 : vector<512x32xf32>
    %c0_8 = arith.constant 0 : index
    %c0_9 = arith.constant 0 : index
    %11 = vector.load %arg5[%c0_8, %c0_9] : memref<512x32xf32, #tpu.memory_space<vmem>>, vector<512x32xf32>
    tpu.vector_store %arg5[%c0_8, %c0_9], %10 {strides = array<i32>} : memref<512x32xf32, #tpu.memory_space<vmem>>, vector<512x32xf32>,
    return
  }
  func.func @transform_0(%arg0: i32) -> (i32, i32) {
    %c0_i32 = arith.constant 0 : i32
    %c0_i32_0 = arith.constant 0 : i32
    return %arg0, %c0_i32 : i32, i32
  }
  func.func @transform_1(%arg0: i32) -> (i32, i32) {
    %c0_i32 = arith.constant 0 : i32
    %c0_i32_0 = arith.constant 0 : i32
    %c0_i32_1 = arith.constant 0 : i32
    return %c0_i32, %c0_i32_0 : i32, i32
  }
  func.func @transform_2(%arg0: i32) -> (i32, i32) {
    %c0_i32 = arith.constant 0 : i32
    %c0_i32_0 = arith.constant 0 : i32
    %c0_i32_1 = arith.constant 0 : i32
    return %c0_i32, %c0_i32_0 : i32, i32
  }
  func.func @transform_3(%arg0: i32) -> (i32, i32) {
    %c0_i32 = arith.constant 0 : i32
    %c0_i32_0 = arith.constant 0 : i32
    return %arg0, %c0_i32 : i32, i32
  }
  func.func @transform_4(%arg0: i32) -> (i32, i32) {
    %c0_i32 = arith.constant 0 : i32
    %c0_i32_0 = arith.constant 0 : i32
    return %arg0, %c0_i32 : i32, i32
  }
}

</mosaic_0001>

<llo_original>
// kernel: residual_block_forward.3
$region0: #{residual_block_forward.3}
  #allocation0 [shape = 'u32[]', space=smem, size = 0x4, offset = 0x4, fixed_abs, tag = 'smem constant byte address 0x4 - core index']
  #allocation1 [shape = 'u32[72,128]{1,0:T(1,128)}', space=vmem, size = 0x9000, scoped, tag = 'internal scratch']
  %s0 = inlined_call_operand.vmem [shape: bf16[512,16], index: 0, kind: input, shape index: {}]
  %s1 = inlined_call_operand.vmem [shape: bf16[16,32], index: 1, kind: input, shape index: {}]
  %s2 = inlined_call_operand.vmem [shape: f32[1,32], index: 2, kind: input, shape index: {}]
  %s3 = inlined_call_operand.vmem [shape: bf16[512,32], index: 3, kind: output, shape index: {}]
  %s4 = sld [smem:[#allocation0]]
  $region22: #{residual_block_forward.3} parent=0
    _
  %s6 = ssub.s32 1, %s4
  %s7 = scalar_select 0, %s6, %s4
  // Predicated region
  $region2: #{residual_block_forward.3} parent=0 // pred_check
    _
  $region3: #{residual_block_forward.3} parent=0 // pred_check_branch
    %9 = sbr.rel (0) target = $region5
  $region4: #{residual_block_forward.3} parent=0 // pred_region
    _
  $region5: #{residual_block_forward.3} parent=0 // pred_fallthru
    _
  // Predicated region
  $region6: #{residual_block_forward.3} parent=0 // pred_check
    _
  $region7: #{residual_block_forward.3} parent=0 // pred_check_branch
    %11 = sbr.rel (0) target = $region9
  $region8: #{residual_block_forward.3} parent=0 // pred_region
    _
  $region9: #{residual_block_forward.3} parent=0 // pred_fallthru
    _
  // Predicated region
  $region10: #{residual_block_forward.3} parent=0 // pred_check
    _
  $region11: #{residual_block_forward.3} parent=0 // pred_check_branch
    %13 = sbr.rel (0) target = $region13
  $region12: #{residual_block_forward.3} parent=0 // pred_region
    _
  $region13: #{residual_block_forward.3} parent=0 // pred_fallthru
    _
  %v15 = vld [vmem:[%s0] sm:$0xf]
  %v16 = vld [vmem:[%s0 + $0x4] sm:$0xf]
  %v17 = vld [vmem:[%s0 + $0x8] sm:$0xf]
  %v18 = vld [vmem:[%s0 + $0xc] sm:$0xf]
  %v19 = vld [vmem:[%s0 + $0x10] sm:$0xf]
  %v20 = vld [vmem:[%s0 + $0x14] sm:$0xf]
  %v21 = vld [vmem:[%s0 + $0x18] sm:$0xf]
  %v22 = vld [vmem:[%s0 + $0x1c] sm:$0xf]
  %v23 = vld [vmem:[%s0 + $0x20] sm:$0xf]
  %v24 = vld [vmem:[%s0 + $0x24] sm:$0xf]
  %v25 = vld [vmem:[%s0 + $0x28] sm:$0xf]
  %v26 = vld [vmem:[%s0 + $0x2c] sm:$0xf]
  %v27 = vld [vmem:[%s0 + $0x30] sm:$0xf]
  %v28 = vld [vmem:[%s0 + $0x34] sm:$0xf]
  %v29 = vld [vmem:[%s0 + $0x38] sm:$0xf]
  %v30 = vld [vmem:[%s0 + $0x3c] sm:$0xf]
  %v31 = vld [vmem:[%s0 + $0x40] sm:$0xf]
  %v32 = vld [vmem:[%s0 + $0x44] sm:$0xf]
  %v33 = vld [vmem:[%s0 + $0x48] sm:$0xf]
  %v34 = vld [vmem:[%s0 + $0x4c] sm:$0xf]
  %v35 = vld [vmem:[%s0 + $0x50] sm:$0xf]
  %v36 = vld [vmem:[%s0 + $0x54] sm:$0xf]
  %v37 = vld [vmem:[%s0 + $0x58] sm:$0xf]
  %v38 = vld [vmem:[%s0 + $0x5c] sm:$0xf]
  %v39 = vld [vmem:[%s0 + $0x60] sm:$0xf]
  %v40 = vld [vmem:[%s0 + $0x64] sm:$0xf]
  %v41 = vld [vmem:[%s0 + $0x68] sm:$0xf]
  %v42 = vld [vmem:[%s0 + $0x6c] sm:$0xf]
  %v43 = vld [vmem:[%s0 + $0x70] sm:$0xf]
  %v44 = vld [vmem:[%s0 + $0x74] sm:$0xf]
  %v45 = vld [vmem:[%s0 + $0x78] sm:$0xf]
  %v46 = vld [vmem:[%s0 + $0x7c] sm:$0xf]
  %v47 = vld [vmem:[%s0 + $0x80] sm:$0xf]
  %v48 = vld [vmem:[%s0 + $0x84] sm:$0xf]
  %v49 = vld [vmem:[%s0 + $0x88] sm:$0xf]
  %v50 = vld [vmem:[%s0 + $0x8c] sm:$0xf]
  %v51 = vld [vmem:[%s0 + $0x90] sm:$0xf]
  %v52 = vld [vmem:[%s0 + $0x94] sm:$0xf]
  %v53 = vld [vmem:[%s0 + $0x98] sm:$0xf]
  %v54 = vld [vmem:[%s0 + $0x9c] sm:$0xf]
  %v55 = vld [vmem:[%s0 + $0xa0] sm:$0xf]
  %v56 = vld [vmem:[%s0 + $0xa4] sm:$0xf]
  %v57 = vld [vmem:[%s0 + $0xa8] sm:$0xf]
  %v58 = vld [vmem:[%s0 + $0xac] sm:$0xf]
  %v59 = vld [vmem:[%s0 + $0xb0] sm:$0xf]
  %v60 = vld [vmem:[%s0 + $0xb4] sm:$0xf]
  %v61 = vld [vmem:[%s0 + $0xb8] sm:$0xf]
  %v62 = vld [vmem:[%s0 + $0xbc] sm:$0xf]
  %v63 = vld [vmem:[%s0 + $0xc0] sm:$0xf]
  %v64 = vld [vmem:[%s0 + $0xc4] sm:$0xf]
  %v65 = vld [vmem:[%s0 + $0xc8] sm:$0xf]
  %v66 = vld [vmem:[%s0 + $0xcc] sm:$0xf]
  %v67 = vld [vmem:[%s0 + $0xd0] sm:$0xf]
  %v68 = vld [vmem:[%s0 + $0xd4] sm:$0xf]
  %v69 = vld [vmem:[%s0 + $0xd8] sm:$0xf]
  %v70 = vld [vmem:[%s0 + $0xdc] sm:$0xf]
  %v71 = vld [vmem:[%s0 + $0xe0] sm:$0xf]
  %v72 = vld [vmem:[%s0 + $0xe4] sm:$0xf]
  %v73 = vld [vmem:[%s0 + $0xe8] sm:$0xf]
  %v74 = vld [vmem:[%s0 + $0xec] sm:$0xf]
  %v75 = vld [vmem:[%s0 + $0xf0] sm:$0xf]
  %v76 = vld [vmem:[%s0 + $0xf4] sm:$0xf]
  %v77 = vld [vmem:[%s0 + $0xf8] sm:$0xf]
  %v78 = vld [vmem:[%s0 + $0xfc] sm:$0xf]
  %v79 = vld [vmem:[%s1] sm:$0xf]
  %v80 = vld [vmem:[%s1 + $0x4] sm:$0xf]
  %v81 = vld [vmem:[%s2] sm:$0x1]
  %v83 = vperm.slane %v81, 0
  %v149 = vunpack.c.l.b16 %v15
  %v150 = vunpack.c.l.b16 %v16
  %v151 = vunpack.c.l.b16 %v17
  %v152 = vunpack.c.l.b16 %v18
  %v153 = vunpack.c.l.b16 %v19
  %v154 = vunpack.c.l.b16 %v20
  %v155 = vunpack.c.l.b16 %v21
  %v156 = vunpack.c.l.b16 %v22
  %v157 = vunpack.c.l.b16 %v23
  %v158 = vunpack.c.l.b16 %v24
  %v159 = vunpack.c.l.b16 %v25
  %v160 = vunpack.c.l.b16 %v26
  %v161 = vunpack.c.l.b16 %v27
  %v162 = vunpack.c.l.b16 %v28
  %v163 = vunpack.c.l.b16 %v29
  %v164 = vunpack.c.l.b16 %v30
  %v165 = vunpack.c.l.b16 %v31
  %v166 = vunpack.c.l.b16 %v32
  %v167 = vunpack.c.l.b16 %v33
  %v168 = vunpack.c.l.b16 %v34
  %v169 = vunpack.c.l.b16 %v35
  %v170 = vunpack.c.l.b16 %v36
  %v171 = vunpack.c.l.b16 %v37
  %v172 = vunpack.c.l.b16 %v38
  %v173 = vunpack.c.l.b16 %v39
  %v174 = vunpack.c.l.b16 %v40
  %v175 = vunpack.c.l.b16 %v41
  %v176 = vunpack.c.l.b16 %v42
  %v177 = vunpack.c.l.b16 %v43
  %v178 = vunpack.c.l.b16 %v44
  %v179 = vunpack.c.l.b16 %v45
  %v180 = vunpack.c.l.b16 %v46
  %v181 = vunpack.c.l.b16 %v47
  %v182 = vunpack.c.l.b16 %v48
  %v183 = vunpack.c.l.b16 %v49
  %v184 = vunpack.c.l.b16 %v50
  %v185 = vunpack.c.l.b16 %v51
  %v186 = vunpack.c.l.b16 %v52
  %v187 = vunpack.c.l.b16 %v53
  %v188 = vunpack.c.l.b16 %v54
  %v189 = vunpack.c.l.b16 %v55
  %v190 = vunpack.c.l.b16 %v56
  %v191 = vunpack.c.l.b16 %v57
  %v192 = vunpack.c.l.b16 %v58
  %v193 = vunpack.c.l.b16 %v59
  %v194 = vunpack.c.l.b16 %v60
  %v195 = vunpack.c.l.b16 %v61
  %v196 = vunpack.c.l.b16 %v62
  %v197 = vunpack.c.l.b16 %v63
  %v198 = vunpack.c.l.b16 %v64
  %v199 = vunpack.c.l.b16 %v65
  %v200 = vunpack.c.l.b16 %v66
  %v201 = vunpack.c.l.b16 %v67
  %v202 = vunpack.c.l.b16 %v68
  %v203 = vunpack.c.l.b16 %v69
  %v204 = vunpack.c.l.b16 %v70
  %v205 = vunpack.c.l.b16 %v71
  %v206 = vunpack.c.l.b16 %v72
  %v207 = vunpack.c.l.b16 %v73
  %v208 = vunpack.c.l.b16 %v74
  %v209 = vunpack.c.l.b16 %v75
  %v210 = vunpack.c.l.b16 %v76
  %v211 = vunpack.c.l.b16 %v77
  %v212 = vunpack.c.l.b16 %v78
  %v213 = vpack.c.b16 %v150, %v149
  %v214 = vpack.c.b16 %v152, %v151
  %v215 = vpack.c.b16 %v154, %v153
  %v216 = vpack.c.b16 %v156, %v155
  %v217 = vpack.c.b16 %v158, %v157
  %v218 = vpack.c.b16 %v160, %v159
  %v219 = vpack.c.b16 %v162, %v161
  %v220 = vpack.c.b16 %v164, %v163
  %v221 = vpack.c.b16 %v166, %v165
  %v222 = vpack.c.b16 %v168, %v167
  %v223 = vpack.c.b16 %v170, %v169
  %v224 = vpack.c.b16 %v172, %v171
  %v225 = vpack.c.b16 %v174, %v173
  %v226 = vpack.c.b16 %v176, %v175
  %v227 = vpack.c.b16 %v178, %v177
  %v228 = vpack.c.b16 %v180, %v179
  %v229 = vpack.c.b16 %v182, %v181
  %v230 = vpack.c.b16 %v184, %v183
  %v231 = vpack.c.b16 %v186, %v185
  %v232 = vpack.c.b16 %v188, %v187
  %v233 = vpack.c.b16 %v190, %v189
  %v234 = vpack.c.b16 %v192, %v191
  %v235 = vpack.c.b16 %v194, %v193
  %v236 = vpack.c.b16 %v196, %v195
  %v237 = vpack.c.b16 %v198, %v197
  %v238 = vpack.c.b16 %v200, %v199
  %v239 = vpack.c.b16 %v202, %v201
  %v240 = vpack.c.b16 %v204, %v203
  %v241 = vpack.c.b16 %v206, %v205
  %v242 = vpack.c.b16 %v208, %v207
  %v243 = vpack.c.b16 %v210, %v209
  %v244 = vpack.c.b16 %v212, %v211
  %v247 = vunpack.c.l.b16 %v79
  %v248 = vunpack.c.l.b16 %v80
  %v249 = vpack.c.b16 %v248, %v247
  %vm251 = vcmask 130048
  %v253 = vsel %vm251, %v213, 0
  %v256 = vsel %vm251, %v214, 0
  %v259 = vsel %vm251, %v215, 0
  %v262 = vsel %vm251, %v216, 0
  %v265 = vsel %vm251, %v217, 0
  %v268 = vsel %vm251, %v218, 0
  %v271 = vsel %vm251, %v219, 0
  %v274 = vsel %vm251, %v220, 0
  %v277 = vsel %vm251, %v221, 0
  %v280 = vsel %vm251, %v222, 0
  %v283 = vsel %vm251, %v223, 0
  %v286 = vsel %vm251, %v224, 0
  %v289 = vsel %vm251, %v225, 0
  %v292 = vsel %vm251, %v226, 0
  %v295 = vsel %vm251, %v227, 0
  %v298 = vsel %vm251, %v228, 0
  %v301 = vsel %vm251, %v229, 0
  %v304 = vsel %vm251, %v230, 0
  %v307 = vsel %vm251, %v231, 0
  %v310 = vsel %vm251, %v232, 0
  %v313 = vsel %vm251, %v233, 0
  %v316 = vsel %vm251, %v234, 0
  %v319 = vsel %vm251, %v235, 0
  %v322 = vsel %vm251, %v236, 0
  %v325 = vsel %vm251, %v237, 0
  %v328 = vsel %vm251, %v238, 0
  %v331 = vsel %vm251, %v239, 0
  %v334 = vsel %vm251, %v240, 0
  %v337 = vsel %vm251, %v241, 0
  %v340 = vsel %vm251, %v242, 0
  %v343 = vsel %vm251, %v243, 0
  %v346 = vsel %vm251, %v244, 0
  %348 = vmatpush.bf16.msra.mxu0 0
  %349 = vmatpush.bf16.msra.mxu0 0
  %350 = vmatpush.bf16.msra.mxu0 0
  %351 = vmatpush.bf16.msra.mxu0 0
  %352 = vmatpush.bf16.msra.mxu0 0
  %353 = vmatpush.bf16.msra.mxu0 0
  %354 = vmatpush.bf16.msra.mxu0 0
  %355 = vmatpush.bf16.msra.mxu0 %v249
  %356 = vmatmul.bf16.gmra.mxu0 %v253
  %v357 = vpop.f32.mrf.mxu0
  %v358 = vadd.f32 %v83, %v357
  %v359 = vpop.f32.mrf.mxu0
  %v360 = vadd.f32 %v83, %v359
  %361 = vmatmul.bf16.gmra.mxu0 %v256
  %v362 = vpop.f32.mrf.mxu0
  %v363 = vadd.f32 %v83, %v362
  %v364 = vpop.f32.mrf.mxu0
  %v365 = vadd.f32 %v83, %v364
  %366 = vmatmul.bf16.gmra.mxu0 %v259
  %v367 = vpop.f32.mrf.mxu0
  %v368 = vadd.f32 %v83, %v367
  %v369 = vpop.f32.mrf.mxu0
  %v370 = vadd.f32 %v83, %v369
  %371 = vmatmul.bf16.gmra.mxu0 %v262
  %v372 = vpop.f32.mrf.mxu0
  %v373 = vadd.f32 %v83, %v372
  %v374 = vpop.f32.mrf.mxu0
  %v375 = vadd.f32 %v83, %v374
  %376 = vmatmul.bf16.gmra.mxu0 %v265
  %v377 = vpop.f32.mrf.mxu0
  %v378 = vadd.f32 %v83, %v377
  %v379 = vpop.f32.mrf.mxu0
  %v380 = vadd.f32 %v83, %v379
  %381 = vmatmul.bf16.gmra.mxu0 %v268
  %v382 = vpop.f32.mrf.mxu0
  %v383 = vadd.f32 %v83, %v382
  %v384 = vpop.f32.mrf.mxu0
  %v385 = vadd.f32 %v83, %v384
  %386 = vmatmul.bf16.gmra.mxu0 %v271
  %v387 = vpop.f32.mrf.mxu0
  %v388 = vadd.f32 %v83, %v387
  %v389 = vpop.f32.mrf.mxu0
  %v390 = vadd.f32 %v83, %v389
  %391 = vmatmul.bf16.gmra.mxu0 %v274
  %v392 = vpop.f32.mrf.mxu0
  %v393 = vadd.f32 %v83, %v392
  %v394 = vpop.f32.mrf.mxu0
  %v395 = vadd.f32 %v83, %v394
  %396 = vmatmul.bf16.gmra.mxu0 %v277
  %v397 = vpop.f32.mrf.mxu0
  %v398 = vadd.f32 %v83, %v397
  %v399 = vpop.f32.mrf.mxu0
  %v400 = vadd.f32 %v83, %v399
  %401 = vmatmul.bf16.gmra.mxu0 %v280
  %v402 = vpop.f32.mrf.mxu0
  %v403 = vadd.f32 %v83, %v402
  %v404 = vpop.f32.mrf.mxu0
  %v405 = vadd.f32 %v83, %v404
  %406 = vmatmul.bf16.gmra.mxu0 %v283
  %v407 = vpop.f32.mrf.mxu0
  %v408 = vadd.f32 %v83, %v407
  %v409 = vpop.f32.mrf.mxu0
  %v410 = vadd.f32 %v83, %v409
  %411 = vmatmul.bf16.gmra.mxu0 %v286
  %v412 = vpop.f32.mrf.mxu0
  %v413 = vadd.f32 %v83, %v412
  %v414 = vpop.f32.mrf.mxu0
  %v415 = vadd.f32 %v83, %v414
  %416 = vmatmul.bf16.gmra.mxu0 %v289
  %v417 = vpop.f32.mrf.mxu0
  %v418 = vadd.f32 %v83, %v417
  %v419 = vpop.f32.mrf.mxu0
  %v420 = vadd.f32 %v83, %v419
  %421 = vmatmul.bf16.gmra.mxu0 %v292
  %v422 = vpop.f32.mrf.mxu0
  %v423 = vadd.f32 %v83, %v422
  %v424 = vpop.f32.mrf.mxu0
  %v425 = vadd.f32 %v83, %v424
  %426 = vmatmul.bf16.gmra.mxu0 %v295
  %v427 = vpop.f32.mrf.mxu0
  %v428 = vadd.f32 %v83, %v427
  %v429 = vpop.f32.mrf.mxu0
  %v430 = vadd.f32 %v83, %v429
  %431 = vmatmul.bf16.gmra.mxu0 %v298
  %v432 = vpop.f32.mrf.mxu0
  %v433 = vadd.f32 %v83, %v432
  %v434 = vpop.f32.mrf.mxu0
  %v435 = vadd.f32 %v83, %v434
  %436 = vmatmul.bf16.gmra.mxu0 %v301
  %v437 = vpop.f32.mrf.mxu0
  %v438 = vadd.f32 %v83, %v437
  %v439 = vpop.f32.mrf.mxu0
  %v440 = vadd.f32 %v83, %v439
  %441 = vmatmul.bf16.gmra.mxu0 %v304
  %v442 = vpop.f32.mrf.mxu0
  %v443 = vadd.f32 %v83, %v442
  %v444 = vpop.f32.mrf.mxu0
  %v445 = vadd.f32 %v83, %v444
  %446 = vmatmul.bf16.gmra.mxu0 %v307
  %v447 = vpop.f32.mrf.mxu0
  %v448 = vadd.f32 %v83, %v447
  %v449 = vpop.f32.mrf.mxu0
  %v450 = vadd.f32 %v83, %v449
  %451 = vmatmul.bf16.gmra.mxu0 %v310
  %v452 = vpop.f32.mrf.mxu0
  %v453 = vadd.f32 %v83, %v452
  %v454 = vpop.f32.mrf.mxu0
  %v455 = vadd.f32 %v83, %v454
  %456 = vmatmul.bf16.gmra.mxu0 %v313
  %v457 = vpop.f32.mrf.mxu0
  %v458 = vadd.f32 %v83, %v457
  %v459 = vpop.f32.mrf.mxu0
  %v460 = vadd.f32 %v83, %v459
  %461 = vmatmul.bf16.gmra.mxu0 %v316
  %v462 = vpop.f32.mrf.mxu0
  %v463 = vadd.f32 %v83, %v462
  %v464 = vpop.f32.mrf.mxu0
  %v465 = vadd.f32 %v83, %v464
  %466 = vmatmul.bf16.gmra.mxu0 %v319
  %v467 = vpop.f32.mrf.mxu0
  %v468 = vadd.f32 %v83, %v467
  %v469 = vpop.f32.mrf.mxu0
  %v470 = vadd.f32 %v83, %v469
  %471 = vmatmul.bf16.gmra.mxu0 %v322
  %v472 = vpop.f32.mrf.mxu0
  %v473 = vadd.f32 %v83, %v472
  %v474 = vpop.f32.mrf.mxu0
  %v475 = vadd.f32 %v83, %v474
  %476 = vmatmul.bf16.gmra.mxu0 %v325
  %v477 = vpop.f32.mrf.mxu0
  %v478 = vadd.f32 %v83, %v477
  %v479 = vpop.f32.mrf.mxu0
  %v480 = vadd.f32 %v83, %v479
  %481 = vmatmul.bf16.gmra.mxu0 %v328
  %v482 = vpop.f32.mrf.mxu0
  %v483 = vadd.f32 %v83, %v482
  %v484 = vpop.f32.mrf.mxu0
  %v485 = vadd.f32 %v83, %v484
  %486 = vmatmul.bf16.gmra.mxu0 %v331
  %v487 = vpop.f32.mrf.mxu0
  %v488 = vadd.f32 %v83, %v487
  %v489 = vpop.f32.mrf.mxu0
  %v490 = vadd.f32 %v83, %v489
  %491 = vmatmul.bf16.gmra.mxu0 %v334
  %v492 = vpop.f32.mrf.mxu0
  %v493 = vadd.f32 %v83, %v492
  %v494 = vpop.f32.mrf.mxu0
  %v495 = vadd.f32 %v83, %v494
  %496 = vmatmul.bf16.gmra.mxu0 %v337
  %v497 = vpop.f32.mrf.mxu0
  %v498 = vadd.f32 %v83, %v497
  %v499 = vpop.f32.mrf.mxu0
  %v500 = vadd.f32 %v83, %v499
  %501 = vmatmul.bf16.gmra.mxu0 %v340
  %v502 = vpop.f32.mrf.mxu0
  %v503 = vadd.f32 %v83, %v502
  %v504 = vpop.f32.mrf.mxu0
  %v505 = vadd.f32 %v83, %v504
  %506 = vmatmul.bf16.gmra.mxu0 %v343
  %v507 = vpop.f32.mrf.mxu0
  %v508 = vadd.f32 %v83, %v507
  %v509 = vpop.f32.mrf.mxu0
  %v510 = vadd.f32 %v83, %v509
  %511 = vmatmul.bf16.gmra.mxu0 %v346
  %v512 = vpop.f32.mrf.mxu0
  %v513 = vadd.f32 %v83, %v512
  %v514 = vpop.f32.mrf.mxu0
  %v515 = vadd.f32 %v83, %v514
  %516 = vdwg.mxu0
  %v517 = vpack.c.bf16 %v358, %v358
  %v518 = vpack.c.bf16 %v360, %v360
  %v519 = vpack.c.bf16 %v363, %v363
  %v520 = vpack.c.bf16 %v365, %v365
  %v521 = vpack.c.bf16 %v368, %v368
  %v522 = vpack.c.bf16 %v370, %v370
  %v523 = vpack.c.bf16 %v373, %v373
  %v524 = vpack.c.bf16 %v375, %v375
  %v525 = vpack.c.bf16 %v378, %v378
  %v526 = vpack.c.bf16 %v380, %v380
  %v527 = vpack.c.bf16 %v383, %v383
  %v528 = vpack.c.bf16 %v385, %v385
  %v529 = vpack.c.bf16 %v388, %v388
  %v530 = vpack.c.bf16 %v390, %v390
  %v531 = vpack.c.bf16 %v393, %v393
  %v532 = vpack.c.bf16 %v395, %v395
  %v533 = vpack.c.bf16 %v398, %v398
  %v534 = vpack.c.bf16 %v400, %v400
  %v535 = vpack.c.bf16 %v403, %v403
  %v536 = vpack.c.bf16 %v405, %v405
  %v537 = vpack.c.bf16 %v408, %v408
  %v538 = vpack.c.bf16 %v410, %v410
  %v539 = vpack.c.bf16 %v413, %v413
  %v540 = vpack.c.bf16 %v415, %v415
  %v541 = vpack.c.bf16 %v418, %v418
  %v542 = vpack.c.bf16 %v420, %v420
  %v543 = vpack.c.bf16 %v423, %v423
  %v544 = vpack.c.bf16 %v425, %v425
  %v545 = vpack.c.bf16 %v428, %v428
  %v546 = vpack.c.bf16 %v430, %v430
  %v547 = vpack.c.bf16 %v433, %v433
  %v548 = vpack.c.bf16 %v435, %v435
  %v549 = vpack.c.bf16 %v438, %v438
  %v550 = vpack.c.bf16 %v440, %v440
  %v551 = vpack.c.bf16 %v443, %v443
  %v552 = vpack.c.bf16 %v445, %v445
  %v553 = vpack.c.bf16 %v448, %v448
  %v554 = vpack.c.bf16 %v450, %v450
  %v555 = vpack.c.bf16 %v453, %v453
  %v556 = vpack.c.bf16 %v455, %v455
  %v557 = vpack.c.bf16 %v458, %v458
  %v558 = vpack.c.bf16 %v460, %v460
  %v559 = vpack.c.bf16 %v463, %v463
  %v560 = vpack.c.bf16 %v465, %v465
  %v561 = vpack.c.bf16 %v468, %v468
  %v562 = vpack.c.bf16 %v470, %v470
  %v563 = vpack.c.bf16 %v473, %v473
  %v564 = vpack.c.bf16 %v475, %v475
  %v565 = vpack.c.bf16 %v478, %v478
  %v566 = vpack.c.bf16 %v480, %v480
  %v567 = vpack.c.bf16 %v483, %v483
  %v568 = vpack.c.bf16 %v485, %v485
  %v569 = vpack.c.bf16 %v488, %v488
  %v570 = vpack.c.bf16 %v490, %v490
  %v571 = vpack.c.bf16 %v493, %v493
  %v572 = vpack.c.bf16 %v495, %v495
  %v573 = vpack.c.bf16 %v498, %v498
  %v574 = vpack.c.bf16 %v500, %v500
  %v575 = vpack.c.bf16 %v503, %v503
  %v576 = vpack.c.bf16 %v505, %v505
  %v577 = vpack.c.bf16 %v508, %v508
  %v578 = vpack.c.bf16 %v510, %v510
  %v579 = vpack.c.bf16 %v513, %v513
  %v580 = vpack.c.bf16 %v515, %v515
  %vm581 = vcmask 257024
  %582 = vst.msk [vmem:[%s3] sm:$0xf] %vm581, %v517
  %583 = vst.msk [vmem:[%s3 + $0x4] sm:$0xf] %vm581, %v518
  %584 = vst.msk [vmem:[%s3 + $0x8] sm:$0xf] %vm581, %v519
  %585 = vst.msk [vmem:[%s3 + $0xc] sm:$0xf] %vm581, %v520
  %586 = vst.msk [vmem:[%s3 + $0x10] sm:$0xf] %vm581, %v521
  %587 = vst.msk [vmem:[%s3 + $0x14] sm:$0xf] %vm581, %v522
  %588 = vst.msk [vmem:[%s3 + $0x18] sm:$0xf] %vm581, %v523
  %589 = vst.msk [vmem:[%s3 + $0x1c] sm:$0xf] %vm581, %v524
  %590 = vst.msk [vmem:[%s3 + $0x20] sm:$0xf] %vm581, %v525
  %591 = vst.msk [vmem:[%s3 + $0x24] sm:$0xf] %vm581, %v526
  %592 = vst.msk [vmem:[%s3 + $0x28] sm:$0xf] %vm581, %v527
  %593 = vst.msk [vmem:[%s3 + $0x2c] sm:$0xf] %vm581, %v528
  %594 = vst.msk [vmem:[%s3 + $0x30] sm:$0xf] %vm581, %v529
  %595 = vst.msk [vmem:[%s3 + $0x34] sm:$0xf] %vm581, %v530
  %596 = vst.msk [vmem:[%s3 + $0x38] sm:$0xf] %vm581, %v531
  %597 = vst.msk [vmem:[%s3 + $0x3c] sm:$0xf] %vm581, %v532
  %598 = vst.msk [vmem:[%s3 + $0x40] sm:$0xf] %vm581, %v533
  %599 = vst.msk [vmem:[%s3 + $0x44] sm:$0xf] %vm581, %v534
  %600 = vst.msk [vmem:[%s3 + $0x48] sm:$0xf] %vm581, %v535
  %601 = vst.msk [vmem:[%s3 + $0x4c] sm:$0xf] %vm581, %v536
  %602 = vst.msk [vmem:[%s3 + $0x50] sm:$0xf] %vm581, %v537
  %603 = vst.msk [vmem:[%s3 + $0x54] sm:$0xf] %vm581, %v538
  %604 = vst.msk [vmem:[%s3 + $0x58] sm:$0xf] %vm581, %v539
  %605 = vst.msk [vmem:[%s3 + $0x5c] sm:$0xf] %vm581, %v540
  %606 = vst.msk [vmem:[%s3 + $0x60] sm:$0xf] %vm581, %v541
  %607 = vst.msk [vmem:[%s3 + $0x64] sm:$0xf] %vm581, %v542
  %608 = vst.msk [vmem:[%s3 + $0x68] sm:$0xf] %vm581, %v543
  %609 = vst.msk [vmem:[%s3 + $0x6c] sm:$0xf] %vm581, %v544
  %610 = vst.msk [vmem:[%s3 + $0x70] sm:$0xf] %vm581, %v545
  %611 = vst.msk [vmem:[%s3 + $0x74] sm:$0xf] %vm581, %v546
  %612 = vst.msk [vmem:[%s3 + $0x78] sm:$0xf] %vm581, %v547
  %613 = vst.msk [vmem:[%s3 + $0x7c] sm:$0xf] %vm581, %v548
  %614 = vst.msk [vmem:[%s3 + $0x80] sm:$0xf] %vm581, %v549
  %615 = vst.msk [vmem:[%s3 + $0x84] sm:$0xf] %vm581, %v550
  %616 = vst.msk [vmem:[%s3 + $0x88] sm:$0xf] %vm581, %v551
  %617 = vst.msk [vmem:[%s3 + $0x8c] sm:$0xf] %vm581, %v552
  %618 = vst.msk [vmem:[%s3 + $0x90] sm:$0xf] %vm581, %v553
  %619 = vst.msk [vmem:[%s3 + $0x94] sm:$0xf] %vm581, %v554
  %620 = vst.msk [vmem:[%s3 + $0x98] sm:$0xf] %vm581, %v555
  %621 = vst.msk [vmem:[%s3 + $0x9c] sm:$0xf] %vm581, %v556
  %622 = vst.msk [vmem:[%s3 + $0xa0] sm:$0xf] %vm581, %v557
  %623 = vst.msk [vmem:[%s3 + $0xa4] sm:$0xf] %vm581, %v558
  %624 = vst.msk [vmem:[%s3 + $0xa8] sm:$0xf] %vm581, %v559
  %625 = vst.msk [vmem:[%s3 + $0xac] sm:$0xf] %vm581, %v560
  %626 = vst.msk [vmem:[%s3 + $0xb0] sm:$0xf] %vm581, %v561
  %627 = vst.msk [vmem:[%s3 + $0xb4] sm:$0xf] %vm581, %v562
  %628 = vst.msk [vmem:[%s3 + $0xb8] sm:$0xf] %vm581, %v563
  %629 = vst.msk [vmem:[%s3 + $0xbc] sm:$0xf] %vm581, %v564
  %630 = vst.msk [vmem:[%s3 + $0xc0] sm:$0xf] %vm581, %v565
  %631 = vst.msk [vmem:[%s3 + $0xc4] sm:$0xf] %vm581, %v566
  %632 = vst.msk [vmem:[%s3 + $0xc8] sm:$0xf] %vm581, %v567
  %633 = vst.msk [vmem:[%s3 + $0xcc] sm:$0xf] %vm581, %v568
  %634 = vst.msk [vmem:[%s3 + $0xd0] sm:$0xf] %vm581, %v569
  %635 = vst.msk [vmem:[%s3 + $0xd4] sm:$0xf] %vm581, %v570
  %636 = vst.msk [vmem:[%s3 + $0xd8] sm:$0xf] %vm581, %v571
  %637 = vst.msk [vmem:[%s3 + $0xdc] sm:$0xf] %vm581, %v572
  %638 = vst.msk [vmem:[%s3 + $0xe0] sm:$0xf] %vm581, %v573
  %639 = vst.msk [vmem:[%s3 + $0xe4] sm:$0xf] %vm581, %v574
  %640 = vst.msk [vmem:[%s3 + $0xe8] sm:$0xf] %vm581, %v575
  %641 = vst.msk [vmem:[%s3 + $0xec] sm:$0xf] %vm581, %v576
  %642 = vst.msk [vmem:[%s3 + $0xf0] sm:$0xf] %vm581, %v577
  %643 = vst.msk [vmem:[%s3 + $0xf4] sm:$0xf] %vm581, %v578
  %644 = vst.msk [vmem:[%s3 + $0xf8] sm:$0xf] %vm581, %v579
  %645 = vst.msk [vmem:[%s3 + $0xfc] sm:$0xf] %vm581, %v580
  // Predicated region
  $region14: #{residual_block_forward.3} parent=0 // pred_check
    _
  $region15: #{residual_block_forward.3} parent=0 // pred_check_branch
    %647 = sbr.rel (0) target = $region17
  $region16: #{residual_block_forward.3} parent=0 // pred_region
    _
  $region17: #{residual_block_forward.3} parent=0 // pred_fallthru
    _
  // Predicated region
  $region18: #{residual_block_forward.3} parent=0 // pred_check
    _
  $region19: #{residual_block_forward.3} parent=0 // pred_check_branch
    %649 = sbr.rel (0) target = $region21
  $region20: #{residual_block_forward.3} parent=0 // pred_region
    _
  $region21: #{residual_block_forward.3} parent=0 // pred_fallthru
    _

// kernel: residual_block_forward.4
$region0: #{residual_block_forward.4}
  #allocation0 [shape = 'u32[]', space=smem, size = 0x4, offset = 0x4, fixed_abs, tag = 'smem constant byte address 0x4 - core index']
  #allocation1 [shape = 'u32[72,128]{1,0:T(1,128)}', space=vmem, size = 0x9000, scoped, tag = 'internal scratch']
  %s0 = inlined_call_operand.vmem [shape: bf16[512,144], index: 0, kind: input, shape index: {}]
  %s1 = inlined_call_operand.vmem [shape: bf16[144,32], index: 1, kind: input, shape index: {}]
  %s2 = inlined_call_operand.vmem [shape: f32[1,32], index: 2, kind: input, shape index: {}]
  %s3 = inlined_call_operand.vmem [shape: bf16[512,32], index: 3, kind: output, shape index: {}]
  %s4 = sld [smem:[#allocation0]]
  $region22: #{residual_block_forward.4} parent=0
    _
  %s6 = ssub.s32 1, %s4
  %s7 = scalar_select 0, %s6, %s4
  // Predicated region
  $region2: #{residual_block_forward.4} parent=0 // pred_check
    _
  $region3: #{residual_block_forward.4} parent=0 // pred_check_branch
    %9 = sbr.rel (0) target = $region5
  $region4: #{residual_block_forward.4} parent=0 // pred_region
    _
  $region5: #{residual_block_forward.4} parent=0 // pred_fallthru
    _
  // Predicated region
  $region6: #{residual_block_forward.4} parent=0 // pred_check
    _
  $region7: #{residual_block_forward.4} parent=0 // pred_check_branch
    %11 = sbr.rel (0) target = $region9
  $region8: #{residual_block_forward.4} parent=0 // pred_region
    _
  $region9: #{residual_block_forward.4} parent=0 // pred_fallthru
    _
  // Predicated region
  $region10: #{residual_block_forward.4} parent=0 // pred_check
    _
  $region11: #{residual_block_forward.4} parent=0 // pred_check_branch
    %13 = sbr.rel (0) target = $region13
  $region12: #{residual_block_forward.4} parent=0 // pred_region
    _
  $region13: #{residual_block_forward.4} parent=0 // pred_fallthru
    _
  %v15 = vld [vmem:[%s0] sm:$0xff]
  %v16 = vld [vmem:[%s0 + $0x8] sm:$0xff]
  %v17 = vld [vmem:[%s0 + $0x10] sm:$0xff]
  %v18 = vld [vmem:[%s0 + $0x18] sm:$0xff]
  %v19 = vld [vmem:[%s0 + $0x20] sm:$0xff]
  %v20 = vld [vmem:[%s0 + $0x28] sm:$0xff]
  %v21 = vld [vmem:[%s0 + $0x30] sm:$0xff]
  %v22 = vld [vmem:[%s0 + $0x38] sm:$0xff]
  %v23 = vld [vmem:[%s0 + $0x40] sm:$0xff]
  %v24 = vld [vmem:[%s0 + $0x48] sm:$0xff]
  %v25 = vld [vmem:[%s0 + $0x50] sm:$0xff]
  %v26 = vld [vmem:[%s0 + $0x58] sm:$0xff]
  %v27 = vld [vmem:[%s0 + $0x60] sm:$0xff]
  %v28 = vld [vmem:[%s0 + $0x68] sm:$0xff]
  %v29 = vld [vmem:[%s0 + $0x70] sm:$0xff]
  %v30 = vld [vmem:[%s0 + $0x78] sm:$0xff]
  %v31 = vld [vmem:[%s0 + $0x80] sm:$0xff]
  %v32 = vld [vmem:[%s0 + $0x88] sm:$0xff]
  %v33 = vld [vmem:[%s0 + $0x90] sm:$0xff]
  %v34 = vld [vmem:[%s0 + $0x98] sm:$0xff]
  %v35 = vld [vmem:[%s0 + $0xa0] sm:$0xff]
  %v36 = vld [vmem:[%s0 + $0xa8] sm:$0xff]
  %v37 = vld [vmem:[%s0 + $0xb0] sm:$0xff]
  %v38 = vld [vmem:[%s0 + $0xb8] sm:$0xff]
  %v39 = vld [vmem:[%s0 + $0xc0] sm:$0xff]
  %v40 = vld [vmem:[%s0 + $0xc8] sm:$0xff]
  %v41 = vld [vmem:[%s0 + $0xd0] sm:$0xff]
  %v42 = vld [vmem:[%s0 + $0xd8] sm:$0xff]
  %v43 = vld [vmem:[%s0 + $0xe0] sm:$0xff]
  %v44 = vld [vmem:[%s0 + $0xe8] sm:$0xff]
  %v45 = vld [vmem:[%s0 + $0xf0] sm:$0xff]
  %v46 = vld [vmem:[%s0 + $0xf8] sm:$0xff]
  %v47 = vld [vmem:[%s0 + $0x100] sm:$0xff]
  %v48 = vld [vmem:[%s0 + $0x108] sm:$0xff]
  %v49 = vld [vmem:[%s0 + $0x110] sm:$0xff]
  %v50 = vld [vmem:[%s0 + $0x118] sm:$0xff]
  %v51 = vld [vmem:[%s0 + $0x120] sm:$0xff]
  %v52 = vld [vmem:[%s0 + $0x128] sm:$0xff]
  %v53 = vld [vmem:[%s0 + $0x130] sm:$0xff]
  %v54 = vld [vmem:[%s0 + $0x138] sm:$0xff]
  %v55 = vld [vmem:[%s0 + $0x140] sm:$0xff]
  %v56 = vld [vmem:[%s0 + $0x148] sm:$0xff]
  %v57 = vld [vmem:[%s0 + $0x150] sm:$0xff]
  %v58 = vld [vmem:[%s0 + $0x158] sm:$0xff]
  %v59 = vld [vmem:[%s0 + $0x160] sm:$0xff]
  %v60 = vld [vmem:[%s0 + $0x168] sm:$0xff]
  %v61 = vld [vmem:[%s0 + $0x170] sm:$0xff]
  %v62 = vld [vmem:[%s0 + $0x178] sm:$0xff]
  %v63 = vld [vmem:[%s0 + $0x180] sm:$0xff]
  %v64 = vld [vmem:[%s0 + $0x188] sm:$0xff]
  %v65 = vld [vmem:[%s0 + $0x190] sm:$0xff]
  %v66 = vld [vmem:[%s0 + $0x198] sm:$0xff]
  %v67 = vld [vmem:[%s0 + $0x1a0] sm:$0xff]
  %v68 = vld [vmem:[%s0 + $0x1a8] sm:$0xff]
  %v69 = vld [vmem:[%s0 + $0x1b0] sm:$0xff]
  %v70 = vld [vmem:[%s0 + $0x1b8] sm:$0xff]
  %v71 = vld [vmem:[%s0 + $0x1c0] sm:$0xff]
  %v72 = vld [vmem:[%s0 + $0x1c8] sm:$0xff]
  %v73 = vld [vmem:[%s0 + $0x1d0] sm:$0xff]
  %v74 = vld [vmem:[%s0 + $0x1d8] sm:$0xff]
  %v75 = vld [vmem:[%s0 + $0x1e0] sm:$0xff]
  %v76 = vld [vmem:[%s0 + $0x1e8] sm:$0xff]
  %v77 = vld [vmem:[%s0 + $0x1f0] sm:$0xff]
  %v78 = vld [vmem:[%s0 + $0x1f8] sm:$0xff]
  %v79 = vld [vmem:[%s1] sm:$0xf]
  %v80 = vld [vmem:[%s1 + $0x4] sm:$0xf]
  %v81 = vld [vmem:[%s1 + $0x8] sm:$0xf]
  %v82 = vld [vmem:[%s1 + $0xc] sm:$0xf]
  %v83 = vld [vmem:[%s1 + $0x10] sm:$0xf]
  %v84 = vld [vmem:[%s1 + $0x14] sm:$0xf]
  %v85 = vld [vmem:[%s1 + $0x18] sm:$0xf]
  %v86 = vld [vmem:[%s1 + $0x1c] sm:$0xf]
  %v87 = vld [vmem:[%s1 + $0x20] sm:$0xf]
  %v88 = vld [vmem:[%s1 + $0x24] sm:$0xf]
  %v89 = vld [vmem:[%s1 + $0x28] sm:$0xf]
  %v90 = vld [vmem:[%s1 + $0x2c] sm:$0xf]
  %v91 = vld [vmem:[%s1 + $0x30] sm:$0xf]
  %v92 = vld [vmem:[%s1 + $0x34] sm:$0xf]
  %v93 = vld [vmem:[%s1 + $0x38] sm:$0xf]
  %v94 = vld [vmem:[%s1 + $0x3c] sm:$0xf]
  %v95 = vld [vmem:[%s1 + $0x40] sm:$0xf]
  %v96 = vld [vmem:[%s1 + $0x44] sm:$0xf]
  %v97 = vld [vmem:[%s2] sm:$0x1]
  %v99 = vperm.slane %v97, 0
  %v165 = vunpack.c.l.b16 %v15
  %v166 = vunpack.c.h.b16 %v15
  %v167 = vunpack.c.l.b16 %v16
  %v168 = vunpack.c.h.b16 %v16
  %v169 = vunpack.c.l.b16 %v17
  %v170 = vunpack.c.h.b16 %v17
  %v171 = vunpack.c.l.b16 %v18
  %v172 = vunpack.c.h.b16 %v18
  %v173 = vunpack.c.l.b16 %v19
  %v174 = vunpack.c.h.b16 %v19
  %v175 = vunpack.c.l.b16 %v20
  %v176 = vunpack.c.h.b16 %v20
  %v177 = vunpack.c.l.b16 %v21
  %v178 = vunpack.c.h.b16 %v21
  %v179 = vunpack.c.l.b16 %v22
  %v180 = vunpack.c.h.b16 %v22
  %v181 = vunpack.c.l.b16 %v23
  %v182 = vunpack.c.h.b16 %v23
  %v183 = vunpack.c.l.b16 %v24
  %v184 = vunpack.c.h.b16 %v24
  %v185 = vunpack.c.l.b16 %v25
  %v186 = vunpack.c.h.b16 %v25
  %v187 = vunpack.c.l.b16 %v26
  %v188 = vunpack.c.h.b16 %v26
  %v189 = vunpack.c.l.b16 %v27
  %v190 = vunpack.c.h.b16 %v27
  %v191 = vunpack.c.l.b16 %v28
  %v192 = vunpack.c.h.b16 %v28
  %v193 = vunpack.c.l.b16 %v29
  %v194 = vunpack.c.h.b16 %v29
  %v195 = vunpack.c.l.b16 %v30
  %v196 = vunpack.c.h.b16 %v30
  %v197 = vunpack.c.l.b16 %v31
  %v198 = vunpack.c.h.b16 %v31
  %v199 = vunpack.c.l.b16 %v32
  %v200 = vunpack.c.h.b16 %v32
  %v201 = vunpack.c.l.b16 %v33
  %v202 = vunpack.c.h.b16 %v33
  %v203 = vunpack.c.l.b16 %v34
  %v204 = vunpack.c.h.b16 %v34
  %v205 = vunpack.c.l.b16 %v35
  %v206 = vunpack.c.h.b16 %v35
  %v207 = vunpack.c.l.b16 %v36
  %v208 = vunpack.c.h.b16 %v36
  %v209 = vunpack.c.l.b16 %v37
  %v210 = vunpack.c.h.b16 %v37
  %v211 = vunpack.c.l.b16 %v38
  %v212 = vunpack.c.h.b16 %v38
  %v213 = vunpack.c.l.b16 %v39
  %v214 = vunpack.c.h.b16 %v39
  %v215 = vunpack.c.l.b16 %v40
  %v216 = vunpack.c.h.b16 %v40
  %v217 = vunpack.c.l.b16 %v41
  %v218 = vunpack.c.h.b16 %v41
  %v219 = vunpack.c.l.b16 %v42
  %v220 = vunpack.c.h.b16 %v42
  %v221 = vunpack.c.l.b16 %v43
  %v222 = vunpack.c.h.b16 %v43
  %v223 = vunpack.c.l.b16 %v44
  %v224 = vunpack.c.h.b16 %v44
  %v225 = vunpack.c.l.b16 %v45
  %v226 = vunpack.c.h.b16 %v45
  %v227 = vunpack.c.l.b16 %v46
  %v228 = vunpack.c.h.b16 %v46
  %v229 = vunpack.c.l.b16 %v47
  %v230 = vunpack.c.h.b16 %v47
  %v231 = vunpack.c.l.b16 %v48
  %v232 = vunpack.c.h.b16 %v48
  %v233 = vunpack.c.l.b16 %v49
  %v234 = vunpack.c.h.b16 %v49
  %v235 = vunpack.c.l.b16 %v50
  %v236 = vunpack.c.h.b16 %v50
  %v237 = vunpack.c.l.b16 %v51
  %v238 = vunpack.c.h.b16 %v51
  %v239 = vunpack.c.l.b16 %v52
  %v240 = vunpack.c.h.b16 %v52
  %v241 = vunpack.c.l.b16 %v53
  %v242 = vunpack.c.h.b16 %v53
  %v243 = vunpack.c.l.b16 %v54
  %v244 = vunpack.c.h.b16 %v54
  %v245 = vunpack.c.l.b16 %v55
  %v246 = vunpack.c.h.b16 %v55
  %v247 = vunpack.c.l.b16 %v56
  %v248 = vunpack.c.h.b16 %v56
  %v249 = vunpack.c.l.b16 %v57
  %v250 = vunpack.c.h.b16 %v57
  %v251 = vunpack.c.l.b16 %v58
  %v252 = vunpack.c.h.b16 %v58
  %v253 = vunpack.c.l.b16 %v59
  %v254 = vunpack.c.h.b16 %v59
  %v255 = vunpack.c.l.b16 %v60
  %v256 = vunpack.c.h.b16 %v60
  %v257 = vunpack.c.l.b16 %v61
  %v258 = vunpack.c.h.b16 %v61
  %v259 = vunpack.c.l.b16 %v62
  %v260 = vunpack.c.h.b16 %v62
  %v261 = vunpack.c.l.b16 %v63
  %v262 = vunpack.c.h.b16 %v63
  %v263 = vunpack.c.l.b16 %v64
  %v264 = vunpack.c.h.b16 %v64
  %v265 = vunpack.c.l.b16 %v65
  %v266 = vunpack.c.h.b16 %v65
  %v267 = vunpack.c.l.b16 %v66
  %v268 = vunpack.c.h.b16 %v66
  %v269 = vunpack.c.l.b16 %v67
  %v270 = vunpack.c.h.b16 %v67
  %v271 = vunpack.c.l.b16 %v68
  %v272 = vunpack.c.h.b16 %v68
  %v273 = vunpack.c.l.b16 %v69
  %v274 = vunpack.c.h.b16 %v69
  %v275 = vunpack.c.l.b16 %v70
  %v276 = vunpack.c.h.b16 %v70
  %v277 = vunpack.c.l.b16 %v71
  %v278 = vunpack.c.h.b16 %v71
  %v279 = vunpack.c.l.b16 %v72
  %v280 = vunpack.c.h.b16 %v72
  %v281 = vunpack.c.l.b16 %v73
  %v282 = vunpack.c.h.b16 %v73
  %v283 = vunpack.c.l.b16 %v74
  %v284 = vunpack.c.h.b16 %v74
  %v285 = vunpack.c.l.b16 %v75
  %v286 = vunpack.c.h.b16 %v75
  %v287 = vunpack.c.l.b16 %v76
  %v288 = vunpack.c.h.b16 %v76
  %v289 = vunpack.c.l.b16 %v77
  %v290 = vunpack.c.h.b16 %v77
  %v291 = vunpack.c.l.b16 %v78
  %v292 = vunpack.c.h.b16 %v78
  %v293 = vpack.c.b16 %v167, %v165
  %v294 = vpack.c.b16 %v168, %v166
  %v295 = vpack.c.b16 %v171, %v169
  %v296 = vpack.c.b16 %v172, %v170
  %v297 = vpack.c.b16 %v175, %v173
  %v298 = vpack.c.b16 %v176, %v174
  %v299 = vpack.c.b16 %v179, %v177
  %v300 = vpack.c.b16 %v180, %v178
  %v301 = vpack.c.b16 %v183, %v181
  %v302 = vpack.c.b16 %v184, %v182
  %v303 = vpack.c.b16 %v187, %v185
  %v304 = vpack.c.b16 %v188, %v186
  %v305 = vpack.c.b16 %v191, %v189
  %v306 = vpack.c.b16 %v192, %v190
  %v307 = vpack.c.b16 %v195, %v193
  %v308 = vpack.c.b16 %v196, %v194
  %v309 = vpack.c.b16 %v199, %v197
  %v310 = vpack.c.b16 %v200, %v198
  %v311 = vpack.c.b16 %v203, %v201
  %v312 = vpack.c.b16 %v204, %v202
  %v313 = vpack.c.b16 %v207, %v205
  %v314 = vpack.c.b16 %v208, %v206
  %v315 = vpack.c.b16 %v211, %v209
  %v316 = vpack.c.b16 %v212, %v210
  %v317 = vpack.c.b16 %v215, %v213
  %v318 = vpack.c.b16 %v216, %v214
  %v319 = vpack.c.b16 %v219, %v217
  %v320 = vpack.c.b16 %v220, %v218
  %v321 = vpack.c.b16 %v223, %v221
  %v322 = vpack.c.b16 %v224, %v222
  %v323 = vpack.c.b16 %v227, %v225
  %v324 = vpack.c.b16 %v228, %v226
  %v325 = vpack.c.b16 %v231, %v229
  %v326 = vpack.c.b16 %v232, %v230
  %v327 = vpack.c.b16 %v235, %v233
  %v328 = vpack.c.b16 %v236, %v234
  %v329 = vpack.c.b16 %v239, %v237
  %v330 = vpack.c.b16 %v240, %v238
  %v331 = vpack.c.b16 %v243, %v241
  %v332 = vpack.c.b16 %v244, %v242
  %v333 = vpack.c.b16 %v247, %v245
  %v334 = vpack.c.b16 %v248, %v246
  %v335 = vpack.c.b16 %v251, %v249
  %v336 = vpack.c.b16 %v252, %v250
  %v337 = vpack.c.b16 %v255, %v253
  %v338 = vpack.c.b16 %v256, %v254
  %v339 = vpack.c.b16 %v259, %v257
  %v340 = vpack.c.b16 %v260, %v258
  %v341 = vpack.c.b16 %v263, %v261
  %v342 = vpack.c.b16 %v264, %v262
  %v343 = vpack.c.b16 %v267, %v265
  %v344 = vpack.c.b16 %v268, %v266
  %v345 = vpack.c.b16 %v271, %v269
  %v346 = vpack.c.b16 %v272, %v270
  %v347 = vpack.c.b16 %v275, %v273
  %v348 = vpack.c.b16 %v276, %v274
  %v349 = vpack.c.b16 %v279, %v277
  %v350 = vpack.c.b16 %v280, %v278
  %v351 = vpack.c.b16 %v283, %v281
  %v352 = vpack.c.b16 %v284, %v282
  %v353 = vpack.c.b16 %v287, %v285
  %v354 = vpack.c.b16 %v288, %v286
  %v355 = vpack.c.b16 %v291, %v289
  %v356 = vpack.c.b16 %v292, %v290
  %v407 = vunpack.c.l.b16 %v79
  %v408 = vunpack.c.l.b16 %v80
  %v409 = vunpack.c.l.b16 %v81
  %v410 = vunpack.c.l.b16 %v82
  %v411 = vunpack.c.l.b16 %v83
  %v412 = vunpack.c.l.b16 %v84
  %v413 = vunpack.c.l.b16 %v85
  %v414 = vunpack.c.l.b16 %v86
  %v415 = vunpack.c.l.b16 %v87
  %v416 = vunpack.c.l.b16 %v88
  %v417 = vunpack.c.l.b16 %v89
  %v418 = vunpack.c.l.b16 %v90
  %v419 = vunpack.c.l.b16 %v91
  %v420 = vunpack.c.l.b16 %v92
  %v421 = vunpack.c.l.b16 %v93
  %v422 = vunpack.c.l.b16 %v94
  %v423 = vunpack.c.l.b16 %v95
  %v424 = vunpack.c.l.b16 %v96
  %v425 = vpack.c.b16 %v408, %v407
  %v426 = vpack.c.b16 %v410, %v409
  %v427 = vpack.c.b16 %v412, %v411
  %v428 = vpack.c.b16 %v414, %v413
  %v429 = vpack.c.b16 %v416, %v415
  %v430 = vpack.c.b16 %v418, %v417
  %v431 = vpack.c.b16 %v420, %v419
  %v432 = vpack.c.b16 %v422, %v421
  %v433 = vpack.c.b16 %v424, %v423
  %vm443 = vcmask 130048
  %v445 = vsel %vm443, %v294, 0
  %v448 = vsel %vm443, %v296, 0
  %v451 = vsel %vm443, %v298, 0
  %v454 = vsel %vm443, %v300, 0
  %v457 = vsel %vm443, %v302, 0
  %v460 = vsel %vm443, %v304, 0
  %v463 = vsel %vm443, %v306, 0
  %v466 = vsel %vm443, %v308, 0
  %v469 = vsel %vm443, %v310, 0
  %v472 = vsel %vm443, %v312, 0
  %v475 = vsel %vm443, %v314, 0
  %v478 = vsel %vm443, %v316, 0
  %v481 = vsel %vm443, %v318, 0
  %v484 = vsel %vm443, %v320, 0
  %v487 = vsel %vm443, %v322, 0
  %v490 = vsel %vm443, %v324, 0
  %v493 = vsel %vm443, %v326, 0
  %v496 = vsel %vm443, %v328, 0
  %v499 = vsel %vm443, %v330, 0
  %v502 = vsel %vm443, %v332, 0
  %v505 = vsel %vm443, %v334, 0
  %v508 = vsel %vm443, %v336, 0
  %v511 = vsel %vm443, %v338, 0
  %v514 = vsel %vm443, %v340, 0
  %v517 = vsel %vm443, %v342, 0
  %v520 = vsel %vm443, %v344, 0
  %v523 = vsel %vm443, %v346, 0
  %v526 = vsel %vm443, %v348, 0
  %v529 = vsel %vm443, %v350, 0
  %v532 = vsel %vm443, %v352, 0
  %v535 = vsel %vm443, %v354, 0
  %v538 = vsel %vm443, %v356, 0
  %540 = vmatpush.bf16.msra.mxu0 %v432
  %541 = vmatpush.bf16.msra.mxu0 %v431
  %542 = vmatpush.bf16.msra.mxu0 %v430
  %543 = vmatpush.bf16.msra.mxu0 %v429
  %544 = vmatpush.bf16.msra.mxu0 %v428
  %545 = vmatpush.bf16.msra.mxu0 %v427
  %546 = vmatpush.bf16.msra.mxu0 %v426
  %547 = vmatpush.bf16.msra.mxu0 %v425
  %548 = vmatmul.bf16.gmra.mxu0 %v293
  %v549 = vpop.f32.mrf.mxu0
  %v550 = vadd.f32 %v99, %v549
  %v551 = vpop.f32.mrf.mxu0
  %v552 = vadd.f32 %v99, %v551
  %553 = vmatmul.bf16.gmra.mxu0 %v295
  %v554 = vpop.f32.mrf.mxu0
  %v555 = vadd.f32 %v99, %v554
  %v556 = vpop.f32.mrf.mxu0
  %v557 = vadd.f32 %v99, %v556
  %558 = vmatmul.bf16.gmra.mxu0 %v297
  %v559 = vpop.f32.mrf.mxu0
  %v560 = vadd.f32 %v99, %v559
  %v561 = vpop.f32.mrf.mxu0
  %v562 = vadd.f32 %v99, %v561
  %563 = vmatmul.bf16.gmra.mxu0 %v299
  %v564 = vpop.f32.mrf.mxu0
  %v565 = vadd.f32 %v99, %v564
  %v566 = vpop.f32.mrf.mxu0
  %v567 = vadd.f32 %v99, %v566
  %568 = vmatmul.bf16.gmra.mxu0 %v301
  %v569 = vpop.f32.mrf.mxu0
  %v570 = vadd.f32 %v99, %v569
  %v571 = vpop.f32.mrf.mxu0
  %v572 = vadd.f32 %v99, %v571
  %573 = vmatmul.bf16.gmra.mxu0 %v303
  %v574 = vpop.f32.mrf.mxu0
  %v575 = vadd.f32 %v99, %v574
  %v576 = vpop.f32.mrf.mxu0
  %v577 = vadd.f32 %v99, %v576
  %578 = vmatmul.bf16.gmra.mxu0 %v305
  %v579 = vpop.f32.mrf.mxu0
  %v580 = vadd.f32 %v99, %v579
  %v581 = vpop.f32.mrf.mxu0
  %v582 = vadd.f32 %v99, %v581
  %583 = vmatmul.bf16.gmra.mxu0 %v307
  %v584 = vpop.f32.mrf.mxu0
  %v585 = vadd.f32 %v99, %v584
  %v586 = vpop.f32.mrf.mxu0
  %v587 = vadd.f32 %v99, %v586
  %588 = vmatmul.bf16.gmra.mxu0 %v309
  %v589 = vpop.f32.mrf.mxu0
  %v590 = vadd.f32 %v99, %v589
  %v591 = vpop.f32.mrf.mxu0
  %v592 = vadd.f32 %v99, %v591
  %593 = vmatmul.bf16.gmra.mxu0 %v311
  %v594 = vpop.f32.mrf.mxu0
  %v595 = vadd.f32 %v99, %v594
  %v596 = vpop.f32.mrf.mxu0
  %v597 = vadd.f32 %v99, %v596
  %598 = vmatmul.bf16.gmra.mxu0 %v313
  %v599 = vpop.f32.mrf.mxu0
  %v600 = vadd.f32 %v99, %v599
  %v601 = vpop.f32.mrf.mxu0
  %v602 = vadd.f32 %v99, %v601
  %603 = vmatmul.bf16.gmra.mxu0 %v315
  %v604 = vpop.f32.mrf.mxu0
  %v605 = vadd.f32 %v99, %v604
  %v606 = vpop.f32.mrf.mxu0
  %v607 = vadd.f32 %v99, %v606
  %608 = vmatmul.bf16.gmra.mxu0 %v317
  %v609 = vpop.f32.mrf.mxu0
  %v610 = vadd.f32 %v99, %v609
  %v611 = vpop.f32.mrf.mxu0
  %v612 = vadd.f32 %v99, %v611
  %613 = vmatmul.bf16.gmra.mxu0 %v319
  %v614 = vpop.f32.mrf.mxu0
  %v615 = vadd.f32 %v99, %v614
  %v616 = vpop.f32.mrf.mxu0
  %v617 = vadd.f32 %v99, %v616
  %618 = vmatmul.bf16.gmra.mxu0 %v321
  %v619 = vpop.f32.mrf.mxu0
  %v620 = vadd.f32 %v99, %v619
  %v621 = vpop.f32.mrf.mxu0
  %v622 = vadd.f32 %v99, %v621
  %623 = vmatmul.bf16.gmra.mxu0 %v323
  %v624 = vpop.f32.mrf.mxu0
  %v625 = vadd.f32 %v99, %v624
  %v626 = vpop.f32.mrf.mxu0
  %v627 = vadd.f32 %v99, %v626
  %628 = vmatmul.bf16.gmra.mxu0 %v325
  %v629 = vpop.f32.mrf.mxu0
  %v630 = vadd.f32 %v99, %v629
  %v631 = vpop.f32.mrf.mxu0
  %v632 = vadd.f32 %v99, %v631
  %633 = vmatmul.bf16.gmra.mxu0 %v327
  %v634 = vpop.f32.mrf.mxu0
  %v635 = vadd.f32 %v99, %v634
  %v636 = vpop.f32.mrf.mxu0
  %v637 = vadd.f32 %v99, %v636
  %638 = vmatmul.bf16.gmra.mxu0 %v329
  %v639 = vpop.f32.mrf.mxu0
  %v640 = vadd.f32 %v99, %v639
  %v641 = vpop.f32.mrf.mxu0
  %v642 = vadd.f32 %v99, %v641
  %643 = vmatmul.bf16.gmra.mxu0 %v331
  %v644 = vpop.f32.mrf.mxu0
  %v645 = vadd.f32 %v99, %v644
  %v646 = vpop.f32.mrf.mxu0
  %v647 = vadd.f32 %v99, %v646
  %648 = vmatmul.bf16.gmra.mxu0 %v333
  %v649 = vpop.f32.mrf.mxu0
  %v650 = vadd.f32 %v99, %v649
  %v651 = vpop.f32.mrf.mxu0
  %v652 = vadd.f32 %v99, %v651
  %653 = vmatmul.bf16.gmra.mxu0 %v335
  %v654 = vpop.f32.mrf.mxu0
  %v655 = vadd.f32 %v99, %v654
  %v656 = vpop.f32.mrf.mxu0
  %v657 = vadd.f32 %v99, %v656
  %658 = vmatmul.bf16.gmra.mxu0 %v337
  %v659 = vpop.f32.mrf.mxu0
  %v660 = vadd.f32 %v99, %v659
  %v661 = vpop.f32.mrf.mxu0
  %v662 = vadd.f32 %v99, %v661
  %663 = vmatmul.bf16.gmra.mxu0 %v339
  %v664 = vpop.f32.mrf.mxu0
  %v665 = vadd.f32 %v99, %v664
  %v666 = vpop.f32.mrf.mxu0
  %v667 = vadd.f32 %v99, %v666
  %668 = vmatmul.bf16.gmra.mxu0 %v341
  %v669 = vpop.f32.mrf.mxu0
  %v670 = vadd.f32 %v99, %v669
  %v671 = vpop.f32.mrf.mxu0
  %v672 = vadd.f32 %v99, %v671
  %673 = vmatmul.bf16.gmra.mxu0 %v343
  %v674 = vpop.f32.mrf.mxu0
  %v675 = vadd.f32 %v99, %v674
  %v676 = vpop.f32.mrf.mxu0
  %v677 = vadd.f32 %v99, %v676
  %678 = vmatmul.bf16.gmra.mxu0 %v345
  %v679 = vpop.f32.mrf.mxu0
  %v680 = vadd.f32 %v99, %v679
  %v681 = vpop.f32.mrf.mxu0
  %v682 = vadd.f32 %v99, %v681
  %683 = vmatmul.bf16.gmra.mxu0 %v347
  %v684 = vpop.f32.mrf.mxu0
  %v685 = vadd.f32 %v99, %v684
  %v686 = vpop.f32.mrf.mxu0
  %v687 = vadd.f32 %v99, %v686
  %688 = vmatmul.bf16.gmra.mxu0 %v349
  %v689 = vpop.f32.mrf.mxu0
  %v690 = vadd.f32 %v99, %v689
  %v691 = vpop.f32.mrf.mxu0
  %v692 = vadd.f32 %v99, %v691
  %693 = vmatmul.bf16.gmra.mxu0 %v351
  %v694 = vpop.f32.mrf.mxu0
  %v695 = vadd.f32 %v99, %v694
  %v696 = vpop.f32.mrf.mxu0
  %v697 = vadd.f32 %v99, %v696
  %698 = vmatmul.bf16.gmra.mxu0 %v353
  %v699 = vpop.f32.mrf.mxu0
  %v700 = vadd.f32 %v99, %v699
  %v701 = vpop.f32.mrf.mxu0
  %v702 = vadd.f32 %v99, %v701
  %703 = vmatmul.bf16.gmra.mxu0 %v355
  %v704 = vpop.f32.mrf.mxu0
  %v705 = vadd.f32 %v99, %v704
  %v706 = vpop.f32.mrf.mxu0
  %v707 = vadd.f32 %v99, %v706
  %708 = vdwg.mxu0
  %709 = vmatpush.bf16.msra.mxu0 0
  %710 = vmatpush.bf16.msra.mxu0 0
  %711 = vmatpush.bf16.msra.mxu0 0
  %712 = vmatpush.bf16.msra.mxu0 0
  %713 = vmatpush.bf16.msra.mxu0 0
  %714 = vmatpush.bf16.msra.mxu0 0
  %715 = vmatpush.bf16.msra.mxu0 0
  %716 = vmatpush.bf16.msra.mxu0 %v433
  %717 = vmatmul.bf16.gmra.mxu0 %v445
  %v718 = vpop.f32.mrf.mxu0
  %v719 = vadd.f32 %v550, %v718
  %v720 = vpop.f32.mrf.mxu0
  %v721 = vadd.f32 %v552, %v720
  %722 = vmatmul.bf16.gmra.mxu0 %v448
  %v723 = vpop.f32.mrf.mxu0
  %v724 = vadd.f32 %v555, %v723
  %v725 = vpop.f32.mrf.mxu0
  %v726 = vadd.f32 %v557, %v725
  %727 = vmatmul.bf16.gmra.mxu0 %v451
  %v728 = vpop.f32.mrf.mxu0
  %v729 = vadd.f32 %v560, %v728
  %v730 = vpop.f32.mrf.mxu0
  %v731 = vadd.f32 %v562, %v730
  %732 = vmatmul.bf16.gmra.mxu0 %v454
  %v733 = vpop.f32.mrf.mxu0
  %v734 = vadd.f32 %v565, %v733
  %v735 = vpop.f32.mrf.mxu0
  %v736 = vadd.f32 %v567, %v735
  %737 = vmatmul.bf16.gmra.mxu0 %v457
  %v738 = vpop.f32.mrf.mxu0
  %v739 = vadd.f32 %v570, %v738
  %v740 = vpop.f32.mrf.mxu0
  %v741 = vadd.f32 %v572, %v740
  %742 = vmatmul.bf16.gmra.mxu0 %v460
  %v743 = vpop.f32.mrf.mxu0
  %v744 = vadd.f32 %v575, %v743
  %v745 = vpop.f32.mrf.mxu0
  %v746 = vadd.f32 %v577, %v745
  %747 = vmatmul.bf16.gmra.mxu0 %v463
  %v748 = vpop.f32.mrf.mxu0
  %v749 = vadd.f32 %v580, %v748
  %v750 = vpop.f32.mrf.mxu0
  %v751 = vadd.f32 %v582, %v750
  %752 = vmatmul.bf16.gmra.mxu0 %v466
  %v753 = vpop.f32.mrf.mxu0
  %v754 = vadd.f32 %v585, %v753
  %v755 = vpop.f32.mrf.mxu0
  %v756 = vadd.f32 %v587, %v755
  %757 = vmatmul.bf16.gmra.mxu0 %v469
  %v758 = vpop.f32.mrf.mxu0
  %v759 = vadd.f32 %v590, %v758
  %v760 = vpop.f32.mrf.mxu0
  %v761 = vadd.f32 %v592, %v760
  %762 = vmatmul.bf16.gmra.mxu0 %v472
  %v763 = vpop.f32.mrf.mxu0
  %v764 = vadd.f32 %v595, %v763
  %v765 = vpop.f32.mrf.mxu0
  %v766 = vadd.f32 %v597, %v765
  %767 = vmatmul.bf16.gmra.mxu0 %v475
  %v768 = vpop.f32.mrf.mxu0
  %v769 = vadd.f32 %v600, %v768
  %v770 = vpop.f32.mrf.mxu0
  %v771 = vadd.f32 %v602, %v770
  %772 = vmatmul.bf16.gmra.mxu0 %v478
  %v773 = vpop.f32.mrf.mxu0
  %v774 = vadd.f32 %v605, %v773
  %v775 = vpop.f32.mrf.mxu0
  %v776 = vadd.f32 %v607, %v775
  %777 = vmatmul.bf16.gmra.mxu0 %v481
  %v778 = vpop.f32.mrf.mxu0
  %v779 = vadd.f32 %v610, %v778
  %v780 = vpop.f32.mrf.mxu0
  %v781 = vadd.f32 %v612, %v780
  %782 = vmatmul.bf16.gmra.mxu0 %v484
  %v783 = vpop.f32.mrf.mxu0
  %v784 = vadd.f32 %v615, %v783
  %v785 = vpop.f32.mrf.mxu0
  %v786 = vadd.f32 %v617, %v785
  %787 = vmatmul.bf16.gmra.mxu0 %v487
  %v788 = vpop.f32.mrf.mxu0
  %v789 = vadd.f32 %v620, %v788
  %v790 = vpop.f32.mrf.mxu0
  %v791 = vadd.f32 %v622, %v790
  %792 = vmatmul.bf16.gmra.mxu0 %v490
  %v793 = vpop.f32.mrf.mxu0
  %v794 = vadd.f32 %v625, %v793
  %v795 = vpop.f32.mrf.mxu0
  %v796 = vadd.f32 %v627, %v795
  %797 = vmatmul.bf16.gmra.mxu0 %v493
  %v798 = vpop.f32.mrf.mxu0
  %v799 = vadd.f32 %v630, %v798
  %v800 = vpop.f32.mrf.mxu0
  %v801 = vadd.f32 %v632, %v800
  %802 = vmatmul.bf16.gmra.mxu0 %v496
  %v803 = vpop.f32.mrf.mxu0
  %v804 = vadd.f32 %v635, %v803
  %v805 = vpop.f32.mrf.mxu0
  %v806 = vadd.f32 %v637, %v805
  %807 = vmatmul.bf16.gmra.mxu0 %v499
  %v808 = vpop.f32.mrf.mxu0
  %v809 = vadd.f32 %v640, %v808
  %v810 = vpop.f32.mrf.mxu0
  %v811 = vadd.f32 %v642, %v810
  %812 = vmatmul.bf16.gmra.mxu0 %v502
  %v813 = vpop.f32.mrf.mxu0
  %v814 = vadd.f32 %v645, %v813
  %v815 = vpop.f32.mrf.mxu0
  %v816 = vadd.f32 %v647, %v815
  %817 = vmatmul.bf16.gmra.mxu0 %v505
  %v818 = vpop.f32.mrf.mxu0
  %v819 = vadd.f32 %v650, %v818
  %v820 = vpop.f32.mrf.mxu0
  %v821 = vadd.f32 %v652, %v820
  %822 = vmatmul.bf16.gmra.mxu0 %v508
  %v823 = vpop.f32.mrf.mxu0
  %v824 = vadd.f32 %v655, %v823
  %v825 = vpop.f32.mrf.mxu0
  %v826 = vadd.f32 %v657, %v825
  %827 = vmatmul.bf16.gmra.mxu0 %v511
  %v828 = vpop.f32.mrf.mxu0
  %v829 = vadd.f32 %v660, %v828
  %v830 = vpop.f32.mrf.mxu0
  %v831 = vadd.f32 %v662, %v830
  %832 = vmatmul.bf16.gmra.mxu0 %v514
  %v833 = vpop.f32.mrf.mxu0
  %v834 = vadd.f32 %v665, %v833
  %v835 = vpop.f32.mrf.mxu0
  %v836 = vadd.f32 %v667, %v835
  %837 = vmatmul.bf16.gmra.mxu0 %v517
  %v838 = vpop.f32.mrf.mxu0
  %v839 = vadd.f32 %v670, %v838
  %v840 = vpop.f32.mrf.mxu0
  %v841 = vadd.f32 %v672, %v840
  %842 = vmatmul.bf16.gmra.mxu0 %v520
  %v843 = vpop.f32.mrf.mxu0
  %v844 = vadd.f32 %v675, %v843
  %v845 = vpop.f32.mrf.mxu0
  %v846 = vadd.f32 %v677, %v845
  %847 = vmatmul.bf16.gmra.mxu0 %v523
  %v848 = vpop.f32.mrf.mxu0
  %v849 = vadd.f32 %v680, %v848
  %v850 = vpop.f32.mrf.mxu0
  %v851 = vadd.f32 %v682, %v850
  %852 = vmatmul.bf16.gmra.mxu0 %v526
  %v853 = vpop.f32.mrf.mxu0
  %v854 = vadd.f32 %v685, %v853
  %v855 = vpop.f32.mrf.mxu0
  %v856 = vadd.f32 %v687, %v855
  %857 = vmatmul.bf16.gmra.mxu0 %v529
  %v858 = vpop.f32.mrf.mxu0
  %v859 = vadd.f32 %v690, %v858
  %v860 = vpop.f32.mrf.mxu0
  %v861 = vadd.f32 %v692, %v860
  %862 = vmatmul.bf16.gmra.mxu0 %v532
  %v863 = vpop.f32.mrf.mxu0
  %v864 = vadd.f32 %v695, %v863
  %v865 = vpop.f32.mrf.mxu0
  %v866 = vadd.f32 %v697, %v865
  %867 = vmatmul.bf16.gmra.mxu0 %v535
  %v868 = vpop.f32.mrf.mxu0
  %v869 = vadd.f32 %v700, %v868
  %v870 = vpop.f32.mrf.mxu0
  %v871 = vadd.f32 %v702, %v870
  %872 = vmatmul.bf16.gmra.mxu0 %v538
  %v873 = vpop.f32.mrf.mxu0
  %v874 = vadd.f32 %v705, %v873
  %v875 = vpop.f32.mrf.mxu0
  %v876 = vadd.f32 %v707, %v875
  %877 = vdwg.mxu0
  %v878 = vmax.f32 %v719, 0.0
  %v879 = vmax.f32 %v721, 0.0
  %v880 = vmax.f32 %v724, 0.0
  %v881 = vmax.f32 %v726, 0.0
  %v882 = vmax.f32 %v729, 0.0
  %v883 = vmax.f32 %v731, 0.0
  %v884 = vmax.f32 %v734, 0.0
  %v885 = vmax.f32 %v736, 0.0
  %v886 = vmax.f32 %v739, 0.0
  %v887 = vmax.f32 %v741, 0.0
  %v888 = vmax.f32 %v744, 0.0
  %v889 = vmax.f32 %v746, 0.0
  %v890 = vmax.f32 %v749, 0.0
  %v891 = vmax.f32 %v751, 0.0
  %v892 = vmax.f32 %v754, 0.0
  %v893 = vmax.f32 %v756, 0.0
  %v894 = vmax.f32 %v759, 0.0
  %v895 = vmax.f32 %v761, 0.0
  %v896 = vmax.f32 %v764, 0.0
  %v897 = vmax.f32 %v766, 0.0
  %v898 = vmax.f32 %v769, 0.0
  %v899 = vmax.f32 %v771, 0.0
  %v900 = vmax.f32 %v774, 0.0
  %v901 = vmax.f32 %v776, 0.0
  %v902 = vmax.f32 %v779, 0.0
  %v903 = vmax.f32 %v781, 0.0
  %v904 = vmax.f32 %v784, 0.0
  %v905 = vmax.f32 %v786, 0.0
  %v906 = vmax.f32 %v789, 0.0
  %v907 = vmax.f32 %v791, 0.0
  %v908 = vmax.f32 %v794, 0.0
  %v909 = vmax.f32 %v796, 0.0
  %v910 = vmax.f32 %v799, 0.0
  %v911 = vmax.f32 %v801, 0.0
  %v912 = vmax.f32 %v804, 0.0
  %v913 = vmax.f32 %v806, 0.0
  %v914 = vmax.f32 %v809, 0.0
  %v915 = vmax.f32 %v811, 0.0
  %v916 = vmax.f32 %v814, 0.0
  %v917 = vmax.f32 %v816, 0.0
  %v918 = vmax.f32 %v819, 0.0
  %v919 = vmax.f32 %v821, 0.0
  %v920 = vmax.f32 %v824, 0.0
  %v921 = vmax.f32 %v826, 0.0
  %v922 = vmax.f32 %v829, 0.0
  %v923 = vmax.f32 %v831, 0.0
  %v924 = vmax.f32 %v834, 0.0
  %v925 = vmax.f32 %v836, 0.0
  %v926 = vmax.f32 %v839, 0.0
  %v927 = vmax.f32 %v841, 0.0
  %v928 = vmax.f32 %v844, 0.0
  %v929 = vmax.f32 %v846, 0.0
  %v930 = vmax.f32 %v849, 0.0
  %v931 = vmax.f32 %v851, 0.0
  %v932 = vmax.f32 %v854, 0.0
  %v933 = vmax.f32 %v856, 0.0
  %v934 = vmax.f32 %v859, 0.0
  %v935 = vmax.f32 %v861, 0.0
  %v936 = vmax.f32 %v864, 0.0
  %v937 = vmax.f32 %v866, 0.0
  %v938 = vmax.f32 %v869, 0.0
  %v939 = vmax.f32 %v871, 0.0
  %v940 = vmax.f32 %v874, 0.0
  %v941 = vmax.f32 %v876, 0.0
  %v942 = vpack.c.bf16 %v878, %v878
  %v943 = vpack.c.bf16 %v879, %v879
  %v944 = vpack.c.bf16 %v880, %v880
  %v945 = vpack.c.bf16 %v881, %v881
  %v946 = vpack.c.bf16 %v882, %v882
  %v947 = vpack.c.bf16 %v883, %v883
  %v948 = vpack.c.bf16 %v884, %v884
  %v949 = vpack.c.bf16 %v885, %v885
  %v950 = vpack.c.bf16 %v886, %v886
  %v951 = vpack.c.bf16 %v887, %v887
  %v952 = vpack.c.bf16 %v888, %v888
  %v953 = vpack.c.bf16 %v889, %v889
  %v954 = vpack.c.bf16 %v890, %v890
  %v955 = vpack.c.bf16 %v891, %v891
  %v956 = vpack.c.bf16 %v892, %v892
  %v957 = vpack.c.bf16 %v893, %v893
  %v958 = vpack.c.bf16 %v894, %v894
  %v959 = vpack.c.bf16 %v895, %v895
  %v960 = vpack.c.bf16 %v896, %v896
  %v961 = vpack.c.bf16 %v897, %v897
  %v962 = vpack.c.bf16 %v898, %v898
  %v963 = vpack.c.bf16 %v899, %v899
  %v964 = vpack.c.bf16 %v900, %v900
  %v965 = vpack.c.bf16 %v901, %v901
  %v966 = vpack.c.bf16 %v902, %v902
  %v967 = vpack.c.bf16 %v903, %v903
  %v968 = vpack.c.bf16 %v904, %v904
  %v969 = vpack.c.bf16 %v905, %v905
  %v970 = vpack.c.bf16 %v906, %v906
  %v971 = vpack.c.bf16 %v907, %v907
  %v972 = vpack.c.bf16 %v908, %v908
  %v973 = vpack.c.bf16 %v909, %v909
  %v974 = vpack.c.bf16 %v910, %v910
  %v975 = vpack.c.bf16 %v911, %v911
  %v976 = vpack.c.bf16 %v912, %v912
  %v977 = vpack.c.bf16 %v913, %v913
  %v978 = vpack.c.bf16 %v914, %v914
  %v979 = vpack.c.bf16 %v915, %v915
  %v980 = vpack.c.bf16 %v916, %v916
  %v981 = vpack.c.bf16 %v917, %v917
  %v982 = vpack.c.bf16 %v918, %v918
  %v983 = vpack.c.bf16 %v919, %v919
  %v984 = vpack.c.bf16 %v920, %v920
  %v985 = vpack.c.bf16 %v921, %v921
  %v986 = vpack.c.bf16 %v922, %v922
  %v987 = vpack.c.bf16 %v923, %v923
  %v988 = vpack.c.bf16 %v924, %v924
  %v989 = vpack.c.bf16 %v925, %v925
  %v990 = vpack.c.bf16 %v926, %v926
  %v991 = vpack.c.bf16 %v927, %v927
  %v992 = vpack.c.bf16 %v928, %v928
  %v993 = vpack.c.bf16 %v929, %v929
  %v994 = vpack.c.bf16 %v930, %v930
  %v995 = vpack.c.bf16 %v931, %v931
  %v996 = vpack.c.bf16 %v932, %v932
  %v997 = vpack.c.bf16 %v933, %v933
  %v998 = vpack.c.bf16 %v934, %v934
  %v999 = vpack.c.bf16 %v935, %v935
  %v1000 = vpack.c.bf16 %v936, %v936
  %v1001 = vpack.c.bf16 %v937, %v937
  %v1002 = vpack.c.bf16 %v938, %v938
  %v1003 = vpack.c.bf16 %v939, %v939
  %v1004 = vpack.c.bf16 %v940, %v940
  %v1005 = vpack.c.bf16 %v941, %v941
  %vm1006 = vcmask 257024
  %1007 = vst.msk [vmem:[%s3] sm:$0xf] %vm1006, %v942
  %1008 = vst.msk [vmem:[%s3 + $0x4] sm:$0xf] %vm1006, %v943
  %1009 = vst.msk [vmem:[%s3 + $0x8] sm:$0xf] %vm1006, %v944
  %1010 = vst.msk [vmem:[%s3 + $0xc] sm:$0xf] %vm1006, %v945
  %1011 = vst.msk [vmem:[%s3 + $0x10] sm:$0xf] %vm1006, %v946
  %1012 = vst.msk [vmem:[%s3 + $0x14] sm:$0xf] %vm1006, %v947
  %1013 = vst.msk [vmem:[%s3 + $0x18] sm:$0xf] %vm1006, %v948
  %1014 = vst.msk [vmem:[%s3 + $0x1c] sm:$0xf] %vm1006, %v949
  %1015 = vst.msk [vmem:[%s3 + $0x20] sm:$0xf] %vm1006, %v950
  %1016 = vst.msk [vmem:[%s3 + $0x24] sm:$0xf] %vm1006, %v951
  %1017 = vst.msk [vmem:[%s3 + $0x28] sm:$0xf] %vm1006, %v952
  %1018 = vst.msk [vmem:[%s3 + $0x2c] sm:$0xf] %vm1006, %v953
  %1019 = vst.msk [vmem:[%s3 + $0x30] sm:$0xf] %vm1006, %v954
  %1020 = vst.msk [vmem:[%s3 + $0x34] sm:$0xf] %vm1006, %v955
  %1021 = vst.msk [vmem:[%s3 + $0x38] sm:$0xf] %vm1006, %v956
  %1022 = vst.msk [vmem:[%s3 + $0x3c] sm:$0xf] %vm1006, %v957
  %1023 = vst.msk [vmem:[%s3 + $0x40] sm:$0xf] %vm1006, %v958
  %1024 = vst.msk [vmem:[%s3 + $0x44] sm:$0xf] %vm1006, %v959
  %1025 = vst.msk [vmem:[%s3 + $0x48] sm:$0xf] %vm1006, %v960
  %1026 = vst.msk [vmem:[%s3 + $0x4c] sm:$0xf] %vm1006, %v961
  %1027 = vst.msk [vmem:[%s3 + $0x50] sm:$0xf] %vm1006, %v962
  %1028 = vst.msk [vmem:[%s3 + $0x54] sm:$0xf] %vm1006, %v963
  %1029 = vst.msk [vmem:[%s3 + $0x58] sm:$0xf] %vm1006, %v964
  %1030 = vst.msk [vmem:[%s3 + $0x5c] sm:$0xf] %vm1006, %v965
  %1031 = vst.msk [vmem:[%s3 + $0x60] sm:$0xf] %vm1006, %v966
  %1032 = vst.msk [vmem:[%s3 + $0x64] sm:$0xf] %vm1006, %v967
  %1033 = vst.msk [vmem:[%s3 + $0x68] sm:$0xf] %vm1006, %v968
  %1034 = vst.msk [vmem:[%s3 + $0x6c] sm:$0xf] %vm1006, %v969
  %1035 = vst.msk [vmem:[%s3 + $0x70] sm:$0xf] %vm1006, %v970
  %1036 = vst.msk [vmem:[%s3 + $0x74] sm:$0xf] %vm1006, %v971
  %1037 = vst.msk [vmem:[%s3 + $0x78] sm:$0xf] %vm1006, %v972
  %1038 = vst.msk [vmem:[%s3 + $0x7c] sm:$0xf] %vm1006, %v973
  %1039 = vst.msk [vmem:[%s3 + $0x80] sm:$0xf] %vm1006, %v974
  %1040 = vst.msk [vmem:[%s3 + $0x84] sm:$0xf] %vm1006, %v975
  %1041 = vst.msk [vmem:[%s3 + $0x88] sm:$0xf] %vm1006, %v976
  %1042 = vst.msk [vmem:[%s3 + $0x8c] sm:$0xf] %vm1006, %v977
  %1043 = vst.msk [vmem:[%s3 + $0x90] sm:$0xf] %vm1006, %v978
  %1044 = vst.msk [vmem:[%s3 + $0x94] sm:$0xf] %vm1006, %v979
  %1045 = vst.msk [vmem:[%s3 + $0x98] sm:$0xf] %vm1006, %v980
  %1046 = vst.msk [vmem:[%s3 + $0x9c] sm:$0xf] %vm1006, %v981
  %1047 = vst.msk [vmem:[%s3 + $0xa0] sm:$0xf] %vm1006, %v982
  %1048 = vst.msk [vmem:[%s3 + $0xa4] sm:$0xf] %vm1006, %v983
  %1049 = vst.msk [vmem:[%s3 + $0xa8] sm:$0xf] %vm1006, %v984
  %1050 = vst.msk [vmem:[%s3 + $0xac] sm:$0xf] %vm1006, %v985
  %1051 = vst.msk [vmem:[%s3 + $0xb0] sm:$0xf] %vm1006, %v986
  %1052 = vst.msk [vmem:[%s3 + $0xb4] sm:$0xf] %vm1006, %v987
  %1053 = vst.msk [vmem:[%s3 + $0xb8] sm:$0xf] %vm1006, %v988
  %1054 = vst.msk [vmem:[%s3 + $0xbc] sm:$0xf] %vm1006, %v989
  %1055 = vst.msk [vmem:[%s3 + $0xc0] sm:$0xf] %vm1006, %v990
  %1056 = vst.msk [vmem:[%s3 + $0xc4] sm:$0xf] %vm1006, %v991
  %1057 = vst.msk [vmem:[%s3 + $0xc8] sm:$0xf] %vm1006, %v992
  %1058 = vst.msk [vmem:[%s3 + $0xcc] sm:$0xf] %vm1006, %v993
  %1059 = vst.msk [vmem:[%s3 + $0xd0] sm:$0xf] %vm1006, %v994
  %1060 = vst.msk [vmem:[%s3 + $0xd4] sm:$0xf] %vm1006, %v995
  %1061 = vst.msk [vmem:[%s3 + $0xd8] sm:$0xf] %vm1006, %v996
  %1062 = vst.msk [vmem:[%s3 + $0xdc] sm:$0xf] %vm1006, %v997
  %1063 = vst.msk [vmem:[%s3 + $0xe0] sm:$0xf] %vm1006, %v998
  %1064 = vst.msk [vmem:[%s3 + $0xe4] sm:$0xf] %vm1006, %v999
  %1065 = vst.msk [vmem:[%s3 + $0xe8] sm:$0xf] %vm1006, %v1000
  %1066 = vst.msk [vmem:[%s3 + $0xec] sm:$0xf] %vm1006, %v1001
  %1067 = vst.msk [vmem:[%s3 + $0xf0] sm:$0xf] %vm1006, %v1002
  %1068 = vst.msk [vmem:[%s3 + $0xf4] sm:$0xf] %vm1006, %v1003
  %1069 = vst.msk [vmem:[%s3 + $0xf8] sm:$0xf] %vm1006, %v1004
  %1070 = vst.msk [vmem:[%s3 + $0xfc] sm:$0xf] %vm1006, %v1005
  // Predicated region
  $region14: #{residual_block_forward.4} parent=0 // pred_check
    _
  $region15: #{residual_block_forward.4} parent=0 // pred_check_branch
    %1072 = sbr.rel (0) target = $region17
  $region16: #{residual_block_forward.4} parent=0 // pred_region
    _
  $region17: #{residual_block_forward.4} parent=0 // pred_fallthru
    _
  // Predicated region
  $region18: #{residual_block_forward.4} parent=0 // pred_check
    _
  $region19: #{residual_block_forward.4} parent=0 // pred_check_branch
    %1074 = sbr.rel (0) target = $region21
  $region20: #{residual_block_forward.4} parent=0 // pred_region
    _
  $region21: #{residual_block_forward.4} parent=0 // pred_fallthru
    _

// kernel: residual_block_forward.5
$region0: #{residual_block_forward.5}
  #allocation0 [shape = 'u32[]', space=smem, size = 0x4, offset = 0x4, fixed_abs, tag = 'smem constant byte address 0x4 - core index']
  #allocation1 [shape = 'u32[72,128]{1,0:T(1,128)}', space=vmem, size = 0x9000, scoped, tag = 'internal scratch']
  %s0 = inlined_call_operand.vmem [shape: bf16[512,288], index: 0, kind: input, shape index: {}]
  %s1 = inlined_call_operand.vmem [shape: bf16[288,32], index: 1, kind: input, shape index: {}]
  %s2 = inlined_call_operand.vmem [shape: f32[1,32], index: 2, kind: input, shape index: {}]
  %s3 = inlined_call_operand.vmem [shape: bf16[512,32], index: 3, kind: input, shape index: {}]
  %s4 = inlined_call_operand.hbm [shape: f32[512,32], index: 4, kind: output, shape index: {}]
  %s5 = sld [smem:[#allocation0]]
  $region26: #{residual_block_forward.5} parent=0
    _
  %s7 = ssub.s32 1, %s5
  %s8 = scalar_select 0, %s7, %s5
  $region1: #{residual_block_forward.5} parent=0
    #allocation2 [shape = 'u8[262144]{0}', space=vmem, size = 0x40000, scoped, tag = 'output window, operand 0, single buffered']
    #allocation3 [shape = 's32[1]{0}', space=sflag, size = 0x4, scoped, tag = 'scoped memory for residual_block_forward.5']
    %9 = vsyncpa [#allocation3], 0
    // Predicated region
    $region2: #{residual_block_forward.5} parent=1 // pred_check
      _
    $region3: #{residual_block_forward.5} parent=1 // pred_check_branch
      %11 = sbr.rel (0) target = $region5
    $region4: #{residual_block_forward.5} parent=1 // pred_region
      _
    $region5: #{residual_block_forward.5} parent=1 // pred_fallthru
      _
    // Predicated region
    $region6: #{residual_block_forward.5} parent=1 // pred_check
      _
    $region7: #{residual_block_forward.5} parent=1 // pred_check_branch
      %13 = sbr.rel (0) target = $region9
    $region8: #{residual_block_forward.5} parent=1 // pred_region
      _
    $region9: #{residual_block_forward.5} parent=1 // pred_fallthru
      _
    // Predicated region
    $region10: #{residual_block_forward.5} parent=1 // pred_check
      _
    $region11: #{residual_block_forward.5} parent=1 // pred_check_branch
      %15 = sbr.rel (0) target = $region13
    $region12: #{residual_block_forward.5} parent=1 // pred_region
      _
    $region13: #{residual_block_forward.5} parent=1 // pred_fallthru
      _
    // Predicated region
    $region14: #{residual_block_forward.5} parent=1 // pred_check
      _
    $region15: #{residual_block_forward.5} parent=1 // pred_check_branch
      %17 = sbr.rel (0) target = $region17
    $region16: #{residual_block_forward.5} parent=1 // pred_region
      _
    $region17: #{residual_block_forward.5} parent=1 // pred_fallthru
      _
    %v19 = vld [vmem:[%s0] sm:$0xff]
    %v20 = vld [vmem:[%s0 + $0x8] sm:$0xf]
    %v21 = vld [vmem:[%s0 + $0xc] sm:$0xff]
    %v22 = vld [vmem:[%s0 + $0x14] sm:$0xf]
    %v23 = vld [vmem:[%s0 + $0x18] sm:$0xff]
    %v24 = vld [vmem:[%s0 + $0x20] sm:$0xf]
    %v25 = vld [vmem:[%s0 + $0x24] sm:$0xff]
    %v26 = vld [vmem:[%s0 + $0x2c] sm:$0xf]
    %v27 = vld [vmem:[%s0 + $0x30] sm:$0xff]
    %v28 = vld [vmem:[%s0 + $0x38] sm:$0xf]
    %v29 = vld [vmem:[%s0 + $0x3c] sm:$0xff]
    %v30 = vld [vmem:[%s0 + $0x44] sm:$0xf]
    %v31 = vld [vmem:[%s0 + $0x48] sm:$0xff]
    %v32 = vld [vmem:[%s0 + $0x50] sm:$0xf]
    %v33 = vld [vmem:[%s0 + $0x54] sm:$0xff]
    %v34 = vld [vmem:[%s0 + $0x5c] sm:$0xf]
    %v35 = vld [vmem:[%s0 + $0x60] sm:$0xff]
    %v36 = vld [vmem:[%s0 + $0x68] sm:$0xf]
    %v37 = vld [vmem:[%s0 + $0x6c] sm:$0xff]
    %v38 = vld [vmem:[%s0 + $0x74] sm:$0xf]
    %v39 = vld [vmem:[%s0 + $0x78] sm:$0xff]
    %v40 = vld [vmem:[%s0 + $0x80] sm:$0xf]
    %v41 = vld [vmem:[%s0 + $0x84] sm:$0xff]
    %v42 = vld [vmem:[%s0 + $0x8c] sm:$0xf]
    %v43 = vld [vmem:[%s0 + $0x90] sm:$0xff]
    %v44 = vld [vmem:[%s0 + $0x98] sm:$0xf]
    %v45 = vld [vmem:[%s0 + $0x9c] sm:$0xff]
    %v46 = vld [vmem:[%s0 + $0xa4] sm:$0xf]
    %v47 = vld [vmem:[%s0 + $0xa8] sm:$0xff]
    %v48 = vld [vmem:[%s0 + $0xb0] sm:$0xf]
    %v49 = vld [vmem:[%s0 + $0xb4] sm:$0xff]
    %v50 = vld [vmem:[%s0 + $0xbc] sm:$0xf]
    %v51 = vld [vmem:[%s0 + $0xc0] sm:$0xff]
    %v52 = vld [vmem:[%s0 + $0xc8] sm:$0xf]
    %v53 = vld [vmem:[%s0 + $0xcc] sm:$0xff]
    %v54 = vld [vmem:[%s0 + $0xd4] sm:$0xf]
    %v55 = vld [vmem:[%s0 + $0xd8] sm:$0xff]
    %v56 = vld [vmem:[%s0 + $0xe0] sm:$0xf]
    %v57 = vld [vmem:[%s0 + $0xe4] sm:$0xff]
    %v58 = vld [vmem:[%s0 + $0xec] sm:$0xf]
    %v59 = vld [vmem:[%s0 + $0xf0] sm:$0xff]
    %v60 = vld [vmem:[%s0 + $0xf8] sm:$0xf]
    %v61 = vld [vmem:[%s0 + $0xfc] sm:$0xff]
    %v62 = vld [vmem:[%s0 + $0x104] sm:$0xf]
    %v63 = vld [vmem:[%s0 + $0x108] sm:$0xff]
    %v64 = vld [vmem:[%s0 + $0x110] sm:$0xf]
    %v65 = vld [vmem:[%s0 + $0x114] sm:$0xff]
    %v66 = vld [vmem:[%s0 + $0x11c] sm:$0xf]
    %v67 = vld [vmem:[%s0 + $0x120] sm:$0xff]
    %v68 = vld [vmem:[%s0 + $0x128] sm:$0xf]
    %v69 = vld [vmem:[%s0 + $0x12c] sm:$0xff]
    %v70 = vld [vmem:[%s0 + $0x134] sm:$0xf]
    %v71 = vld [vmem:[%s0 + $0x138] sm:$0xff]
    %v72 = vld [vmem:[%s0 + $0x140] sm:$0xf]
    %v73 = vld [vmem:[%s0 + $0x144] sm:$0xff]
    %v74 = vld [vmem:[%s0 + $0x14c] sm:$0xf]
    %v75 = vld [vmem:[%s0 + $0x150] sm:$0xff]
    %v76 = vld [vmem:[%s0 + $0x158] sm:$0xf]
    %v77 = vld [vmem:[%s0 + $0x15c] sm:$0xff]
    %v78 = vld [vmem:[%s0 + $0x164] sm:$0xf]
    %v79 = vld [vmem:[%s0 + $0x168] sm:$0xff]
    %v80 = vld [vmem:[%s0 + $0x170] sm:$0xf]
    %v81 = vld [vmem:[%s0 + $0x174] sm:$0xff]
    %v82 = vld [vmem:[%s0 + $0x17c] sm:$0xf]
    %v83 = vld [vmem:[%s0 + $0x180] sm:$0xff]
    %v84 = vld [vmem:[%s0 + $0x188] sm:$0xf]
    %v85 = vld [vmem:[%s0 + $0x18c] sm:$0xff]
    %v86 = vld [vmem:[%s0 + $0x194] sm:$0xf]
    %v87 = vld [vmem:[%s0 + $0x198] sm:$0xff]
    %v88 = vld [vmem:[%s0 + $0x1a0] sm:$0xf]
    %v89 = vld [vmem:[%s0 + $0x1a4] sm:$0xff]
    %v90 = vld [vmem:[%s0 + $0x1ac] sm:$0xf]
    %v91 = vld [vmem:[%s0 + $0x1b0] sm:$0xff]
    %v92 = vld [vmem:[%s0 + $0x1b8] sm:$0xf]
    %v93 = vld [vmem:[%s0 + $0x1bc] sm:$0xff]
    %v94 = vld [vmem:[%s0 + $0x1c4] sm:$0xf]
    %v95 = vld [vmem:[%s0 + $0x1c8] sm:$0xff]
    %v96 = vld [vmem:[%s0 + $0x1d0] sm:$0xf]
    %v97 = vld [vmem:[%s0 + $0x1d4] sm:$0xff]
    %v98 = vld [vmem:[%s0 + $0x1dc] sm:$0xf]
    %v99 = vld [vmem:[%s0 + $0x1e0] sm:$0xff]
    %v100 = vld [vmem:[%s0 + $0x1e8] sm:$0xf]
    %v101 = vld [vmem:[%s0 + $0x1ec] sm:$0xff]
    %v102 = vld [vmem:[%s0 + $0x1f4] sm:$0xf]
    %v103 = vld [vmem:[%s0 + $0x1f8] sm:$0xff]
    %v104 = vld [vmem:[%s0 + $0x200] sm:$0xf]
    %v105 = vld [vmem:[%s0 + $0x204] sm:$0xff]
    %v106 = vld [vmem:[%s0 + $0x20c] sm:$0xf]
    %v107 = vld [vmem:[%s0 + $0x210] sm:$0xff]
    %v108 = vld [vmem:[%s0 + $0x218] sm:$0xf]
    %v109 = vld [vmem:[%s0 + $0x21c] sm:$0xff]
    %v110 = vld [vmem:[%s0 + $0x224] sm:$0xf]
    %v111 = vld [vmem:[%s0 + $0x228] sm:$0xff]
    %v112 = vld [vmem:[%s0 + $0x230] sm:$0xf]
    %v113 = vld [vmem:[%s0 + $0x234] sm:$0xff]
    %v114 = vld [vmem:[%s0 + $0x23c] sm:$0xf]
    %v115 = vld [vmem:[%s0 + $0x240] sm:$0xff]
    %v116 = vld [vmem:[%s0 + $0x248] sm:$0xf]
    %v117 = vld [vmem:[%s0 + $0x24c] sm:$0xff]
    %v118 = vld [vmem:[%s0 + $0x254] sm:$0xf]
    %v119 = vld [vmem:[%s0 + $0x258] sm:$0xff]
    %v120 = vld [vmem:[%s0 + $0x260] sm:$0xf]
    %v121 = vld [vmem:[%s0 + $0x264] sm:$0xff]
    %v122 = vld [vmem:[%s0 + $0x26c] sm:$0xf]
    %v123 = vld [vmem:[%s0 + $0x270] sm:$0xff]
    %v124 = vld [vmem:[%s0 + $0x278] sm:$0xf]
    %v125 = vld [vmem:[%s0 + $0x27c] sm:$0xff]
    %v126 = vld [vmem:[%s0 + $0x284] sm:$0xf]
    %v127 = vld [vmem:[%s0 + $0x288] sm:$0xff]
    %v128 = vld [vmem:[%s0 + $0x290] sm:$0xf]
    %v129 = vld [vmem:[%s0 + $0x294] sm:$0xff]
    %v130 = vld [vmem:[%s0 + $0x29c] sm:$0xf]
    %v131 = vld [vmem:[%s0 + $0x2a0] sm:$0xff]
    %v132 = vld [vmem:[%s0 + $0x2a8] sm:$0xf]
    %v133 = vld [vmem:[%s0 + $0x2ac] sm:$0xff]
    %v134 = vld [vmem:[%s0 + $0x2b4] sm:$0xf]
    %v135 = vld [vmem:[%s0 + $0x2b8] sm:$0xff]
    %v136 = vld [vmem:[%s0 + $0x2c0] sm:$0xf]
    %v137 = vld [vmem:[%s0 + $0x2c4] sm:$0xff]
    %v138 = vld [vmem:[%s0 + $0x2cc] sm:$0xf]
    %v139 = vld [vmem:[%s0 + $0x2d0] sm:$0xff]
    %v140 = vld [vmem:[%s0 + $0x2d8] sm:$0xf]
    %v141 = vld [vmem:[%s0 + $0x2dc] sm:$0xff]
    %v142 = vld [vmem:[%s0 + $0x2e4] sm:$0xf]
    %v143 = vld [vmem:[%s0 + $0x2e8] sm:$0xff]
    %v144 = vld [vmem:[%s0 + $0x2f0] sm:$0xf]
    %v145 = vld [vmem:[%s0 + $0x2f4] sm:$0xff]
    %v146 = vld [vmem:[%s0 + $0x2fc] sm:$0xf]
    %v147 = vld [vmem:[%s1] sm:$0xf]
    %v148 = vld [vmem:[%s1 + $0x4] sm:$0xf]
    %v149 = vld [vmem:[%s1 + $0x8] sm:$0xf]
    %v150 = vld [vmem:[%s1 + $0xc] sm:$0xf]
    %v151 = vld [vmem:[%s1 + $0x10] sm:$0xf]
    %v152 = vld [vmem:[%s1 + $0x14] sm:$0xf]
    %v153 = vld [vmem:[%s1 + $0x18] sm:$0xf]
    %v154 = vld [vmem:[%s1 + $0x1c] sm:$0xf]
    %v155 = vld [vmem:[%s1 + $0x20] sm:$0xf]
    %v156 = vld [vmem:[%s1 + $0x24] sm:$0xf]
    %v157 = vld [vmem:[%s1 + $0x28] sm:$0xf]
    %v158 = vld [vmem:[%s1 + $0x2c] sm:$0xf]
    %v159 = vld [vmem:[%s1 + $0x30] sm:$0xf]
    %v160 = vld [vmem:[%s1 + $0x34] sm:$0xf]
    %v161 = vld [vmem:[%s1 + $0x38] sm:$0xf]
    %v162 = vld [vmem:[%s1 + $0x3c] sm:$0xf]
    %v163 = vld [vmem:[%s1 + $0x40] sm:$0xf]
    %v164 = vld [vmem:[%s1 + $0x44] sm:$0xf]
    %v165 = vld [vmem:[%s1 + $0x48] sm:$0xf]
    %v166 = vld [vmem:[%s1 + $0x4c] sm:$0xf]
    %v167 = vld [vmem:[%s1 + $0x50] sm:$0xf]
    %v168 = vld [vmem:[%s1 + $0x54] sm:$0xf]
    %v169 = vld [vmem:[%s1 + $0x58] sm:$0xf]
    %v170 = vld [vmem:[%s1 + $0x5c] sm:$0xf]
    %v171 = vld [vmem:[%s1 + $0x60] sm:$0xf]
    %v172 = vld [vmem:[%s1 + $0x64] sm:$0xf]
    %v173 = vld [vmem:[%s1 + $0x68] sm:$0xf]
    %v174 = vld [vmem:[%s1 + $0x6c] sm:$0xf]
    %v175 = vld [vmem:[%s1 + $0x70] sm:$0xf]
    %v176 = vld [vmem:[%s1 + $0x74] sm:$0xf]
    %v177 = vld [vmem:[%s1 + $0x78] sm:$0xf]
    %v178 = vld [vmem:[%s1 + $0x7c] sm:$0xf]
    %v179 = vld [vmem:[%s1 + $0x80] sm:$0xf]
    %v180 = vld [vmem:[%s1 + $0x84] sm:$0xf]
    %v181 = vld [vmem:[%s1 + $0x88] sm:$0xf]
    %v182 = vld [vmem:[%s1 + $0x8c] sm:$0xf]
    %v183 = vld [vmem:[%s2] sm:$0x1]
    %v185 = vperm.slane %v183, 0
    %v315 = vunpack.c.l.b16 %v19
    %v316 = vunpack.c.h.b16 %v19
    %v317 = vunpack.c.l.b16 %v20
    %v318 = vunpack.c.l.b16 %v21
    %v319 = vunpack.c.h.b16 %v21
    %v320 = vunpack.c.l.b16 %v22
    %v321 = vunpack.c.l.b16 %v23
    %v322 = vunpack.c.h.b16 %v23
    %v323 = vunpack.c.l.b16 %v24
    %v324 = vunpack.c.l.b16 %v25
    %v325 = vunpack.c.h.b16 %v25
    %v326 = vunpack.c.l.b16 %v26
    %v327 = vunpack.c.l.b16 %v27
    %v328 = vunpack.c.h.b16 %v27
    %v329 = vunpack.c.l.b16 %v28
    %v330 = vunpack.c.l.b16 %v29
    %v331 = vunpack.c.h.b16 %v29
    %v332 = vunpack.c.l.b16 %v30
    %v333 = vunpack.c.l.b16 %v31
    %v334 = vunpack.c.h.b16 %v31
    %v335 = vunpack.c.l.b16 %v32
    %v336 = vunpack.c.l.b16 %v33
    %v337 = vunpack.c.h.b16 %v33
    %v338 = vunpack.c.l.b16 %v34
    %v339 = vunpack.c.l.b16 %v35
    %v340 = vunpack.c.h.b16 %v35
    %v341 = vunpack.c.l.b16 %v36
    %v342 = vunpack.c.l.b16 %v37
    %v343 = vunpack.c.h.b16 %v37
    %v344 = vunpack.c.l.b16 %v38
    %v345 = vunpack.c.l.b16 %v39
    %v346 = vunpack.c.h.b16 %v39
    %v347 = vunpack.c.l.b16 %v40
    %v348 = vunpack.c.l.b16 %v41
    %v349 = vunpack.c.h.b16 %v41
    %v350 = vunpack.c.l.b16 %v42
    %v351 = vunpack.c.l.b16 %v43
    %v352 = vunpack.c.h.b16 %v43
    %v353 = vunpack.c.l.b16 %v44
    %v354 = vunpack.c.l.b16 %v45
    %v355 = vunpack.c.h.b16 %v45
    %v356 = vunpack.c.l.b16 %v46
    %v357 = vunpack.c.l.b16 %v47
    %v358 = vunpack.c.h.b16 %v47
    %v359 = vunpack.c.l.b16 %v48
    %v360 = vunpack.c.l.b16 %v49
    %v361 = vunpack.c.h.b16 %v49
    %v362 = vunpack.c.l.b16 %v50
    %v363 = vunpack.c.l.b16 %v51
    %v364 = vunpack.c.h.b16 %v51
    %v365 = vunpack.c.l.b16 %v52
    %v366 = vunpack.c.l.b16 %v53
    %v367 = vunpack.c.h.b16 %v53
    %v368 = vunpack.c.l.b16 %v54
    %v369 = vunpack.c.l.b16 %v55
    %v370 = vunpack.c.h.b16 %v55
    %v371 = vunpack.c.l.b16 %v56
    %v372 = vunpack.c.l.b16 %v57
    %v373 = vunpack.c.h.b16 %v57
    %v374 = vunpack.c.l.b16 %v58
    %v375 = vunpack.c.l.b16 %v59
    %v376 = vunpack.c.h.b16 %v59
    %v377 = vunpack.c.l.b16 %v60
    %v378 = vunpack.c.l.b16 %v61
    %v379 = vunpack.c.h.b16 %v61
    %v380 = vunpack.c.l.b16 %v62
    %v381 = vunpack.c.l.b16 %v63
    %v382 = vunpack.c.h.b16 %v63
    %v383 = vunpack.c.l.b16 %v64
    %v384 = vunpack.c.l.b16 %v65
    %v385 = vunpack.c.h.b16 %v65
    %v386 = vunpack.c.l.b16 %v66
    %v387 = vunpack.c.l.b16 %v67
    %v388 = vunpack.c.h.b16 %v67
    %v389 = vunpack.c.l.b16 %v68
    %v390 = vunpack.c.l.b16 %v69
    %v391 = vunpack.c.h.b16 %v69
    %v392 = vunpack.c.l.b16 %v70
    %v393 = vunpack.c.l.b16 %v71
    %v394 = vunpack.c.h.b16 %v71
    %v395 = vunpack.c.l.b16 %v72
    %v396 = vunpack.c.l.b16 %v73
    %v397 = vunpack.c.h.b16 %v73
    %v398 = vunpack.c.l.b16 %v74
    %v399 = vunpack.c.l.b16 %v75
    %v400 = vunpack.c.h.b16 %v75
    %v401 = vunpack.c.l.b16 %v76
    %v402 = vunpack.c.l.b16 %v77
    %v403 = vunpack.c.h.b16 %v77
    %v404 = vunpack.c.l.b16 %v78
    %v405 = vunpack.c.l.b16 %v79
    %v406 = vunpack.c.h.b16 %v79
    %v407 = vunpack.c.l.b16 %v80
    %v408 = vunpack.c.l.b16 %v81
    %v409 = vunpack.c.h.b16 %v81
    %v410 = vunpack.c.l.b16 %v82
    %v411 = vunpack.c.l.b16 %v83
    %v412 = vunpack.c.h.b16 %v83
    %v413 = vunpack.c.l.b16 %v84
    %v414 = vunpack.c.l.b16 %v85
    %v415 = vunpack.c.h.b16 %v85
    %v416 = vunpack.c.l.b16 %v86
    %v417 = vunpack.c.l.b16 %v87
    %v418 = vunpack.c.h.b16 %v87
    %v419 = vunpack.c.l.b16 %v88
    %v420 = vunpack.c.l.b16 %v89
    %v421 = vunpack.c.h.b16 %v89
    %v422 = vunpack.c.l.b16 %v90
    %v423 = vunpack.c.l.b16 %v91
    %v424 = vunpack.c.h.b16 %v91
    %v425 = vunpack.c.l.b16 %v92
    %v426 = vunpack.c.l.b16 %v93
    %v427 = vunpack.c.h.b16 %v93
    %v428 = vunpack.c.l.b16 %v94
    %v429 = vunpack.c.l.b16 %v95
    %v430 = vunpack.c.h.b16 %v95
    %v431 = vunpack.c.l.b16 %v96
    %v432 = vunpack.c.l.b16 %v97
    %v433 = vunpack.c.h.b16 %v97
    %v434 = vunpack.c.l.b16 %v98
    %v435 = vunpack.c.l.b16 %v99
    %v436 = vunpack.c.h.b16 %v99
    %v437 = vunpack.c.l.b16 %v100
    %v438 = vunpack.c.l.b16 %v101
    %v439 = vunpack.c.h.b16 %v101
    %v440 = vunpack.c.l.b16 %v102
    %v441 = vunpack.c.l.b16 %v103
    %v442 = vunpack.c.h.b16 %v103
    %v443 = vunpack.c.l.b16 %v104
    %v444 = vunpack.c.l.b16 %v105
    %v445 = vunpack.c.h.b16 %v105
    %v446 = vunpack.c.l.b16 %v106
    %v447 = vunpack.c.l.b16 %v107
    %v448 = vunpack.c.h.b16 %v107
    %v449 = vunpack.c.l.b16 %v108
    %v450 = vunpack.c.l.b16 %v109
    %v451 = vunpack.c.h.b16 %v109
    %v452 = vunpack.c.l.b16 %v110
    %v453 = vunpack.c.l.b16 %v111
    %v454 = vunpack.c.h.b16 %v111
    %v455 = vunpack.c.l.b16 %v112
    %v456 = vunpack.c.l.b16 %v113
    %v457 = vunpack.c.h.b16 %v113
    %v458 = vunpack.c.l.b16 %v114
    %v459 = vunpack.c.l.b16 %v115
    %v460 = vunpack.c.h.b16 %v115
    %v461 = vunpack.c.l.b16 %v116
    %v462 = vunpack.c.l.b16 %v117
    %v463 = vunpack.c.h.b16 %v117
    %v464 = vunpack.c.l.b16 %v118
    %v465 = vunpack.c.l.b16 %v119
    %v466 = vunpack.c.h.b16 %v119
    %v467 = vunpack.c.l.b16 %v120
    %v468 = vunpack.c.l.b16 %v121
    %v469 = vunpack.c.h.b16 %v121
    %v470 = vunpack.c.l.b16 %v122
    %v471 = vunpack.c.l.b16 %v123
    %v472 = vunpack.c.h.b16 %v123
    %v473 = vunpack.c.l.b16 %v124
    %v474 = vunpack.c.l.b16 %v125
    %v475 = vunpack.c.h.b16 %v125
    %v476 = vunpack.c.l.b16 %v126
    %v477 = vunpack.c.l.b16 %v127
    %v478 = vunpack.c.h.b16 %v127
    %v479 = vunpack.c.l.b16 %v128
    %v480 = vunpack.c.l.b16 %v129
    %v481 = vunpack.c.h.b16 %v129
    %v482 = vunpack.c.l.b16 %v130
    %v483 = vunpack.c.l.b16 %v131
    %v484 = vunpack.c.h.b16 %v131
    %v485 = vunpack.c.l.b16 %v132
    %v486 = vunpack.c.l.b16 %v133
    %v487 = vunpack.c.h.b16 %v133
    %v488 = vunpack.c.l.b16 %v134
    %v489 = vunpack.c.l.b16 %v135
    %v490 = vunpack.c.h.b16 %v135
    %v491 = vunpack.c.l.b16 %v136
    %v492 = vunpack.c.l.b16 %v137
    %v493 = vunpack.c.h.b16 %v137
    %v494 = vunpack.c.l.b16 %v138
    %v495 = vunpack.c.l.b16 %v139
    %v496 = vunpack.c.h.b16 %v139
    %v497 = vunpack.c.l.b16 %v140
    %v498 = vunpack.c.l.b16 %v141
    %v499 = vunpack.c.h.b16 %v141
    %v500 = vunpack.c.l.b16 %v142
    %v501 = vunpack.c.l.b16 %v143
    %v502 = vunpack.c.h.b16 %v143
    %v503 = vunpack.c.l.b16 %v144
    %v504 = vunpack.c.l.b16 %v145
    %v505 = vunpack.c.h.b16 %v145
    %v506 = vunpack.c.l.b16 %v146
    %v507 = vpack.c.b16 %v318, %v315
    %v508 = vpack.c.b16 %v319, %v316
    %v509 = vpack.c.b16 %v320, %v317
    %v510 = vpack.c.b16 %v324, %v321
    %v511 = vpack.c.b16 %v325, %v322
    %v512 = vpack.c.b16 %v326, %v323
    %v513 = vpack.c.b16 %v330, %v327
    %v514 = vpack.c.b16 %v331, %v328
    %v515 = vpack.c.b16 %v332, %v329
    %v516 = vpack.c.b16 %v336, %v333
    %v517 = vpack.c.b16 %v337, %v334
    %v518 = vpack.c.b16 %v338, %v335
    %v519 = vpack.c.b16 %v342, %v339
    %v520 = vpack.c.b16 %v343, %v340
    %v521 = vpack.c.b16 %v344, %v341
    %v522 = vpack.c.b16 %v348, %v345
    %v523 = vpack.c.b16 %v349, %v346
    %v524 = vpack.c.b16 %v350, %v347
    %v525 = vpack.c.b16 %v354, %v351
    %v526 = vpack.c.b16 %v355, %v352
    %v527 = vpack.c.b16 %v356, %v353
    %v528 = vpack.c.b16 %v360, %v357
    %v529 = vpack.c.b16 %v361, %v358
    %v530 = vpack.c.b16 %v362, %v359
    %v531 = vpack.c.b16 %v366, %v363
    %v532 = vpack.c.b16 %v367, %v364
    %v533 = vpack.c.b16 %v368, %v365
    %v534 = vpack.c.b16 %v372, %v369
    %v535 = vpack.c.b16 %v373, %v370
    %v536 = vpack.c.b16 %v374, %v371
    %v537 = vpack.c.b16 %v378, %v375
    %v538 = vpack.c.b16 %v379, %v376
    %v539 = vpack.c.b16 %v380, %v377
    %v540 = vpack.c.b16 %v384, %v381
    %v541 = vpack.c.b16 %v385, %v382
    %v542 = vpack.c.b16 %v386, %v383
    %v543 = vpack.c.b16 %v390, %v387
    %v544 = vpack.c.b16 %v391, %v388
    %v545 = vpack.c.b16 %v392, %v389
    %v546 = vpack.c.b16 %v396, %v393
    %v547 = vpack.c.b16 %v397, %v394
    %v548 = vpack.c.b16 %v398, %v395
    %v549 = vpack.c.b16 %v402, %v399
    %v550 = vpack.c.b16 %v403, %v400
    %v551 = vpack.c.b16 %v404, %v401
    %v552 = vpack.c.b16 %v408, %v405
    %v553 = vpack.c.b16 %v409, %v406
    %v554 = vpack.c.b16 %v410, %v407
    %v555 = vpack.c.b16 %v414, %v411
    %v556 = vpack.c.b16 %v415, %v412
    %v557 = vpack.c.b16 %v416, %v413
    %v558 = vpack.c.b16 %v420, %v417
    %v559 = vpack.c.b16 %v421, %v418
    %v560 = vpack.c.b16 %v422, %v419
    %v561 = vpack.c.b16 %v426, %v423
    %v562 = vpack.c.b16 %v427, %v424
    %v563 = vpack.c.b16 %v428, %v425
    %v564 = vpack.c.b16 %v432, %v429
    %v565 = vpack.c.b16 %v433, %v430
    %v566 = vpack.c.b16 %v434, %v431
    %v567 = vpack.c.b16 %v438, %v435
    %v568 = vpack.c.b16 %v439, %v436
    %v569 = vpack.c.b16 %v440, %v437
    %v570 = vpack.c.b16 %v444, %v441
    %v571 = vpack.c.b16 %v445, %v442
    %v572 = vpack.c.b16 %v446, %v443
    %v573 = vpack.c.b16 %v450, %v447
    %v574 = vpack.c.b16 %v451, %v448
    %v575 = vpack.c.b16 %v452, %v449
    %v576 = vpack.c.b16 %v456, %v453
    %v577 = vpack.c.b16 %v457, %v454
    %v578 = vpack.c.b16 %v458, %v455
    %v579 = vpack.c.b16 %v462, %v459
    %v580 = vpack.c.b16 %v463, %v460
    %v581 = vpack.c.b16 %v464, %v461
    %v582 = vpack.c.b16 %v468, %v465
    %v583 = vpack.c.b16 %v469, %v466
    %v584 = vpack.c.b16 %v470, %v467
    %v585 = vpack.c.b16 %v474, %v471
    %v586 = vpack.c.b16 %v475, %v472
    %v587 = vpack.c.b16 %v476, %v473
    %v588 = vpack.c.b16 %v480, %v477
    %v589 = vpack.c.b16 %v481, %v478
    %v590 = vpack.c.b16 %v482, %v479
    %v591 = vpack.c.b16 %v486, %v483
    %v592 = vpack.c.b16 %v487, %v484
    %v593 = vpack.c.b16 %v488, %v485
    %v594 = vpack.c.b16 %v492, %v489
    %v595 = vpack.c.b16 %v493, %v490
    %v596 = vpack.c.b16 %v494, %v491
    %v597 = vpack.c.b16 %v498, %v495
    %v598 = vpack.c.b16 %v499, %v496
    %v599 = vpack.c.b16 %v500, %v497
    %v600 = vpack.c.b16 %v504, %v501
    %v601 = vpack.c.b16 %v505, %v502
    %v602 = vpack.c.b16 %v506, %v503
    %v703 = vunpack.c.l.b16 %v147
    %v704 = vunpack.c.l.b16 %v148
    %v705 = vunpack.c.l.b16 %v149
    %v706 = vunpack.c.l.b16 %v150
    %v707 = vunpack.c.l.b16 %v151
    %v708 = vunpack.c.l.b16 %v152
    %v709 = vunpack.c.l.b16 %v153
    %v710 = vunpack.c.l.b16 %v154
    %v711 = vunpack.c.l.b16 %v155
    %v712 = vunpack.c.l.b16 %v156
    %v713 = vunpack.c.l.b16 %v157
    %v714 = vunpack.c.l.b16 %v158
    %v715 = vunpack.c.l.b16 %v159
    %v716 = vunpack.c.l.b16 %v160
    %v717 = vunpack.c.l.b16 %v161
    %v718 = vunpack.c.l.b16 %v162
    %v719 = vunpack.c.l.b16 %v163
    %v720 = vunpack.c.l.b16 %v164
    %v721 = vunpack.c.l.b16 %v165
    %v722 = vunpack.c.l.b16 %v166
    %v723 = vunpack.c.l.b16 %v167
    %v724 = vunpack.c.l.b16 %v168
    %v725 = vunpack.c.l.b16 %v169
    %v726 = vunpack.c.l.b16 %v170
    %v727 = vunpack.c.l.b16 %v171
    %v728 = vunpack.c.l.b16 %v172
    %v729 = vunpack.c.l.b16 %v173
    %v730 = vunpack.c.l.b16 %v174
    %v731 = vunpack.c.l.b16 %v175
    %v732 = vunpack.c.l.b16 %v176
    %v733 = vunpack.c.l.b16 %v177
    %v734 = vunpack.c.l.b16 %v178
    %v735 = vunpack.c.l.b16 %v179
    %v736 = vunpack.c.l.b16 %v180
    %v737 = vunpack.c.l.b16 %v181
    %v738 = vunpack.c.l.b16 %v182
    %v739 = vpack.c.b16 %v704, %v703
    %v740 = vpack.c.b16 %v706, %v705
    %v741 = vpack.c.b16 %v708, %v707
    %v742 = vpack.c.b16 %v710, %v709
    %v743 = vpack.c.b16 %v712, %v711
    %v744 = vpack.c.b16 %v714, %v713
    %v745 = vpack.c.b16 %v716, %v715
    %v746 = vpack.c.b16 %v718, %v717
    %v747 = vpack.c.b16 %v720, %v719
    %v748 = vpack.c.b16 %v722, %v721
    %v749 = vpack.c.b16 %v724, %v723
    %v750 = vpack.c.b16 %v726, %v725
    %v751 = vpack.c.b16 %v728, %v727
    %v752 = vpack.c.b16 %v730, %v729
    %v753 = vpack.c.b16 %v732, %v731
    %v754 = vpack.c.b16 %v734, %v733
    %v755 = vpack.c.b16 %v736, %v735
    %v756 = vpack.c.b16 %v738, %v737
    %vm775 = vcmask 261120
    %v777 = vsel %vm775, %v509, 0
    %v780 = vsel %vm775, %v512, 0
    %v783 = vsel %vm775, %v515, 0
    %v786 = vsel %vm775, %v518, 0
    %v789 = vsel %vm775, %v521, 0
    %v792 = vsel %vm775, %v524, 0
    %v795 = vsel %vm775, %v527, 0
    %v798 = vsel %vm775, %v530, 0
    %v801 = vsel %vm775, %v533, 0
    %v804 = vsel %vm775, %v536, 0
    %v807 = vsel %vm775, %v539, 0
    %v810 = vsel %vm775, %v542, 0
    %v813 = vsel %vm775, %v545, 0
    %v816 = vsel %vm775, %v548, 0
    %v819 = vsel %vm775, %v551, 0
    %v822 = vsel %vm775, %v554, 0
    %v825 = vsel %vm775, %v557, 0
    %v828 = vsel %vm775, %v560, 0
    %v831 = vsel %vm775, %v563, 0
    %v834 = vsel %vm775, %v566, 0
    %v837 = vsel %vm775, %v569, 0
    %v840 = vsel %vm775, %v572, 0
    %v843 = vsel %vm775, %v575, 0
    %v846 = vsel %vm775, %v578, 0
    %v849 = vsel %vm775, %v581, 0
    %v852 = vsel %vm775, %v584, 0
    %v855 = vsel %vm775, %v587, 0
    %v858 = vsel %vm775, %v590, 0
    %v861 = vsel %vm775, %v593, 0
    %v864 = vsel %vm775, %v596, 0
    %v867 = vsel %vm775, %v599, 0
    %v870 = vsel %vm775, %v602, 0
    %872 = vmatpush.bf16.msra.mxu0 %v746
    %873 = vmatpush.bf16.msra.mxu0 %v745
    %874 = vmatpush.bf16.msra.mxu0 %v744
    %875 = vmatpush.bf16.msra.mxu0 %v743
    %876 = vmatpush.bf16.msra.mxu0 %v742
    %877 = vmatpush.bf16.msra.mxu0 %v741
    %878 = vmatpush.bf16.msra.mxu0 %v740
    %879 = vmatpush.bf16.msra.mxu0 %v739
    %880 = vmatmul.bf16.gmra.mxu0 %v507
    %v881 = vpop.f32.mrf.mxu0
    %v882 = vadd.f32 %v185, %v881
    %v883 = vpop.f32.mrf.mxu0
    %v884 = vadd.f32 %v185, %v883
    %885 = vmatmul.bf16.gmra.mxu0 %v510
    %v886 = vpop.f32.mrf.mxu0
    %v887 = vadd.f32 %v185, %v886
    %v888 = vpop.f32.mrf.mxu0
    %v889 = vadd.f32 %v185, %v888
    %890 = vmatmul.bf16.gmra.mxu0 %v513
    %v891 = vpop.f32.mrf.mxu0
    %v892 = vadd.f32 %v185, %v891
    %v893 = vpop.f32.mrf.mxu0
    %v894 = vadd.f32 %v185, %v893
    %895 = vmatmul.bf16.gmra.mxu0 %v516
    %v896 = vpop.f32.mrf.mxu0
    %v897 = vadd.f32 %v185, %v896
    %v898 = vpop.f32.mrf.mxu0
    %v899 = vadd.f32 %v185, %v898
    %900 = vmatmul.bf16.gmra.mxu0 %v519
    %v901 = vpop.f32.mrf.mxu0
    %v902 = vadd.f32 %v185, %v901
    %v903 = vpop.f32.mrf.mxu0
    %v904 = vadd.f32 %v185, %v903
    %905 = vmatmul.bf16.gmra.mxu0 %v522
    %v906 = vpop.f32.mrf.mxu0
    %v907 = vadd.f32 %v185, %v906
    %v908 = vpop.f32.mrf.mxu0
    %v909 = vadd.f32 %v185, %v908
    %910 = vmatmul.bf16.gmra.mxu0 %v525
    %v911 = vpop.f32.mrf.mxu0
    %v912 = vadd.f32 %v185, %v911
    %v913 = vpop.f32.mrf.mxu0
    %v914 = vadd.f32 %v185, %v913
    %915 = vmatmul.bf16.gmra.mxu0 %v528
    %v916 = vpop.f32.mrf.mxu0
    %v917 = vadd.f32 %v185, %v916
    %v918 = vpop.f32.mrf.mxu0
    %v919 = vadd.f32 %v185, %v918
    %920 = vmatmul.bf16.gmra.mxu0 %v531
    %v921 = vpop.f32.mrf.mxu0
    %v922 = vadd.f32 %v185, %v921
    %v923 = vpop.f32.mrf.mxu0
    %v924 = vadd.f32 %v185, %v923
    %925 = vmatmul.bf16.gmra.mxu0 %v534
    %v926 = vpop.f32.mrf.mxu0
    %v927 = vadd.f32 %v185, %v926
    %v928 = vpop.f32.mrf.mxu0
    %v929 = vadd.f32 %v185, %v928
    %930 = vmatmul.bf16.gmra.mxu0 %v537
    %v931 = vpop.f32.mrf.mxu0
    %v932 = vadd.f32 %v185, %v931
    %v933 = vpop.f32.mrf.mxu0
    %v934 = vadd.f32 %v185, %v933
    %935 = vmatmul.bf16.gmra.mxu0 %v540
    %v936 = vpop.f32.mrf.mxu0
    %v937 = vadd.f32 %v185, %v936
    %v938 = vpop.f32.mrf.mxu0
    %v939 = vadd.f32 %v185, %v938
    %940 = vmatmul.bf16.gmra.mxu0 %v543
    %v941 = vpop.f32.mrf.mxu0
    %v942 = vadd.f32 %v185, %v941
    %v943 = vpop.f32.mrf.mxu0
    %v944 = vadd.f32 %v185, %v943
    %945 = vmatmul.bf16.gmra.mxu0 %v546
    %v946 = vpop.f32.mrf.mxu0
    %v947 = vadd.f32 %v185, %v946
    %v948 = vpop.f32.mrf.mxu0
    %v949 = vadd.f32 %v185, %v948
    %950 = vmatmul.bf16.gmra.mxu0 %v549
    %v951 = vpop.f32.mrf.mxu0
    %v952 = vadd.f32 %v185, %v951
    %v953 = vpop.f32.mrf.mxu0
    %v954 = vadd.f32 %v185, %v953
    %955 = vmatmul.bf16.gmra.mxu0 %v552
    %v956 = vpop.f32.mrf.mxu0
    %v957 = vadd.f32 %v185, %v956
    %v958 = vpop.f32.mrf.mxu0
    %v959 = vadd.f32 %v185, %v958
    %960 = vmatmul.bf16.gmra.mxu0 %v555
    %v961 = vpop.f32.mrf.mxu0
    %v962 = vadd.f32 %v185, %v961
    %v963 = vpop.f32.mrf.mxu0
    %v964 = vadd.f32 %v185, %v963
    %965 = vmatmul.bf16.gmra.mxu0 %v558
    %v966 = vpop.f32.mrf.mxu0
    %v967 = vadd.f32 %v185, %v966
    %v968 = vpop.f32.mrf.mxu0
    %v969 = vadd.f32 %v185, %v968
    %970 = vmatmul.bf16.gmra.mxu0 %v561
    %v971 = vpop.f32.mrf.mxu0
    %v972 = vadd.f32 %v185, %v971
    %v973 = vpop.f32.mrf.mxu0
    %v974 = vadd.f32 %v185, %v973
    %975 = vmatmul.bf16.gmra.mxu0 %v564
    %v976 = vpop.f32.mrf.mxu0
    %v977 = vadd.f32 %v185, %v976
    %v978 = vpop.f32.mrf.mxu0
    %v979 = vadd.f32 %v185, %v978
    %980 = vmatmul.bf16.gmra.mxu0 %v567
    %v981 = vpop.f32.mrf.mxu0
    %v982 = vadd.f32 %v185, %v981
    %v983 = vpop.f32.mrf.mxu0
    %v984 = vadd.f32 %v185, %v983
    %985 = vmatmul.bf16.gmra.mxu0 %v570
    %v986 = vpop.f32.mrf.mxu0
    %v987 = vadd.f32 %v185, %v986
    %v988 = vpop.f32.mrf.mxu0
    %v989 = vadd.f32 %v185, %v988
    %990 = vmatmul.bf16.gmra.mxu0 %v573
    %v991 = vpop.f32.mrf.mxu0
    %v992 = vadd.f32 %v185, %v991
    %v993 = vpop.f32.mrf.mxu0
    %v994 = vadd.f32 %v185, %v993
    %995 = vmatmul.bf16.gmra.mxu0 %v576
    %v996 = vpop.f32.mrf.mxu0
    %v997 = vadd.f32 %v185, %v996
    %v998 = vpop.f32.mrf.mxu0
    %v999 = vadd.f32 %v185, %v998
    %1000 = vmatmul.bf16.gmra.mxu0 %v579
    %v1001 = vpop.f32.mrf.mxu0
    %v1002 = vadd.f32 %v185, %v1001
    %v1003 = vpop.f32.mrf.mxu0
    %v1004 = vadd.f32 %v185, %v1003
    %1005 = vmatmul.bf16.gmra.mxu0 %v582
    %v1006 = vpop.f32.mrf.mxu0
    %v1007 = vadd.f32 %v185, %v1006
    %v1008 = vpop.f32.mrf.mxu0
    %v1009 = vadd.f32 %v185, %v1008
    %1010 = vmatmul.bf16.gmra.mxu0 %v585
    %v1011 = vpop.f32.mrf.mxu0
    %v1012 = vadd.f32 %v185, %v1011
    %v1013 = vpop.f32.mrf.mxu0
    %v1014 = vadd.f32 %v185, %v1013
    %1015 = vmatmul.bf16.gmra.mxu0 %v588
    %v1016 = vpop.f32.mrf.mxu0
    %v1017 = vadd.f32 %v185, %v1016
    %v1018 = vpop.f32.mrf.mxu0
    %v1019 = vadd.f32 %v185, %v1018
    %1020 = vmatmul.bf16.gmra.mxu0 %v591
    %v1021 = vpop.f32.mrf.mxu0
    %v1022 = vadd.f32 %v185, %v1021
    %v1023 = vpop.f32.mrf.mxu0
    %v1024 = vadd.f32 %v185, %v1023
    %1025 = vmatmul.bf16.gmra.mxu0 %v594
    %v1026 = vpop.f32.mrf.mxu0
    %v1027 = vadd.f32 %v185, %v1026
    %v1028 = vpop.f32.mrf.mxu0
    %v1029 = vadd.f32 %v185, %v1028
    %1030 = vmatmul.bf16.gmra.mxu0 %v597
    %v1031 = vpop.f32.mrf.mxu0
    %v1032 = vadd.f32 %v185, %v1031
    %v1033 = vpop.f32.mrf.mxu0
    %v1034 = vadd.f32 %v185, %v1033
    %1035 = vmatmul.bf16.gmra.mxu0 %v600
    %v1036 = vpop.f32.mrf.mxu0
    %v1037 = vadd.f32 %v185, %v1036
    %v1038 = vpop.f32.mrf.mxu0
    %v1039 = vadd.f32 %v185, %v1038
    %1040 = vdwg.mxu0
    %1041 = vmatpush.bf16.msra.mxu0 %v754
    %1042 = vmatpush.bf16.msra.mxu0 %v753
    %1043 = vmatpush.bf16.msra.mxu0 %v752
    %1044 = vmatpush.bf16.msra.mxu0 %v751
    %1045 = vmatpush.bf16.msra.mxu0 %v750
    %1046 = vmatpush.bf16.msra.mxu0 %v749
    %1047 = vmatpush.bf16.msra.mxu0 %v748
    %1048 = vmatpush.bf16.msra.mxu0 %v747
    %1049 = vmatmul.bf16.gmra.mxu0 %v508
    %v1050 = vpop.f32.mrf.mxu0
    %v1051 = vadd.f32 %v882, %v1050
    %v1052 = vpop.f32.mrf.mxu0
    %v1053 = vadd.f32 %v884, %v1052
    %1054 = vmatmul.bf16.gmra.mxu0 %v511
    %v1055 = vpop.f32.mrf.mxu0
    %v1056 = vadd.f32 %v887, %v1055
    %v1057 = vpop.f32.mrf.mxu0
    %v1058 = vadd.f32 %v889, %v1057
    %1059 = vmatmul.bf16.gmra.mxu0 %v514
    %v1060 = vpop.f32.mrf.mxu0
    %v1061 = vadd.f32 %v892, %v1060
    %v1062 = vpop.f32.mrf.mxu0
    %v1063 = vadd.f32 %v894, %v1062
    %1064 = vmatmul.bf16.gmra.mxu0 %v517
    %v1065 = vpop.f32.mrf.mxu0
    %v1066 = vadd.f32 %v897, %v1065
    %v1067 = vpop.f32.mrf.mxu0
    %v1068 = vadd.f32 %v899, %v1067
    %1069 = vmatmul.bf16.gmra.mxu0 %v520
    %v1070 = vpop.f32.mrf.mxu0
    %v1071 = vadd.f32 %v902, %v1070
    %v1072 = vpop.f32.mrf.mxu0
    %v1073 = vadd.f32 %v904, %v1072
    %1074 = vmatmul.bf16.gmra.mxu0 %v523
    %v1075 = vpop.f32.mrf.mxu0
    %v1076 = vadd.f32 %v907, %v1075
    %v1077 = vpop.f32.mrf.mxu0
    %v1078 = vadd.f32 %v909, %v1077
    %1079 = vmatmul.bf16.gmra.mxu0 %v526
    %v1080 = vpop.f32.mrf.mxu0
    %v1081 = vadd.f32 %v912, %v1080
    %v1082 = vpop.f32.mrf.mxu0
    %v1083 = vadd.f32 %v914, %v1082
    %1084 = vmatmul.bf16.gmra.mxu0 %v529
    %v1085 = vpop.f32.mrf.mxu0
    %v1086 = vadd.f32 %v917, %v1085
    %v1087 = vpop.f32.mrf.mxu0
    %v1088 = vadd.f32 %v919, %v1087
    %1089 = vmatmul.bf16.gmra.mxu0 %v532
    %v1090 = vpop.f32.mrf.mxu0
    %v1091 = vadd.f32 %v922, %v1090
    %v1092 = vpop.f32.mrf.mxu0
    %v1093 = vadd.f32 %v924, %v1092
    %1094 = vmatmul.bf16.gmra.mxu0 %v535
    %v1095 = vpop.f32.mrf.mxu0
    %v1096 = vadd.f32 %v927, %v1095
    %v1097 = vpop.f32.mrf.mxu0
    %v1098 = vadd.f32 %v929, %v1097
    %1099 = vmatmul.bf16.gmra.mxu0 %v538
    %v1100 = vpop.f32.mrf.mxu0
    %v1101 = vadd.f32 %v932, %v1100
    %v1102 = vpop.f32.mrf.mxu0
    %v1103 = vadd.f32 %v934, %v1102
    %1104 = vmatmul.bf16.gmra.mxu0 %v541
    %v1105 = vpop.f32.mrf.mxu0
    %v1106 = vadd.f32 %v937, %v1105
    %v1107 = vpop.f32.mrf.mxu0
    %v1108 = vadd.f32 %v939, %v1107
    %1109 = vmatmul.bf16.gmra.mxu0 %v544
    %v1110 = vpop.f32.mrf.mxu0
    %v1111 = vadd.f32 %v942, %v1110
    %v1112 = vpop.f32.mrf.mxu0
    %v1113 = vadd.f32 %v944, %v1112
    %1114 = vmatmul.bf16.gmra.mxu0 %v547
    %v1115 = vpop.f32.mrf.mxu0
    %v1116 = vadd.f32 %v947, %v1115
    %v1117 = vpop.f32.mrf.mxu0
    %v1118 = vadd.f32 %v949, %v1117
    %1119 = vmatmul.bf16.gmra.mxu0 %v550
    %v1120 = vpop.f32.mrf.mxu0
    %v1121 = vadd.f32 %v952, %v1120
    %v1122 = vpop.f32.mrf.mxu0
    %v1123 = vadd.f32 %v954, %v1122
    %1124 = vmatmul.bf16.gmra.mxu0 %v553
    %v1125 = vpop.f32.mrf.mxu0
    %v1126 = vadd.f32 %v957, %v1125
    %v1127 = vpop.f32.mrf.mxu0
    %v1128 = vadd.f32 %v959, %v1127
    %1129 = vmatmul.bf16.gmra.mxu0 %v556
    %v1130 = vpop.f32.mrf.mxu0
    %v1131 = vadd.f32 %v962, %v1130
    %v1132 = vpop.f32.mrf.mxu0
    %v1133 = vadd.f32 %v964, %v1132
    %1134 = vmatmul.bf16.gmra.mxu0 %v559
    %v1135 = vpop.f32.mrf.mxu0
    %v1136 = vadd.f32 %v967, %v1135
    %v1137 = vpop.f32.mrf.mxu0
    %v1138 = vadd.f32 %v969, %v1137
    %1139 = vmatmul.bf16.gmra.mxu0 %v562
    %v1140 = vpop.f32.mrf.mxu0
    %v1141 = vadd.f32 %v972, %v1140
    %v1142 = vpop.f32.mrf.mxu0
    %v1143 = vadd.f32 %v974, %v1142
    %1144 = vmatmul.bf16.gmra.mxu0 %v565
    %v1145 = vpop.f32.mrf.mxu0
    %v1146 = vadd.f32 %v977, %v1145
    %v1147 = vpop.f32.mrf.mxu0
    %v1148 = vadd.f32 %v979, %v1147
    %1149 = vmatmul.bf16.gmra.mxu0 %v568
    %v1150 = vpop.f32.mrf.mxu0
    %v1151 = vadd.f32 %v982, %v1150
    %v1152 = vpop.f32.mrf.mxu0
    %v1153 = vadd.f32 %v984, %v1152
    %1154 = vmatmul.bf16.gmra.mxu0 %v571
    %v1155 = vpop.f32.mrf.mxu0
    %v1156 = vadd.f32 %v987, %v1155
    %v1157 = vpop.f32.mrf.mxu0
    %v1158 = vadd.f32 %v989, %v1157
    %1159 = vmatmul.bf16.gmra.mxu0 %v574
    %v1160 = vpop.f32.mrf.mxu0
    %v1161 = vadd.f32 %v992, %v1160
    %v1162 = vpop.f32.mrf.mxu0
    %v1163 = vadd.f32 %v994, %v1162
    %1164 = vmatmul.bf16.gmra.mxu0 %v577
    %v1165 = vpop.f32.mrf.mxu0
    %v1166 = vadd.f32 %v997, %v1165
    %v1167 = vpop.f32.mrf.mxu0
    %v1168 = vadd.f32 %v999, %v1167
    %1169 = vmatmul.bf16.gmra.mxu0 %v580
    %v1170 = vpop.f32.mrf.mxu0
    %v1171 = vadd.f32 %v1002, %v1170
    %v1172 = vpop.f32.mrf.mxu0
    %v1173 = vadd.f32 %v1004, %v1172
    %1174 = vmatmul.bf16.gmra.mxu0 %v583
    %v1175 = vpop.f32.mrf.mxu0
    %v1176 = vadd.f32 %v1007, %v1175
    %v1177 = vpop.f32.mrf.mxu0
    %v1178 = vadd.f32 %v1009, %v1177
    %1179 = vmatmul.bf16.gmra.mxu0 %v586
    %v1180 = vpop.f32.mrf.mxu0
    %v1181 = vadd.f32 %v1012, %v1180
    %v1182 = vpop.f32.mrf.mxu0
    %v1183 = vadd.f32 %v1014, %v1182
    %1184 = vmatmul.bf16.gmra.mxu0 %v589
    %v1185 = vpop.f32.mrf.mxu0
    %v1186 = vadd.f32 %v1017, %v1185
    %v1187 = vpop.f32.mrf.mxu0
    %v1188 = vadd.f32 %v1019, %v1187
    %1189 = vmatmul.bf16.gmra.mxu0 %v592
    %v1190 = vpop.f32.mrf.mxu0
    %v1191 = vadd.f32 %v1022, %v1190
    %v1192 = vpop.f32.mrf.mxu0
    %v1193 = vadd.f32 %v1024, %v1192
    %1194 = vmatmul.bf16.gmra.mxu0 %v595
    %v1195 = vpop.f32.mrf.mxu0
    %v1196 = vadd.f32 %v1027, %v1195
    %v1197 = vpop.f32.mrf.mxu0
    %v1198 = vadd.f32 %v1029, %v1197
    %1199 = vmatmul.bf16.gmra.mxu0 %v598
    %v1200 = vpop.f32.mrf.mxu0
    %v1201 = vadd.f32 %v1032, %v1200
    %v1202 = vpop.f32.mrf.mxu0
    %v1203 = vadd.f32 %v1034, %v1202
    %1204 = vmatmul.bf16.gmra.mxu0 %v601
    %v1205 = vpop.f32.mrf.mxu0
    %v1206 = vadd.f32 %v1037, %v1205
    %v1207 = vpop.f32.mrf.mxu0
    %v1208 = vadd.f32 %v1039, %v1207
    %1209 = vdwg.mxu0
    %1210 = vmatpush.bf16.msra.mxu0 0
    %1211 = vmatpush.bf16.msra.mxu0 0
    %1212 = vmatpush.bf16.msra.mxu0 0
    %1213 = vmatpush.bf16.msra.mxu0 0
    %1214 = vmatpush.bf16.msra.mxu0 0
    %1215 = vmatpush.bf16.msra.mxu0 0
    %1216 = vmatpush.bf16.msra.mxu0 %v756
    %1217 = vmatpush.bf16.msra.mxu0 %v755
    %1218 = vmatmul.bf16.gmra.mxu0 %v777
    %v1219 = vpop.f32.mrf.mxu0
    %v1220 = vadd.f32 %v1051, %v1219
    %v1221 = vpop.f32.mrf.mxu0
    %v1222 = vadd.f32 %v1053, %v1221
    %1223 = vmatmul.bf16.gmra.mxu0 %v780
    %v1224 = vpop.f32.mrf.mxu0
    %v1225 = vadd.f32 %v1056, %v1224
    %v1226 = vpop.f32.mrf.mxu0
    %v1227 = vadd.f32 %v1058, %v1226
    %1228 = vmatmul.bf16.gmra.mxu0 %v783
    %v1229 = vpop.f32.mrf.mxu0
    %v1230 = vadd.f32 %v1061, %v1229
    %v1231 = vpop.f32.mrf.mxu0
    %v1232 = vadd.f32 %v1063, %v1231
    %1233 = vmatmul.bf16.gmra.mxu0 %v786
    %v1234 = vpop.f32.mrf.mxu0
    %v1235 = vadd.f32 %v1066, %v1234
    %v1236 = vpop.f32.mrf.mxu0
    %v1237 = vadd.f32 %v1068, %v1236
    %1238 = vmatmul.bf16.gmra.mxu0 %v789
    %v1239 = vpop.f32.mrf.mxu0
    %v1240 = vadd.f32 %v1071, %v1239
    %v1241 = vpop.f32.mrf.mxu0
    %v1242 = vadd.f32 %v1073, %v1241
    %1243 = vmatmul.bf16.gmra.mxu0 %v792
    %v1244 = vpop.f32.mrf.mxu0
    %v1245 = vadd.f32 %v1076, %v1244
    %v1246 = vpop.f32.mrf.mxu0
    %v1247 = vadd.f32 %v1078, %v1246
    %1248 = vmatmul.bf16.gmra.mxu0 %v795
    %v1249 = vpop.f32.mrf.mxu0
    %v1250 = vadd.f32 %v1081, %v1249
    %v1251 = vpop.f32.mrf.mxu0
    %v1252 = vadd.f32 %v1083, %v1251
    %1253 = vmatmul.bf16.gmra.mxu0 %v798
    %v1254 = vpop.f32.mrf.mxu0
    %v1255 = vadd.f32 %v1086, %v1254
    %v1256 = vpop.f32.mrf.mxu0
    %v1257 = vadd.f32 %v1088, %v1256
    %1258 = vmatmul.bf16.gmra.mxu0 %v801
    %v1259 = vpop.f32.mrf.mxu0
    %v1260 = vadd.f32 %v1091, %v1259
    %v1261 = vpop.f32.mrf.mxu0
    %v1262 = vadd.f32 %v1093, %v1261
    %1263 = vmatmul.bf16.gmra.mxu0 %v804
    %v1264 = vpop.f32.mrf.mxu0
    %v1265 = vadd.f32 %v1096, %v1264
    %v1266 = vpop.f32.mrf.mxu0
    %v1267 = vadd.f32 %v1098, %v1266
    %1268 = vmatmul.bf16.gmra.mxu0 %v807
    %v1269 = vpop.f32.mrf.mxu0
    %v1270 = vadd.f32 %v1101, %v1269
    %v1271 = vpop.f32.mrf.mxu0
    %v1272 = vadd.f32 %v1103, %v1271
    %1273 = vmatmul.bf16.gmra.mxu0 %v810
    %v1274 = vpop.f32.mrf.mxu0
    %v1275 = vadd.f32 %v1106, %v1274
    %v1276 = vpop.f32.mrf.mxu0
    %v1277 = vadd.f32 %v1108, %v1276
    %1278 = vmatmul.bf16.gmra.mxu0 %v813
    %v1279 = vpop.f32.mrf.mxu0
    %v1280 = vadd.f32 %v1111, %v1279
    %v1281 = vpop.f32.mrf.mxu0
    %v1282 = vadd.f32 %v1113, %v1281
    %1283 = vmatmul.bf16.gmra.mxu0 %v816
    %v1284 = vpop.f32.mrf.mxu0
    %v1285 = vadd.f32 %v1116, %v1284
    %v1286 = vpop.f32.mrf.mxu0
    %v1287 = vadd.f32 %v1118, %v1286
    %1288 = vmatmul.bf16.gmra.mxu0 %v819
    %v1289 = vpop.f32.mrf.mxu0
    %v1290 = vadd.f32 %v1121, %v1289
    %v1291 = vpop.f32.mrf.mxu0
    %v1292 = vadd.f32 %v1123, %v1291
    %1293 = vmatmul.bf16.gmra.mxu0 %v822
    %v1294 = vpop.f32.mrf.mxu0
    %v1295 = vadd.f32 %v1126, %v1294
    %v1296 = vpop.f32.mrf.mxu0
    %v1297 = vadd.f32 %v1128, %v1296
    %1298 = vmatmul.bf16.gmra.mxu0 %v825
    %v1299 = vpop.f32.mrf.mxu0
    %v1300 = vadd.f32 %v1131, %v1299
    %v1301 = vpop.f32.mrf.mxu0
    %v1302 = vadd.f32 %v1133, %v1301
    %1303 = vmatmul.bf16.gmra.mxu0 %v828
    %v1304 = vpop.f32.mrf.mxu0
    %v1305 = vadd.f32 %v1136, %v1304
    %v1306 = vpop.f32.mrf.mxu0
    %v1307 = vadd.f32 %v1138, %v1306
    %1308 = vmatmul.bf16.gmra.mxu0 %v831
    %v1309 = vpop.f32.mrf.mxu0
    %v1310 = vadd.f32 %v1141, %v1309
    %v1311 = vpop.f32.mrf.mxu0
    %v1312 = vadd.f32 %v1143, %v1311
    %1313 = vmatmul.bf16.gmra.mxu0 %v834
    %v1314 = vpop.f32.mrf.mxu0
    %v1315 = vadd.f32 %v1146, %v1314
    %v1316 = vpop.f32.mrf.mxu0
    %v1317 = vadd.f32 %v1148, %v1316
    %1318 = vmatmul.bf16.gmra.mxu0 %v837
    %v1319 = vpop.f32.mrf.mxu0
    %v1320 = vadd.f32 %v1151, %v1319
    %v1321 = vpop.f32.mrf.mxu0
    %v1322 = vadd.f32 %v1153, %v1321
    %1323 = vmatmul.bf16.gmra.mxu0 %v840
    %v1324 = vpop.f32.mrf.mxu0
    %v1325 = vadd.f32 %v1156, %v1324
    %v1326 = vpop.f32.mrf.mxu0
    %v1327 = vadd.f32 %v1158, %v1326
    %1328 = vmatmul.bf16.gmra.mxu0 %v843
    %v1329 = vpop.f32.mrf.mxu0
    %v1330 = vadd.f32 %v1161, %v1329
    %v1331 = vpop.f32.mrf.mxu0
    %v1332 = vadd.f32 %v1163, %v1331
    %1333 = vmatmul.bf16.gmra.mxu0 %v846
    %v1334 = vpop.f32.mrf.mxu0
    %v1335 = vadd.f32 %v1166, %v1334
    %v1336 = vpop.f32.mrf.mxu0
    %v1337 = vadd.f32 %v1168, %v1336
    %1338 = vmatmul.bf16.gmra.mxu0 %v849
    %v1339 = vpop.f32.mrf.mxu0
    %v1340 = vadd.f32 %v1171, %v1339
    %v1341 = vpop.f32.mrf.mxu0
    %v1342 = vadd.f32 %v1173, %v1341
    %1343 = vmatmul.bf16.gmra.mxu0 %v852
    %v1344 = vpop.f32.mrf.mxu0
    %v1345 = vadd.f32 %v1176, %v1344
    %v1346 = vpop.f32.mrf.mxu0
    %v1347 = vadd.f32 %v1178, %v1346
    %1348 = vmatmul.bf16.gmra.mxu0 %v855
    %v1349 = vpop.f32.mrf.mxu0
    %v1350 = vadd.f32 %v1181, %v1349
    %v1351 = vpop.f32.mrf.mxu0
    %v1352 = vadd.f32 %v1183, %v1351
    %1353 = vmatmul.bf16.gmra.mxu0 %v858
    %v1354 = vpop.f32.mrf.mxu0
    %v1355 = vadd.f32 %v1186, %v1354
    %v1356 = vpop.f32.mrf.mxu0
    %v1357 = vadd.f32 %v1188, %v1356
    %1358 = vmatmul.bf16.gmra.mxu0 %v861
    %v1359 = vpop.f32.mrf.mxu0
    %v1360 = vadd.f32 %v1191, %v1359
    %v1361 = vpop.f32.mrf.mxu0
    %v1362 = vadd.f32 %v1193, %v1361
    %1363 = vmatmul.bf16.gmra.mxu0 %v864
    %v1364 = vpop.f32.mrf.mxu0
    %v1365 = vadd.f32 %v1196, %v1364
    %v1366 = vpop.f32.mrf.mxu0
    %v1367 = vadd.f32 %v1198, %v1366
    %1368 = vmatmul.bf16.gmra.mxu0 %v867
    %v1369 = vpop.f32.mrf.mxu0
    %v1370 = vadd.f32 %v1201, %v1369
    %v1371 = vpop.f32.mrf.mxu0
    %v1372 = vadd.f32 %v1203, %v1371
    %1373 = vmatmul.bf16.gmra.mxu0 %v870
    %v1374 = vpop.f32.mrf.mxu0
    %v1375 = vadd.f32 %v1206, %v1374
    %v1376 = vpop.f32.mrf.mxu0
    %v1377 = vadd.f32 %v1208, %v1376
    %1378 = vdwg.mxu0
    %v1379 = vld [vmem:[%s3] sm:$0xf]
    %v1380 = vld [vmem:[%s3 + $0x4] sm:$0xf]
    %v1381 = vld [vmem:[%s3 + $0x8] sm:$0xf]
    %v1382 = vld [vmem:[%s3 + $0xc] sm:$0xf]
    %v1383 = vld [vmem:[%s3 + $0x10] sm:$0xf]
    %v1384 = vld [vmem:[%s3 + $0x14] sm:$0xf]
    %v1385 = vld [vmem:[%s3 + $0x18] sm:$0xf]
    %v1386 = vld [vmem:[%s3 + $0x1c] sm:$0xf]
    %v1387 = vld [vmem:[%s3 + $0x20] sm:$0xf]
    %v1388 = vld [vmem:[%s3 + $0x24] sm:$0xf]
    %v1389 = vld [vmem:[%s3 + $0x28] sm:$0xf]
    %v1390 = vld [vmem:[%s3 + $0x2c] sm:$0xf]
    %v1391 = vld [vmem:[%s3 + $0x30] sm:$0xf]
    %v1392 = vld [vmem:[%s3 + $0x34] sm:$0xf]
    %v1393 = vld [vmem:[%s3 + $0x38] sm:$0xf]
    %v1394 = vld [vmem:[%s3 + $0x3c] sm:$0xf]
    %v1395 = vld [vmem:[%s3 + $0x40] sm:$0xf]
    %v1396 = vld [vmem:[%s3 + $0x44] sm:$0xf]
    %v1397 = vld [vmem:[%s3 + $0x48] sm:$0xf]
    %v1398 = vld [vmem:[%s3 + $0x4c] sm:$0xf]
    %v1399 = vld [vmem:[%s3 + $0x50] sm:$0xf]
    %v1400 = vld [vmem:[%s3 + $0x54] sm:$0xf]
    %v1401 = vld [vmem:[%s3 + $0x58] sm:$0xf]
    %v1402 = vld [vmem:[%s3 + $0x5c] sm:$0xf]
    %v1403 = vld [vmem:[%s3 + $0x60] sm:$0xf]
    %v1404 = vld [vmem:[%s3 + $0x64] sm:$0xf]
    %v1405 = vld [vmem:[%s3 + $0x68] sm:$0xf]
    %v1406 = vld [vmem:[%s3 + $0x6c] sm:$0xf]
    %v1407 = vld [vmem:[%s3 + $0x70] sm:$0xf]
    %v1408 = vld [vmem:[%s3 + $0x74] sm:$0xf]
    %v1409 = vld [vmem:[%s3 + $0x78] sm:$0xf]
    %v1410 = vld [vmem:[%s3 + $0x7c] sm:$0xf]
    %v1411 = vld [vmem:[%s3 + $0x80] sm:$0xf]
    %v1412 = vld [vmem:[%s3 + $0x84] sm:$0xf]
    %v1413 = vld [vmem:[%s3 + $0x88] sm:$0xf]
    %v1414 = vld [vmem:[%s3 + $0x8c] sm:$0xf]
    %v1415 = vld [vmem:[%s3 + $0x90] sm:$0xf]
    %v1416 = vld [vmem:[%s3 + $0x94] sm:$0xf]
    %v1417 = vld [vmem:[%s3 + $0x98] sm:$0xf]
    %v1418 = vld [vmem:[%s3 + $0x9c] sm:$0xf]
    %v1419 = vld [vmem:[%s3 + $0xa0] sm:$0xf]
    %v1420 = vld [vmem:[%s3 + $0xa4] sm:$0xf]
    %v1421 = vld [vmem:[%s3 + $0xa8] sm:$0xf]
    %v1422 = vld [vmem:[%s3 + $0xac] sm:$0xf]
    %v1423 = vld [vmem:[%s3 + $0xb0] sm:$0xf]
    %v1424 = vld [vmem:[%s3 + $0xb4] sm:$0xf]
    %v1425 = vld [vmem:[%s3 + $0xb8] sm:$0xf]
    %v1426 = vld [vmem:[%s3 + $0xbc] sm:$0xf]
    %v1427 = vld [vmem:[%s3 + $0xc0] sm:$0xf]
    %v1428 = vld [vmem:[%s3 + $0xc4] sm:$0xf]
    %v1429 = vld [vmem:[%s3 + $0xc8] sm:$0xf]
    %v1430 = vld [vmem:[%s3 + $0xcc] sm:$0xf]
    %v1431 = vld [vmem:[%s3 + $0xd0] sm:$0xf]
    %v1432 = vld [vmem:[%s3 + $0xd4] sm:$0xf]
    %v1433 = vld [vmem:[%s3 + $0xd8] sm:$0xf]
    %v1434 = vld [vmem:[%s3 + $0xdc] sm:$0xf]
    %v1435 = vld [vmem:[%s3 + $0xe0] sm:$0xf]
    %v1436 = vld [vmem:[%s3 + $0xe4] sm:$0xf]
    %v1437 = vld [vmem:[%s3 + $0xe8] sm:$0xf]
    %v1438 = vld [vmem:[%s3 + $0xec] sm:$0xf]
    %v1439 = vld [vmem:[%s3 + $0xf0] sm:$0xf]
    %v1440 = vld [vmem:[%s3 + $0xf4] sm:$0xf]
    %v1441 = vld [vmem:[%s3 + $0xf8] sm:$0xf]
    %v1442 = vld [vmem:[%s3 + $0xfc] sm:$0xf]
    %v1443 = vunpack.c.l.bf16 %v1379
    %v1444 = vunpack.c.l.bf16 %v1380
    %v1445 = vunpack.c.l.bf16 %v1381
    %v1446 = vunpack.c.l.bf16 %v1382
    %v1447 = vunpack.c.l.bf16 %v1383
    %v1448 = vunpack.c.l.bf16 %v1384
    %v1449 = vunpack.c.l.bf16 %v1385
    %v1450 = vunpack.c.l.bf16 %v1386
    %v1451 = vunpack.c.l.bf16 %v1387
    %v1452 = vunpack.c.l.bf16 %v1388
    %v1453 = vunpack.c.l.bf16 %v1389
    %v1454 = vunpack.c.l.bf16 %v1390
    %v1455 = vunpack.c.l.bf16 %v1391
    %v1456 = vunpack.c.l.bf16 %v1392
    %v1457 = vunpack.c.l.bf16 %v1393
    %v1458 = vunpack.c.l.bf16 %v1394
    %v1459 = vunpack.c.l.bf16 %v1395
    %v1460 = vunpack.c.l.bf16 %v1396
    %v1461 = vunpack.c.l.bf16 %v1397
    %v1462 = vunpack.c.l.bf16 %v1398
    %v1463 = vunpack.c.l.bf16 %v1399
    %v1464 = vunpack.c.l.bf16 %v1400
    %v1465 = vunpack.c.l.bf16 %v1401
    %v1466 = vunpack.c.l.bf16 %v1402
    %v1467 = vunpack.c.l.bf16 %v1403
    %v1468 = vunpack.c.l.bf16 %v1404
    %v1469 = vunpack.c.l.bf16 %v1405
    %v1470 = vunpack.c.l.bf16 %v1406
    %v1471 = vunpack.c.l.bf16 %v1407
    %v1472 = vunpack.c.l.bf16 %v1408
    %v1473 = vunpack.c.l.bf16 %v1409
    %v1474 = vunpack.c.l.bf16 %v1410
    %v1475 = vunpack.c.l.bf16 %v1411
    %v1476 = vunpack.c.l.bf16 %v1412
    %v1477 = vunpack.c.l.bf16 %v1413
    %v1478 = vunpack.c.l.bf16 %v1414
    %v1479 = vunpack.c.l.bf16 %v1415
    %v1480 = vunpack.c.l.bf16 %v1416
    %v1481 = vunpack.c.l.bf16 %v1417
    %v1482 = vunpack.c.l.bf16 %v1418
    %v1483 = vunpack.c.l.bf16 %v1419
    %v1484 = vunpack.c.l.bf16 %v1420
    %v1485 = vunpack.c.l.bf16 %v1421
    %v1486 = vunpack.c.l.bf16 %v1422
    %v1487 = vunpack.c.l.bf16 %v1423
    %v1488 = vunpack.c.l.bf16 %v1424
    %v1489 = vunpack.c.l.bf16 %v1425
    %v1490 = vunpack.c.l.bf16 %v1426
    %v1491 = vunpack.c.l.bf16 %v1427
    %v1492 = vunpack.c.l.bf16 %v1428
    %v1493 = vunpack.c.l.bf16 %v1429
    %v1494 = vunpack.c.l.bf16 %v1430
    %v1495 = vunpack.c.l.bf16 %v1431
    %v1496 = vunpack.c.l.bf16 %v1432
    %v1497 = vunpack.c.l.bf16 %v1433
    %v1498 = vunpack.c.l.bf16 %v1434
    %v1499 = vunpack.c.l.bf16 %v1435
    %v1500 = vunpack.c.l.bf16 %v1436
    %v1501 = vunpack.c.l.bf16 %v1437
    %v1502 = vunpack.c.l.bf16 %v1438
    %v1503 = vunpack.c.l.bf16 %v1439
    %v1504 = vunpack.c.l.bf16 %v1440
    %v1505 = vunpack.c.l.bf16 %v1441
    %v1506 = vunpack.c.l.bf16 %v1442
    %v1507 = vadd.f32 %v1220, %v1443
    %v1508 = vadd.f32 %v1222, %v1444
    %v1509 = vadd.f32 %v1225, %v1445
    %v1510 = vadd.f32 %v1227, %v1446
    %v1511 = vadd.f32 %v1230, %v1447
    %v1512 = vadd.f32 %v1232, %v1448
    %v1513 = vadd.f32 %v1235, %v1449
    %v1514 = vadd.f32 %v1237, %v1450
    %v1515 = vadd.f32 %v1240, %v1451
    %v1516 = vadd.f32 %v1242, %v1452
    %v1517 = vadd.f32 %v1245, %v1453
    %v1518 = vadd.f32 %v1247, %v1454
    %v1519 = vadd.f32 %v1250, %v1455
    %v1520 = vadd.f32 %v1252, %v1456
    %v1521 = vadd.f32 %v1255, %v1457
    %v1522 = vadd.f32 %v1257, %v1458
    %v1523 = vadd.f32 %v1260, %v1459
    %v1524 = vadd.f32 %v1262, %v1460
    %v1525 = vadd.f32 %v1265, %v1461
    %v1526 = vadd.f32 %v1267, %v1462
    %v1527 = vadd.f32 %v1270, %v1463
    %v1528 = vadd.f32 %v1272, %v1464
    %v1529 = vadd.f32 %v1275, %v1465
    %v1530 = vadd.f32 %v1277, %v1466
    %v1531 = vadd.f32 %v1280, %v1467
    %v1532 = vadd.f32 %v1282, %v1468
    %v1533 = vadd.f32 %v1285, %v1469
    %v1534 = vadd.f32 %v1287, %v1470
    %v1535 = vadd.f32 %v1290, %v1471
    %v1536 = vadd.f32 %v1292, %v1472
    %v1537 = vadd.f32 %v1295, %v1473
    %v1538 = vadd.f32 %v1297, %v1474
    %v1539 = vadd.f32 %v1300, %v1475
    %v1540 = vadd.f32 %v1302, %v1476
    %v1541 = vadd.f32 %v1305, %v1477
    %v1542 = vadd.f32 %v1307, %v1478
    %v1543 = vadd.f32 %v1310, %v1479
    %v1544 = vadd.f32 %v1312, %v1480
    %v1545 = vadd.f32 %v1315, %v1481
    %v1546 = vadd.f32 %v1317, %v1482
    %v1547 = vadd.f32 %v1320, %v1483
    %v1548 = vadd.f32 %v1322, %v1484
    %v1549 = vadd.f32 %v1325, %v1485
    %v1550 = vadd.f32 %v1327, %v1486
    %v1551 = vadd.f32 %v1330, %v1487
    %v1552 = vadd.f32 %v1332, %v1488
    %v1553 = vadd.f32 %v1335, %v1489
    %v1554 = vadd.f32 %v1337, %v1490
    %v1555 = vadd.f32 %v1340, %v1491
    %v1556 = vadd.f32 %v1342, %v1492
    %v1557 = vadd.f32 %v1345, %v1493
    %v1558 = vadd.f32 %v1347, %v1494
    %v1559 = vadd.f32 %v1350, %v1495
    %v1560 = vadd.f32 %v1352, %v1496
    %v1561 = vadd.f32 %v1355, %v1497
    %v1562 = vadd.f32 %v1357, %v1498
    %v1563 = vadd.f32 %v1360, %v1499
    %v1564 = vadd.f32 %v1362, %v1500
    %v1565 = vadd.f32 %v1365, %v1501
    %v1566 = vadd.f32 %v1367, %v1502
    %v1567 = vadd.f32 %v1370, %v1503
    %v1568 = vadd.f32 %v1372, %v1504
    %v1569 = vadd.f32 %v1375, %v1505
    %v1570 = vadd.f32 %v1377, %v1506
    %v1571 = vmax.f32 %v1507, 0.0
    %v1572 = vmax.f32 %v1508, 0.0
    %v1573 = vmax.f32 %v1509, 0.0
    %v1574 = vmax.f32 %v1510, 0.0
    %v1575 = vmax.f32 %v1511, 0.0
    %v1576 = vmax.f32 %v1512, 0.0
    %v1577 = vmax.f32 %v1513, 0.0
    %v1578 = vmax.f32 %v1514, 0.0
    %v1579 = vmax.f32 %v1515, 0.0
    %v1580 = vmax.f32 %v1516, 0.0
    %v1581 = vmax.f32 %v1517, 0.0
    %v1582 = vmax.f32 %v1518, 0.0
    %v1583 = vmax.f32 %v1519, 0.0
    %v1584 = vmax.f32 %v1520, 0.0
    %v1585 = vmax.f32 %v1521, 0.0
    %v1586 = vmax.f32 %v1522, 0.0
    %v1587 = vmax.f32 %v1523, 0.0
    %v1588 = vmax.f32 %v1524, 0.0
    %v1589 = vmax.f32 %v1525, 0.0
    %v1590 = vmax.f32 %v1526, 0.0
    %v1591 = vmax.f32 %v1527, 0.0
    %v1592 = vmax.f32 %v1528, 0.0
    %v1593 = vmax.f32 %v1529, 0.0
    %v1594 = vmax.f32 %v1530, 0.0
    %v1595 = vmax.f32 %v1531, 0.0
    %v1596 = vmax.f32 %v1532, 0.0
    %v1597 = vmax.f32 %v1533, 0.0
    %v1598 = vmax.f32 %v1534, 0.0
    %v1599 = vmax.f32 %v1535, 0.0
    %v1600 = vmax.f32 %v1536, 0.0
    %v1601 = vmax.f32 %v1537, 0.0
    %v1602 = vmax.f32 %v1538, 0.0
    %v1603 = vmax.f32 %v1539, 0.0
    %v1604 = vmax.f32 %v1540, 0.0
    %v1605 = vmax.f32 %v1541, 0.0
    %v1606 = vmax.f32 %v1542, 0.0
    %v1607 = vmax.f32 %v1543, 0.0
    %v1608 = vmax.f32 %v1544, 0.0
    %v1609 = vmax.f32 %v1545, 0.0
    %v1610 = vmax.f32 %v1546, 0.0
    %v1611 = vmax.f32 %v1547, 0.0
    %v1612 = vmax.f32 %v1548, 0.0
    %v1613 = vmax.f32 %v1549, 0.0
    %v1614 = vmax.f32 %v1550, 0.0
    %v1615 = vmax.f32 %v1551, 0.0
    %v1616 = vmax.f32 %v1552, 0.0
    %v1617 = vmax.f32 %v1553, 0.0
    %v1618 = vmax.f32 %v1554, 0.0
    %v1619 = vmax.f32 %v1555, 0.0
    %v1620 = vmax.f32 %v1556, 0.0
    %v1621 = vmax.f32 %v1557, 0.0
    %v1622 = vmax.f32 %v1558, 0.0
    %v1623 = vmax.f32 %v1559, 0.0
    %v1624 = vmax.f32 %v1560, 0.0
    %v1625 = vmax.f32 %v1561, 0.0
    %v1626 = vmax.f32 %v1562, 0.0
    %v1627 = vmax.f32 %v1563, 0.0
    %v1628 = vmax.f32 %v1564, 0.0
    %v1629 = vmax.f32 %v1565, 0.0
    %v1630 = vmax.f32 %v1566, 0.0
    %v1631 = vmax.f32 %v1567, 0.0
    %v1632 = vmax.f32 %v1568, 0.0
    %v1633 = vmax.f32 %v1569, 0.0
    %v1634 = vmax.f32 %v1570, 0.0
    %1635 = vst.msk [vmem:[#allocation2] sm:$0xff] %vm775, %v1571
    %1636 = vst.msk [vmem:[#allocation2 + $0x8] sm:$0xff] %vm775, %v1572
    %1637 = vst.msk [vmem:[#allocation2 + $0x10] sm:$0xff] %vm775, %v1573
    %1638 = vst.msk [vmem:[#allocation2 + $0x18] sm:$0xff] %vm775, %v1574
    %1639 = vst.msk [vmem:[#allocation2 + $0x20] sm:$0xff] %vm775, %v1575
    %1640 = vst.msk [vmem:[#allocation2 + $0x28] sm:$0xff] %vm775, %v1576
    %1641 = vst.msk [vmem:[#allocation2 + $0x30] sm:$0xff] %vm775, %v1577
    %1642 = vst.msk [vmem:[#allocation2 + $0x38] sm:$0xff] %vm775, %v1578
    %1643 = vst.msk [vmem:[#allocation2 + $0x40] sm:$0xff] %vm775, %v1579
    %1644 = vst.msk [vmem:[#allocation2 + $0x48] sm:$0xff] %vm775, %v1580
    %1645 = vst.msk [vmem:[#allocation2 + $0x50] sm:$0xff] %vm775, %v1581
    %1646 = vst.msk [vmem:[#allocation2 + $0x58] sm:$0xff] %vm775, %v1582
    %1647 = vst.msk [vmem:[#allocation2 + $0x60] sm:$0xff] %vm775, %v1583
    %1648 = vst.msk [vmem:[#allocation2 + $0x68] sm:$0xff] %vm775, %v1584
    %1649 = vst.msk [vmem:[#allocation2 + $0x70] sm:$0xff] %vm775, %v1585
    %1650 = vst.msk [vmem:[#allocation2 + $0x78] sm:$0xff] %vm775, %v1586
    %1651 = vst.msk [vmem:[#allocation2 + $0x80] sm:$0xff] %vm775, %v1587
    %1652 = vst.msk [vmem:[#allocation2 + $0x88] sm:$0xff] %vm775, %v1588
    %1653 = vst.msk [vmem:[#allocation2 + $0x90] sm:$0xff] %vm775, %v1589
    %1654 = vst.msk [vmem:[#allocation2 + $0x98] sm:$0xff] %vm775, %v1590
    %1655 = vst.msk [vmem:[#allocation2 + $0xa0] sm:$0xff] %vm775, %v1591
    %1656 = vst.msk [vmem:[#allocation2 + $0xa8] sm:$0xff] %vm775, %v1592
    %1657 = vst.msk [vmem:[#allocation2 + $0xb0] sm:$0xff] %vm775, %v1593
    %1658 = vst.msk [vmem:[#allocation2 + $0xb8] sm:$0xff] %vm775, %v1594
    %1659 = vst.msk [vmem:[#allocation2 + $0xc0] sm:$0xff] %vm775, %v1595
    %1660 = vst.msk [vmem:[#allocation2 + $0xc8] sm:$0xff] %vm775, %v1596
    %1661 = vst.msk [vmem:[#allocation2 + $0xd0] sm:$0xff] %vm775, %v1597
    %1662 = vst.msk [vmem:[#allocation2 + $0xd8] sm:$0xff] %vm775, %v1598
    %1663 = vst.msk [vmem:[#allocation2 + $0xe0] sm:$0xff] %vm775, %v1599
    %1664 = vst.msk [vmem:[#allocation2 + $0xe8] sm:$0xff] %vm775, %v1600
    %1665 = vst.msk [vmem:[#allocation2 + $0xf0] sm:$0xff] %vm775, %v1601
    %1666 = vst.msk [vmem:[#allocation2 + $0xf8] sm:$0xff] %vm775, %v1602
    %1667 = vst.msk [vmem:[#allocation2 + $0x100] sm:$0xff] %vm775, %v1603
    %1668 = vst.msk [vmem:[#allocation2 + $0x108] sm:$0xff] %vm775, %v1604
    %1669 = vst.msk [vmem:[#allocation2 + $0x110] sm:$0xff] %vm775, %v1605
    %1670 = vst.msk [vmem:[#allocation2 + $0x118] sm:$0xff] %vm775, %v1606
    %1671 = vst.msk [vmem:[#allocation2 + $0x120] sm:$0xff] %vm775, %v1607
    %1672 = vst.msk [vmem:[#allocation2 + $0x128] sm:$0xff] %vm775, %v1608
    %1673 = vst.msk [vmem:[#allocation2 + $0x130] sm:$0xff] %vm775, %v1609
    %1674 = vst.msk [vmem:[#allocation2 + $0x138] sm:$0xff] %vm775, %v1610
    %1675 = vst.msk [vmem:[#allocation2 + $0x140] sm:$0xff] %vm775, %v1611
    %1676 = vst.msk [vmem:[#allocation2 + $0x148] sm:$0xff] %vm775, %v1612
    %1677 = vst.msk [vmem:[#allocation2 + $0x150] sm:$0xff] %vm775, %v1613
    %1678 = vst.msk [vmem:[#allocation2 + $0x158] sm:$0xff] %vm775, %v1614
    %1679 = vst.msk [vmem:[#allocation2 + $0x160] sm:$0xff] %vm775, %v1615
    %1680 = vst.msk [vmem:[#allocation2 + $0x168] sm:$0xff] %vm775, %v1616
    %1681 = vst.msk [vmem:[#allocation2 + $0x170] sm:$0xff] %vm775, %v1617
    %1682 = vst.msk [vmem:[#allocation2 + $0x178] sm:$0xff] %vm775, %v1618
    %1683 = vst.msk [vmem:[#allocation2 + $0x180] sm:$0xff] %vm775, %v1619
    %1684 = vst.msk [vmem:[#allocation2 + $0x188] sm:$0xff] %vm775, %v1620
    %1685 = vst.msk [vmem:[#allocation2 + $0x190] sm:$0xff] %vm775, %v1621
    %1686 = vst.msk [vmem:[#allocation2 + $0x198] sm:$0xff] %vm775, %v1622
    %1687 = vst.msk [vmem:[#allocation2 + $0x1a0] sm:$0xff] %vm775, %v1623
    %1688 = vst.msk [vmem:[#allocation2 + $0x1a8] sm:$0xff] %vm775, %v1624
    %1689 = vst.msk [vmem:[#allocation2 + $0x1b0] sm:$0xff] %vm775, %v1625
    %1690 = vst.msk [vmem:[#allocation2 + $0x1b8] sm:$0xff] %vm775, %v1626
    %1691 = vst.msk [vmem:[#allocation2 + $0x1c0] sm:$0xff] %vm775, %v1627
    %1692 = vst.msk [vmem:[#allocation2 + $0x1c8] sm:$0xff] %vm775, %v1628
    %1693 = vst.msk [vmem:[#allocation2 + $0x1d0] sm:$0xff] %vm775, %v1629
    %1694 = vst.msk [vmem:[#allocation2 + $0x1d8] sm:$0xff] %vm775, %v1630
    %1695 = vst.msk [vmem:[#allocation2 + $0x1e0] sm:$0xff] %vm775, %v1631
    %1696 = vst.msk [vmem:[#allocation2 + $0x1e8] sm:$0xff] %vm775, %v1632
    %1697 = vst.msk [vmem:[#allocation2 + $0x1f0] sm:$0xff] %vm775, %v1633
    %1698 = vst.msk [vmem:[#allocation2 + $0x1f8] sm:$0xff] %vm775, %v1634
    // Predicated region
    $region18: #{residual_block_forward.5} parent=1 // pred_check
      _
    $region19: #{residual_block_forward.5} parent=1 // pred_check_branch
      %1700 = sbr.rel (0) target = $region21
    $region20: #{residual_block_forward.5} parent=1 // pred_region
      %1702 = vsyncadd [#allocation3], 0
      %s1703 = sshll.u32 [#allocation2], 4
      %s1704 = int_to_ptr.vmem [resolvable:$true] %s1703
      %s1705 = sshll.u32 %s4, 4
      %s1706 = int_to_ptr.hbm [resolvable:$true] %s1705
      %1711 = dma.vmem_to_hbm [thread:$0]  %s1704, 8192, %s1706, [#allocation3], 128, 128, 8
    $region21: #{residual_block_forward.5} parent=1 // pred_fallthru
      _
    // Predicated region
    $region22: #{residual_block_forward.5} parent=1 // pred_check
      _
    $region23: #{residual_block_forward.5} parent=1 // pred_check_branch
      %1713 = sbr.rel (0) target = $region25
    $region24: #{residual_block_forward.5} parent=1 // pred_region
      %1715 = dma.done [#allocation3], 8192
    $region25: #{residual_block_forward.5} parent=1 // pred_fallthru
      _
    %1716 = vsyncpa [#allocation3], 1

</llo_original>
